<compile_context>
chip_gen: v5e
topology: v5e:2x2
jax: 0.10.0
libtpu: 0.0.40
codegen_flags: <defaults>
</compile_context>

<pallas_src>
import math
from functools import partial

import jax
import jax.numpy as jnp
from jax.experimental import pallas as pl
from jax.experimental.pallas import tpu as pltpu

MXU_DTYPE = jnp.bfloat16
LN_EPS = 1e-6                      # timm DeiT: partial(nn.LayerNorm, eps=1e-6)
VMEM_LIMIT = 32 * 1024 * 1024      # safe on v5e/v6e/v7x; sweep per generation


def _cparams(n_grid):
    return pltpu.CompilerParams(
        dimension_semantics=("parallel",) * n_grid,
        vmem_limit_bytes=VMEM_LIMIT)


def _ln(x, g, b, eps):
    mean = jnp.mean(x, axis=-1, keepdims=True)
    var = jnp.mean(jnp.square(x - mean), axis=-1, keepdims=True)
    return (x - mean) * jax.lax.rsqrt(var + eps) * g + b


# --------------------------- fused Pallas kernels ---------------------------

def _patch_embed_kernel(xp_ref, w_ref, b_ref, pos_ref, o_ref):
    acc = jnp.dot(xp_ref[0].astype(MXU_DTYPE), w_ref[...],
                  preferred_element_type=jnp.float32)
    o_ref[0] = acc + b_ref[...] + pos_ref[...]


def patch_embed(xp, w, b, pos_patch):
    B, NP, CPP = xp.shape
    H = w.shape[1]
    return pl.pallas_call(
        _patch_embed_kernel,
        out_shape=jax.ShapeDtypeStruct((B, NP, H), jnp.float32),
        grid=(B,),
        in_specs=[pl.BlockSpec((1, NP, CPP), lambda b_: (b_, 0, 0)),
                  pl.BlockSpec((CPP, H), lambda b_: (0, 0)),
                  pl.BlockSpec((1, H), lambda b_: (0, 0)),
                  pl.BlockSpec((NP, H), lambda b_: (0, 0))],
        out_specs=pl.BlockSpec((1, NP, H), lambda b_: (b_, 0, 0)),
        compiler_params=_cparams(1),
        cost_estimate=pl.CostEstimate(
            flops=2 * B * NP * CPP * H, transcendentals=0,
            bytes_accessed=xp.size * 4 + w.size * 2 + B * NP * H * 4),
    )(xp, w, b, pos_patch)


def _ln_qkv_kernel(x_ref, g_ref, b_ref, w_ref, qb_ref, o_ref):
    h = _ln(x_ref[0], g_ref[...], b_ref[...], LN_EPS)
    o_ref[0] = (jnp.dot(h.astype(MXU_DTYPE), w_ref[...],
                        preferred_element_type=jnp.float32) + qb_ref[...])


def ln_qkv(x, g, b, w, qb):
    B, S, H = x.shape
    N = w.shape[1]
    return pl.pallas_call(
        _ln_qkv_kernel,
        out_shape=jax.ShapeDtypeStruct((B, S, N), jnp.float32),
        grid=(B,),
        in_specs=[pl.BlockSpec((1, S, H), lambda b_: (b_, 0, 0)),
                  pl.BlockSpec((1, H), lambda b_: (0, 0)),
                  pl.BlockSpec((1, H), lambda b_: (0, 0)),
                  pl.BlockSpec((H, N), lambda b_: (0, 0)),
                  pl.BlockSpec((1, N), lambda b_: (0, 0))],
        out_specs=pl.BlockSpec((1, S, N), lambda b_: (b_, 0, 0)),
        compiler_params=_cparams(1),
        cost_estimate=pl.CostEstimate(
            flops=2 * B * S * H * N, transcendentals=0,
            bytes_accessed=x.size * 4 + w.size * 2 + B * S * N * 4),
    )(x, g, b, w, qb)


def _attention_kernel(q_ref, k_ref, v_ref, o_ref, *, dh, hpb):
    qb, kb, vb = q_ref[0], k_ref[0], v_ref[0]          # (S, hpb*dh) each
    for i in range(hpb):                                # static unroll (hpb <= 2)
        sl = slice(i * dh, (i + 1) * dh)
        q = qb[:, sl].astype(MXU_DTYPE)                 # scale pre-folded into Wq
        k = kb[:, sl].astype(MXU_DTYPE)
        v = vb[:, sl].astype(MXU_DTYPE)
        s = jax.lax.dot_general(q, k, (((1,), (1,)), ((), ())),
                                preferred_element_type=jnp.float32)   # (S, S)
        s = s - jnp.max(s, axis=-1, keepdims=True)
        p = jnp.exp(s)
        inv_l = pl.reciprocal(jnp.sum(p, axis=-1, keepdims=True), approx=True)
        o = jnp.dot(p.astype(MXU_DTYPE), v, preferred_element_type=jnp.float32)
        o_ref[0, :, sl] = o * inv_l


def attention(qkv, *, B, S, hidden, heads, dh):
    # Pack heads so every q/k/v/o block is >=128 lanes wide (dh=64 -> 2 heads).
    hpb = min(heads, max(1, 128 // dh))
    while heads % hpb:
        hpb -= 1
    width = hpb * dh
    assert width % 128 == 0, "attention head-group width must be lane-aligned"
    G = heads // hpb
    return pl.pallas_call(
        partial(_attention_kernel, dh=dh, hpb=hpb),
        out_shape=jax.ShapeDtypeStruct((B, S, hidden), jnp.float32),
        grid=(B, G),
        in_specs=[pl.BlockSpec((1, S, width), lambda b_, g_: (b_, 0, g_)),
                  pl.BlockSpec((1, S, width), lambda b_, g_: (b_, 0, G + g_)),
                  pl.BlockSpec((1, S, width), lambda b_, g_: (b_, 0, 2 * G + g_))],
        out_specs=pl.BlockSpec((1, S, width), lambda b_, g_: (b_, 0, g_)),
        compiler_params=_cparams(2),
        cost_estimate=pl.CostEstimate(
            flops=4 * B * heads * S * S * dh,
            transcendentals=B * heads * S * S,
            bytes_accessed=qkv.size * 4 + B * S * hidden * 4),
    )(qkv, qkv, qkv)


def _proj_residual_kernel(a_ref, w_ref, b_ref, res_ref, o_ref):
    o_ref[0] = (res_ref[0] + b_ref[...]
                + jnp.dot(a_ref[0].astype(MXU_DTYPE), w_ref[...],
                          preferred_element_type=jnp.float32))


def proj_residual(a, w, b, res):
    B, S, H = a.shape
    return pl.pallas_call(
        _proj_residual_kernel,
        out_shape=jax.ShapeDtypeStruct((B, S, H), jnp.float32),
        grid=(B,),
        in_specs=[pl.BlockSpec((1, S, H), lambda b_: (b_, 0, 0)),
                  pl.BlockSpec((H, H), lambda b_: (0, 0)),
                  pl.BlockSpec((1, H), lambda b_: (0, 0)),
                  pl.BlockSpec((1, S, H), lambda b_: (b_, 0, 0))],
        out_specs=pl.BlockSpec((1, S, H), lambda b_: (b_, 0, 0)),
        compiler_params=_cparams(1),
        cost_estimate=pl.CostEstimate(
            flops=2 * B * S * H * H, transcendentals=0,
            bytes_accessed=2 * a.size * 4 + w.size * 2 + B * S * H * 4),
    )(a, w, b, res)


def _ln_mlp_residual_kernel(x_ref, g_ref, b_ref, w1_ref, b1_ref, w2_ref, b2_ref, o_ref):
    x = x_ref[0]
    h = _ln(x, g_ref[...], b_ref[...], LN_EPS)
    h = (jnp.dot(h.astype(MXU_DTYPE), w1_ref[...],
                 preferred_element_type=jnp.float32) + b1_ref[...])
    h = jax.nn.gelu(h, approximate=True)   # TODO(synk): timm uses exact erf-GELU
    o_ref[0] = (x + b2_ref[...]
                + jnp.dot(h.astype(MXU_DTYPE), w2_ref[...],
                          preferred_element_type=jnp.float32))


def ln_mlp_residual(x, g, b, w1, b1, w2, b2):
    B, S, H = x.shape
    I = w1.shape[1]
    return pl.pallas_call(
        _ln_mlp_residual_kernel,
        out_shape=jax.ShapeDtypeStruct((B, S, H), jnp.float32),
        grid=(B,),
        in_specs=[pl.BlockSpec((1, S, H), lambda b_: (b_, 0, 0)),
                  pl.BlockSpec((1, H), lambda b_: (0, 0)),
                  pl.BlockSpec((1, H), lambda b_: (0, 0)),
                  pl.BlockSpec((H, I), lambda b_: (0, 0)),
                  pl.BlockSpec((1, I), lambda b_: (0, 0)),
                  pl.BlockSpec((I, H), lambda b_: (0, 0)),
                  pl.BlockSpec((1, H), lambda b_: (0, 0))],
        out_specs=pl.BlockSpec((1, S, H), lambda b_: (b_, 0, 0)),
        compiler_params=_cparams(1),
        cost_estimate=pl.CostEstimate(
            flops=4 * B * S * H * I, transcendentals=B * S * I,
            bytes_accessed=2 * x.size * 4 + (w1.size + w2.size) * 2 + B * S * I * 4),
    )(x, g, b, w1, b1, w2, b2)


def _layernorm_kernel(x_ref, g_ref, b_ref, o_ref):
    o_ref[0] = _ln(x_ref[0], g_ref[...], b_ref[...], LN_EPS)


def final_norm(x, g, b):
    B, S, H = x.shape
    return pl.pallas_call(
        _layernorm_kernel,
        out_shape=jax.ShapeDtypeStruct((B, S, H), jnp.float32),
        grid=(B,),
        in_specs=[pl.BlockSpec((1, S, H), lambda b_: (b_, 0, 0)),
                  pl.BlockSpec((1, H), lambda b_: (0, 0)),
                  pl.BlockSpec((1, H), lambda b_: (0, 0))],
        out_specs=pl.BlockSpec((1, S, H), lambda b_: (b_, 0, 0)),
        compiler_params=_cparams(1),
    )(x, g, b)


def _adaptive_maxpool_kernel(x_ref, o_ref, *, in_hw, out_hw):
    # x_ref: (1, in_hw, in_hw, C); window rule matches F.adaptive_max_pool2d:
    #   window[i] = [floor(i*H/s), ceil((i+1)*H/s))
    x = x_ref[0]
    for i in range(out_hw):
        h0 = (i * in_hw) // out_hw
        h1 = -(-((i + 1) * in_hw) // out_hw)
        for j in range(out_hw):
            w0 = (j * in_hw) // out_hw
            w1 = -(-((j + 1) * in_hw) // out_hw)
            win = x[h0:h1, w0:w1, :]
            o_ref[0, i * out_hw + j, :] = jnp.max(jnp.max(win, axis=0), axis=0)


def adaptive_max_pool(xg, out_hw):
    B, in_hw, _, C = xg.shape
    return pl.pallas_call(
        partial(_adaptive_maxpool_kernel, in_hw=in_hw, out_hw=out_hw),
        out_shape=jax.ShapeDtypeStruct((B, out_hw * out_hw, C), jnp.float32),
        grid=(B,),
        in_specs=[pl.BlockSpec((1, in_hw, in_hw, C), lambda b_: (b_, 0, 0, 0))],
        out_specs=pl.BlockSpec((1, out_hw * out_hw, C), lambda b_: (b_, 0, 0)),
        compiler_params=_cparams(1),
    )(xg)


# --------------------------- parameters (synthetic) --------------------------

def init_params(key, *, hidden, depth, inter, patch, in_ch, num_patches):
    # TODO(synk): pretrained DeiT checkpoint cannot be loaded; synthetic values.
    def nrm(k, shape):
        return 0.02 * jax.random.normal(k, shape, dtype=jnp.float32)

    keys = jax.random.split(key, 3 + depth)
    cpp = in_ch * patch * patch
    params = {
        "patch_w": nrm(keys[0], (cpp, hidden)),           # Conv2d(k=16,s=16) as matmul
        "patch_b": jnp.zeros((hidden,), jnp.float32),
        "cls": nrm(keys[1], (hidden,)),
        "pos": nrm(keys[2], (num_patches + 1, hidden)),
        "norm_g": jnp.ones((hidden,), jnp.float32),
        "norm_b": jnp.zeros((hidden,), jnp.float32),
        "layers": [],
    }
    for l in range(depth):
        lk = jax.random.split(keys[3 + l], 4)
        params["layers"].append({
            "ln1_g": jnp.ones((hidden,), jnp.float32), "ln1_b": jnp.zeros((hidden,), jnp.float32),
            "qkv_w": nrm(lk[0], (hidden, 3 * hidden)), "qkv_b": jnp.zeros((3 * hidden,), jnp.float32),
            "proj_w": nrm(lk[1], (hidden, hidden)), "proj_b": jnp.zeros((hidden,), jnp.float32),
            "ln2_g": jnp.ones((hidden,), jnp.float32), "ln2_b": jnp.zeros((hidden,), jnp.float32),
            "fc1_w": nrm(lk[2], (hidden, inter)), "fc1_b": jnp.zeros((inter,), jnp.float32),
            "fc2_w": nrm(lk[3], (inter, hidden)), "fc2_b": jnp.zeros((hidden,), jnp.float32),
        })
    return params


def pack_params(params, *, heads):
    """Fold attention scale into Q weights, cast matmul weights to bf16, reshape
    biases / LN params to (1, N) row blocks for the fused kernels."""
    hidden = params["patch_w"].shape[1]
    dh = hidden // heads
    scale = dh ** -0.5
    qkv_scale = jnp.concatenate([jnp.full((hidden,), scale, jnp.float32),
                                 jnp.ones((2 * hidden,), jnp.float32)])

    def row(v):
        return v.reshape(1, -1).astype(jnp.float32)

    packed = {
        "patch_w": params["patch_w"].astype(MXU_DTYPE),
        "patch_b": row(params["patch_b"]),
        "cls": params["cls"],
        "pos": params["pos"],
        "norm_g": row(params["norm_g"]), "norm_b": row(params["norm_b"]),
        "layers": [],
    }
    for lp in params["layers"]:
        packed["layers"].append({
            "ln1_g": row(lp["ln1_g"]), "ln1_b": row(lp["ln1_b"]),
            "qkv_w": (lp["qkv_w"] * qkv_scale[None, :]).astype(MXU_DTYPE),
            "qkv_b": row(lp["qkv_b"] * qkv_scale),
            "proj_w": lp["proj_w"].astype(MXU_DTYPE), "proj_b": row(lp["proj_b"]),
            "ln2_g": row(lp["ln2_g"]), "ln2_b": row(lp["ln2_b"]),
            "fc1_w": lp["fc1_w"].astype(MXU_DTYPE), "fc1_b": row(lp["fc1_b"]),
            "fc2_w": lp["fc2_w"].astype(MXU_DTYPE), "fc2_b": row(lp["fc2_b"]),
        })
    return packed


# -------------------------------- forward pass --------------------------------

def deit_backbone_forward(x_nchw, params, *, patch, heads, last_nblocks, maxpool_sizes):
    B, C_in, Himg, Wimg = x_nchw.shape
    nH, nW = Himg // patch, Wimg // patch
    NP = nH * nW
    hidden = params["pos"].shape[1]
    dh = hidden // heads
    S = NP + 1

    # patch embed (fused conv-as-matmul + bias + pos) and cls token prepend
    xp = x_nchw.reshape(B, C_in, nH, patch, nW, patch)
    xp = xp.transpose(0, 2, 4, 1, 3, 5).reshape(B, NP, C_in * patch * patch)
    patch_tok = patch_embed(xp, params["patch_w"], params["patch_b"], params["pos"][1:])
    cls_tok = jnp.broadcast_to((params["cls"] + params["pos"][0])[None, None, :],
                               (B, 1, hidden))
    x = jnp.concatenate([cls_tok, patch_tok], axis=1)

    depth = len(params["layers"])
    collected = []
    for li, lp in enumerate(params["layers"]):
        qkv = ln_qkv(x, lp["ln1_g"], lp["ln1_b"], lp["qkv_w"], lp["qkv_b"])
        attn = attention(qkv, B=B, S=S, hidden=hidden, heads=heads, dh=dh)
        x = proj_residual(attn, lp["proj_w"], lp["proj_b"], x)
        x = ln_mlp_residual(x, lp["ln2_g"], lp["ln2_b"],
                            lp["fc1_w"], lp["fc1_b"], lp["fc2_w"], lp["fc2_b"])
        if li >= depth - last_nblocks:
            collected.append(x)

    # get_intermediate_layers(n, return_prefix_tokens=True, norm=True) + pooling
    _sizes = maxpool_sizes[-last_nblocks:]
    output_list = []
    for i, raw in enumerate(collected):
        normed = final_norm(raw, params["norm_g"], params["norm_b"])
        cls = normed[:, :1]                       # prefix (class) token
        tokens = normed[:, 1:]                    # spatial tokens (B, sq, C)
        _, sq, C = tokens.shape
        hw = int(math.isqrt(sq))
        xg = tokens.reshape(B, hw, hw, C)         # == raw.mT.view(B, C, hw, hw) layout
        pooled = [cls]
        for s in _sizes[i]:
            pooled.append(adaptive_max_pool(xg, s))
        output_list.append(pooled)
    return output_list


# ------------------------------------ main ------------------------------------

if __name__ == "__main__":
    # DeiT config: patch_size=16, embed_dim=channel_size, depth=12,
    # heads=channel_size//64, mlp_ratio=4, qkv_bias, LN eps=1e-6.
    patch = 16
    channel_size = 128                  # small demo width (heads=2, head_dim=64)
    heads = channel_size // 64
    depth = 12
    inter = 4 * channel_size
    B, C_in, Himg, Wimg = 2, 3, 64, 64  # 4x4 = 16 patches, S = 17
    last_nblocks = 3
    maxpool_sizes = ((1,), (2, 1), (4, 2, 1))

    key = jax.random.PRNGKey(0)
    kx, kp = jax.random.split(key)
    x = jax.random.normal(kx, (B, C_in, Himg, Wimg), dtype=jnp.float32)

    NP = (Himg // patch) * (Wimg // patch)
    raw_params = init_params(kp, hidden=channel_size, depth=depth, inter=inter,
                             patch=patch, in_ch=C_in, num_patches=NP)
    params = pack_params(raw_params, heads=heads)

    fwd = jax.jit(partial(deit_backbone_forward, patch=patch, heads=heads,
                          last_nblocks=last_nblocks, maxpool_sizes=maxpool_sizes))
    out = fwd(x, params)
    out = jax.block_until_ready(out)

    # structural checks mirroring the PyTorch output list
    assert len(out) == last_nblocks
    assert out[0][0].shape == (B, 1, channel_size)    # cls token of block depth-3
    assert out[0][1].shape == (B, 1, channel_size)    # adaptive_max_pool2d(1)
    assert out[1][1].shape == (B, 4, channel_size)    # adaptive_max_pool2d(2)
    assert out[2][1].shape == (B, 16, channel_size)   # adaptive_max_pool2d(4), last block
    assert out[2][3].shape == (B, 1, channel_size)
    print("KERNEL_OK")
</pallas_src>

<mosaic_0001>
module attributes {stable_mosaic.version = 11 : i64} {
  func.func @_patch_embed_kernel(%arg0: i32, %arg1: memref<1x16x768xf32, #tpu.memory_space<vmem>>, %arg2: memref<768x128xbf16, #tpu.memory_space<vmem>>, %arg3: memref<1x128xf32, #tpu.memory_space<vmem>>, %arg4: memref<16x128xf32, #tpu.memory_space<vmem>>, %arg5: memref<1x16x128xf32, #tpu.memory_space<vmem>>) attributes {dimension_semantics = [#tpu.dimension_semantics<parallel>], iteration_bounds = array<i64: 2>, scalar_prefetch = 0 : i64, scratch_operands = 0 : i64, tpu.core_type = #tpu.core_type<tc>, window_params = [{transform_indices = @transform_0, window_bounds = array<i64: 1, 16, 768>}, {pipeline_mode = #tpu.pipeline_mode<synchronous>, transform_indices = @transform_1, window_bounds = array<i64: 768, 128>}, {pipeline_mode = #tpu.pipeline_mode<synchronous>, transform_indices = @transform_2, window_bounds = array<i64: 1, 128>}, {pipeline_mode = #tpu.pipeline_mode<synchronous>, transform_indices = @transform_3, window_bounds = array<i64: 16, 128>}, {transform_indices = @transform_4, window_bounds = array<i64: 1, 16, 128>}]} {
    %c0 = arith.constant 0 : index
    %c0_0 = arith.constant 0 : index
    %c0_1 = arith.constant 0 : index
    %0 = vector.load %arg1[%c0, %c0_0, %c0_1] : memref<1x16x768xf32, #tpu.memory_space<vmem>>, vector<1x16x768xf32>
    %1 = vector.shape_cast %0 : vector<1x16x768xf32> to vector<16x768xf32>
    %2 = arith.truncf %1 : vector<16x768xf32> to vector<16x768xbf16>
    %c0_2 = arith.constant 0 : index
    %c0_3 = arith.constant 0 : index
    %3 = vector.load %arg2[%c0_2, %c0_3] : memref<768x128xbf16, #tpu.memory_space<vmem>>, vector<768x128xbf16>
    %cst = arith.constant dense<0.000000e+00> : vector<16x128xf32>
    %4 = tpu.matmul %2, %3, %cst {dimension_numbers = #tpu.dot_dimension_numbers<[1], [0], [0], [1], [0, 0, 1, 1], [], []>} : vector<16x768xbf16>, vector<768x128xbf16>, vector<16x128xf32> -> vector<16x128xf32>
    %c0_4 = arith.constant 0 : index
    %c0_5 = arith.constant 0 : index
    %5 = vector.load %arg3[%c0_4, %c0_5] : memref<1x128xf32, #tpu.memory_space<vmem>>, vector<1x128xf32>
    %6 = vector.broadcast %5 : vector<1x128xf32> to vector<16x128xf32>
    %7 = arith.addf %4, %6 : vector<16x128xf32>
    %c0_6 = arith.constant 0 : index
    %c0_7 = arith.constant 0 : index
    %8 = vector.load %arg4[%c0_6, %c0_7] : memref<16x128xf32, #tpu.memory_space<vmem>>, vector<16x128xf32>
    %9 = arith.addf %7, %8 : vector<16x128xf32>
    %c0_8 = arith.constant 0 : index
    %c0_9 = arith.constant 0 : index
    %c0_10 = arith.constant 0 : index
    %10 = vector.load %arg5[%c0_8, %c0_9, %c0_10] : memref<1x16x128xf32, #tpu.memory_space<vmem>>, vector<1x16x128xf32>
    %11 = vector.shape_cast %10 : vector<1x16x128xf32> to vector<16x128xf32>
    %12 = vector.shape_cast %9 : vector<16x128xf32> to vector<1x16x128xf32>
    tpu.vector_store %arg5[%c0_8, %c0_9, %c0_10], %12 {strides = array<i32>} : memref<1x16x128xf32, #tpu.memory_space<vmem>>, vector<1x16x128xf32>,
    return
  }
  func.func @transform_0(%arg0: i32) -> (i32, i32, i32) {
    %c0_i32 = arith.constant 0 : i32
    %c0_i32_0 = arith.constant 0 : i32
    %c0_i32_1 = arith.constant 0 : i32
    return %arg0, %c0_i32, %c0_i32_0 : i32, i32, i32
  }
  func.func @transform_1(%arg0: i32) -> (i32, i32) {
    %c0_i32 = arith.constant 0 : i32
    %c0_i32_0 = arith.constant 0 : i32
    %c0_i32_1 = arith.constant 0 : i32
    return %c0_i32, %c0_i32_0 : i32, i32
  }
  func.func @transform_2(%arg0: i32) -> (i32, i32) {
    %c0_i32 = arith.constant 0 : i32
    %c0_i32_0 = arith.constant 0 : i32
    %c0_i32_1 = arith.constant 0 : i32
    return %c0_i32, %c0_i32_0 : i32, i32
  }
  func.func @transform_3(%arg0: i32) -> (i32, i32) {
    %c0_i32 = arith.constant 0 : i32
    %c0_i32_0 = arith.constant 0 : i32
    %c0_i32_1 = arith.constant 0 : i32
    return %c0_i32, %c0_i32_0 : i32, i32
  }
  func.func @transform_4(%arg0: i32) -> (i32, i32, i32) {
    %c0_i32 = arith.constant 0 : i32
    %c0_i32_0 = arith.constant 0 : i32
    %c0_i32_1 = arith.constant 0 : i32
    return %arg0, %c0_i32, %c0_i32_0 : i32, i32, i32
  }
}

module attributes {stable_mosaic.version = 11 : i64} {
  func.func @_ln_qkv_kernel(%arg0: i32, %arg1: memref<1x17x128xf32, #tpu.memory_space<vmem>>, %arg2: memref<1x128xf32, #tpu.memory_space<vmem>>, %arg3: memref<1x128xf32, #tpu.memory_space<vmem>>, %arg4: memref<128x384xbf16, #tpu.memory_space<vmem>>, %arg5: memref<1x384xf32, #tpu.memory_space<vmem>>, %arg6: memref<1x17x384xf32, #tpu.memory_space<vmem>>) attributes {dimension_semantics = [#tpu.dimension_semantics<parallel>], iteration_bounds = array<i64: 2>, scalar_prefetch = 0 : i64, scratch_operands = 0 : i64, tpu.core_type = #tpu.core_type<tc>, window_params = [{transform_indices = @transform_0, window_bounds = array<i64: 1, 17, 128>}, {pipeline_mode = #tpu.pipeline_mode<synchronous>, transform_indices = @transform_1, window_bounds = array<i64: 1, 128>}, {pipeline_mode = #tpu.pipeline_mode<synchronous>, transform_indices = @transform_2, window_bounds = array<i64: 1, 128>}, {pipeline_mode = #tpu.pipeline_mode<synchronous>, transform_indices = @transform_3, window_bounds = array<i64: 128, 384>}, {pipeline_mode = #tpu.pipeline_mode<synchronous>, transform_indices = @transform_4, window_bounds = array<i64: 1, 384>}, {transform_indices = @transform_5, window_bounds = array<i64: 1, 17, 384>}]} {
    %c0 = arith.constant 0 : index
    %c0_0 = arith.constant 0 : index
    %c0_1 = arith.constant 0 : index
    %0 = vector.load %arg1[%c0, %c0_0, %c0_1] : memref<1x17x128xf32, #tpu.memory_space<vmem>>, vector<1x17x128xf32>
    %1 = vector.shape_cast %0 : vector<1x17x128xf32> to vector<17x128xf32>
    %c0_2 = arith.constant 0 : index
    %c0_3 = arith.constant 0 : index
    %2 = vector.load %arg2[%c0_2, %c0_3] : memref<1x128xf32, #tpu.memory_space<vmem>>, vector<1x128xf32>
    %c0_4 = arith.constant 0 : index
    %c0_5 = arith.constant 0 : index
    %3 = vector.load %arg3[%c0_4, %c0_5] : memref<1x128xf32, #tpu.memory_space<vmem>>, vector<1x128xf32>
    %cst = arith.constant dense<0.000000e+00> : vector<17xf32>
    %4 = vector.multi_reduction <add>, %1, %cst [1] : vector<17x128xf32> to vector<17xf32>
    %5 = vector.shape_cast %4 : vector<17xf32> to vector<17x1xf32>
    %cst_6 = arith.constant 1.280000e+02 : f32
    %6 = vector.broadcast %cst_6 : f32 to vector<17x1xf32>
    %7 = arith.divf %5, %6 : vector<17x1xf32>
    %8 = vector.broadcast %7 : vector<17x1xf32> to vector<17x128xf32>
    %9 = arith.subf %1, %8 : vector<17x128xf32>
    %10 = arith.mulf %9, %9 : vector<17x128xf32>
    %cst_7 = arith.constant dense<0.000000e+00> : vector<17xf32>
    %11 = vector.multi_reduction <add>, %10, %cst_7 [1] : vector<17x128xf32> to vector<17xf32>
    %12 = vector.shape_cast %11 : vector<17xf32> to vector<17x1xf32>
    %cst_8 = arith.constant 1.280000e+02 : f32
    %13 = vector.broadcast %cst_8 : f32 to vector<17x1xf32>
    %14 = arith.divf %12, %13 : vector<17x1xf32>
    %15 = vector.broadcast %7 : vector<17x1xf32> to vector<17x128xf32>
    %16 = arith.subf %1, %15 : vector<17x128xf32>
    %cst_9 = arith.constant 9.99999997E-7 : f32
    %17 = vector.broadcast %cst_9 : f32 to vector<17x1xf32>
    %18 = arith.addf %14, %17 : vector<17x1xf32>
    %19 = math.rsqrt %18 : vector<17x1xf32>
    %20 = vector.broadcast %19 : vector<17x1xf32> to vector<17x128xf32>
    %21 = arith.mulf %16, %20 : vector<17x128xf32>
    %22 = vector.broadcast %2 : vector<1x128xf32> to vector<17x128xf32>
    %23 = arith.mulf %21, %22 : vector<17x128xf32>
    %24 = vector.broadcast %3 : vector<1x128xf32> to vector<17x128xf32>
    %25 = arith.addf %23, %24 : vector<17x128xf32>
    %26 = arith.truncf %25 : vector<17x128xf32> to vector<17x128xbf16>
    %c0_10 = arith.constant 0 : index
    %c0_11 = arith.constant 0 : index
    %27 = vector.load %arg4[%c0_10, %c0_11] : memref<128x384xbf16, #tpu.memory_space<vmem>>, vector<128x384xbf16>
    %cst_12 = arith.constant dense<0.000000e+00> : vector<17x384xf32>
    %28 = tpu.matmul %26, %27, %cst_12 {dimension_numbers = #tpu.dot_dimension_numbers<[1], [0], [0], [1], [0, 0, 1, 1], [], []>} : vector<17x128xbf16>, vector<128x384xbf16>, vector<17x384xf32> -> vector<17x384xf32>
    %c0_13 = arith.constant 0 : index
    %c0_14 = arith.constant 0 : index
    %29 = vector.load %arg5[%c0_13, %c0_14] : memref<1x384xf32, #tpu.memory_space<vmem>>, vector<1x384xf32>
    %30 = vector.broadcast %29 : vector<1x384xf32> to vector<17x384xf32>
    %31 = arith.addf %28, %30 : vector<17x384xf32>
    %c0_15 = arith.constant 0 : index
    %c0_16 = arith.constant 0 : index
    %c0_17 = arith.constant 0 : index
    %32 = vector.load %arg6[%c0_15, %c0_16, %c0_17] : memref<1x17x384xf32, #tpu.memory_space<vmem>>, vector<1x17x384xf32>
    %33 = vector.shape_cast %32 : vector<1x17x384xf32> to vector<17x384xf32>
    %34 = vector.shape_cast %31 : vector<17x384xf32> to vector<1x17x384xf32>
    tpu.vector_store %arg6[%c0_15, %c0_16, %c0_17], %34 {strides = array<i32>} : memref<1x17x384xf32, #tpu.memory_space<vmem>>, vector<1x17x384xf32>,
    return
  }
  func.func @transform_0(%arg0: i32) -> (i32, i32, i32) {
    %c0_i32 = arith.constant 0 : i32
    %c0_i32_0 = arith.constant 0 : i32
    %c0_i32_1 = arith.constant 0 : i32
    return %arg0, %c0_i32, %c0_i32_0 : i32, i32, i32
  }
  func.func @transform_1(%arg0: i32) -> (i32, i32) {
    %c0_i32 = arith.constant 0 : i32
    %c0_i32_0 = arith.constant 0 : i32
    %c0_i32_1 = arith.constant 0 : i32
    return %c0_i32, %c0_i32_0 : i32, i32
  }
  func.func @transform_2(%arg0: i32) -> (i32, i32) {
    %c0_i32 = arith.constant 0 : i32
    %c0_i32_0 = arith.constant 0 : i32
    %c0_i32_1 = arith.constant 0 : i32
    return %c0_i32, %c0_i32_0 : i32, i32
  }
  func.func @transform_3(%arg0: i32) -> (i32, i32) {
    %c0_i32 = arith.constant 0 : i32
    %c0_i32_0 = arith.constant 0 : i32
    %c0_i32_1 = arith.constant 0 : i32
    return %c0_i32, %c0_i32_0 : i32, i32
  }
  func.func @transform_4(%arg0: i32) -> (i32, i32) {
    %c0_i32 = arith.constant 0 : i32
    %c0_i32_0 = arith.constant 0 : i32
    %c0_i32_1 = arith.constant 0 : i32
    return %c0_i32, %c0_i32_0 : i32, i32
  }
  func.func @transform_5(%arg0: i32) -> (i32, i32, i32) {
    %c0_i32 = arith.constant 0 : i32
    %c0_i32_0 = arith.constant 0 : i32
    %c0_i32_1 = arith.constant 0 : i32
    return %arg0, %c0_i32, %c0_i32_0 : i32, i32, i32
  }
}

module attributes {stable_mosaic.version = 11 : i64} {
  func.func @_attention_kernel(%arg0: i32, %arg1: i32, %arg2: memref<1x17x128xf32, #tpu.memory_space<vmem>>, %arg3: memref<1x17x128xf32, #tpu.memory_space<vmem>>, %arg4: memref<1x17x128xf32, #tpu.memory_space<vmem>>, %arg5: memref<1x17x128xf32, #tpu.memory_space<vmem>>) attributes {dimension_semantics = [#tpu.dimension_semantics<parallel>, #tpu.dimension_semantics<parallel>], iteration_bounds = array<i64: 2, 1>, scalar_prefetch = 0 : i64, scratch_operands = 0 : i64, tpu.core_type = #tpu.core_type<tc>, window_params = [{transform_indices = @transform_0, window_bounds = array<i64: 1, 17, 128>}, {transform_indices = @transform_1, window_bounds = array<i64: 1, 17, 128>}, {transform_indices = @transform_2, window_bounds = array<i64: 1, 17, 128>}, {transform_indices = @transform_3, window_bounds = array<i64: 1, 17, 128>}]} {
    %c0 = arith.constant 0 : index
    %c0_0 = arith.constant 0 : index
    %c0_1 = arith.constant 0 : index
    %0 = vector.load %arg2[%c0, %c0_0, %c0_1] : memref<1x17x128xf32, #tpu.memory_space<vmem>>, vector<1x17x128xf32>
    %1 = vector.shape_cast %0 : vector<1x17x128xf32> to vector<17x128xf32>
    %c0_2 = arith.constant 0 : index
    %c0_3 = arith.constant 0 : index
    %c0_4 = arith.constant 0 : index
    %2 = vector.load %arg3[%c0_2, %c0_3, %c0_4] : memref<1x17x128xf32, #tpu.memory_space<vmem>>, vector<1x17x128xf32>
    %3 = vector.shape_cast %2 : vector<1x17x128xf32> to vector<17x128xf32>
    %c0_5 = arith.constant 0 : index
    %c0_6 = arith.constant 0 : index
    %c0_7 = arith.constant 0 : index
    %4 = vector.load %arg4[%c0_5, %c0_6, %c0_7] : memref<1x17x128xf32, #tpu.memory_space<vmem>>, vector<1x17x128xf32>
    %5 = vector.shape_cast %4 : vector<1x17x128xf32> to vector<17x128xf32>
    %6 = vector.extract_strided_slice %1 {offsets = [0, 0], sizes = [17, 64], strides = [1, 1]} : vector<17x128xf32> to vector<17x64xf32>
    %7 = arith.truncf %6 : vector<17x64xf32> to vector<17x64xbf16>
    %8 = vector.extract_strided_slice %3 {offsets = [0, 0], sizes = [17, 64], strides = [1, 1]} : vector<17x128xf32> to vector<17x64xf32>
    %9 = arith.truncf %8 : vector<17x64xf32> to vector<17x64xbf16>
    %10 = vector.extract_strided_slice %5 {offsets = [0, 0], sizes = [17, 64], strides = [1, 1]} : vector<17x128xf32> to vector<17x64xf32>
    %11 = arith.truncf %10 : vector<17x64xf32> to vector<17x64xbf16>
    %cst = arith.constant dense<0.000000e+00> : vector<17x17xf32>
    %12 = tpu.matmul %7, %9, %cst {dimension_numbers = #tpu.dot_dimension_numbers<[1], [1], [0], [0], [0, 0, 1, 0], [], []>} : vector<17x64xbf16>, vector<17x64xbf16>, vector<17x17xf32> -> vector<17x17xf32>
    %cst_8 = arith.constant dense<0xFF800000> : vector<17xf32>
    %13 = vector.multi_reduction <maximumf>, %12, %cst_8 [1] : vector<17x17xf32> to vector<17xf32>
    %14 = vector.shape_cast %13 : vector<17xf32> to vector<17x1xf32>
    %15 = vector.broadcast %14 : vector<17x1xf32> to vector<17x17xf32>
    %16 = arith.subf %12, %15 : vector<17x17xf32>
    %17 = math.exp %16 : vector<17x17xf32>
    %cst_9 = arith.constant dense<0.000000e+00> : vector<17xf32>
    %18 = vector.multi_reduction <add>, %17, %cst_9 [1] : vector<17x17xf32> to vector<17xf32>
    %19 = vector.shape_cast %18 : vector<17xf32> to vector<17x1xf32>
    %20 = tpu.reciprocal %19 {approx = true} : vector<17x1xf32> -> vector<17x1xf32>
    %21 = arith.truncf %17 : vector<17x17xf32> to vector<17x17xbf16>
    %cst_10 = arith.constant dense<0.000000e+00> : vector<17x64xf32>
    %22 = tpu.matmul %21, %11, %cst_10 {dimension_numbers = #tpu.dot_dimension_numbers<[1], [0], [0], [1], [0, 0, 1, 1], [], []>} : vector<17x17xbf16>, vector<17x64xbf16>, vector<17x64xf32> -> vector<17x64xf32>
    %23 = vector.broadcast %20 : vector<17x1xf32> to vector<17x64xf32>
    %24 = arith.mulf %22, %23 : vector<17x64xf32>
    %c0_11 = arith.constant 0 : index
    %c0_12 = arith.constant 0 : index
    %c0_13 = arith.constant 0 : index
    %25 = vector.load %arg5[%c0_11, %c0_12, %c0_13] : memref<1x17x128xf32, #tpu.memory_space<vmem>>, vector<1x17x64xf32>
    %26 = vector.shape_cast %25 : vector<1x17x64xf32> to vector<17x64xf32>
    %27 = vector.shape_cast %24 : vector<17x64xf32> to vector<1x17x64xf32>
    tpu.vector_store %arg5[%c0_11, %c0_12, %c0_13], %27 {strides = array<i32>} : memref<1x17x128xf32, #tpu.memory_space<vmem>>, vector<1x17x64xf32>,
    %28 = vector.extract_strided_slice %1 {offsets = [0, 64], sizes = [17, 64], strides = [1, 1]} : vector<17x128xf32> to vector<17x64xf32>
    %29 = arith.truncf %28 : vector<17x64xf32> to vector<17x64xbf16>
    %30 = vector.extract_strided_slice %3 {offsets = [0, 64], sizes = [17, 64], strides = [1, 1]} : vector<17x128xf32> to vector<17x64xf32>
    %31 = arith.truncf %30 : vector<17x64xf32> to vector<17x64xbf16>
    %32 = vector.extract_strided_slice %5 {offsets = [0, 64], sizes = [17, 64], strides = [1, 1]} : vector<17x128xf32> to vector<17x64xf32>
    %33 = arith.truncf %32 : vector<17x64xf32> to vector<17x64xbf16>
    %cst_14 = arith.constant dense<0.000000e+00> : vector<17x17xf32>
    %34 = tpu.matmul %29, %31, %cst_14 {dimension_numbers = #tpu.dot_dimension_numbers<[1], [1], [0], [0], [0, 0, 1, 0], [], []>} : vector<17x64xbf16>, vector<17x64xbf16>, vector<17x17xf32> -> vector<17x17xf32>
    %cst_15 = arith.constant dense<0xFF800000> : vector<17xf32>
    %35 = vector.multi_reduction <maximumf>, %34, %cst_15 [1] : vector<17x17xf32> to vector<17xf32>
    %36 = vector.shape_cast %35 : vector<17xf32> to vector<17x1xf32>
    %37 = vector.broadcast %36 : vector<17x1xf32> to vector<17x17xf32>
    %38 = arith.subf %34, %37 : vector<17x17xf32>
    %39 = math.exp %38 : vector<17x17xf32>
    %cst_16 = arith.constant dense<0.000000e+00> : vector<17xf32>
    %40 = vector.multi_reduction <add>, %39, %cst_16 [1] : vector<17x17xf32> to vector<17xf32>
    %41 = vector.shape_cast %40 : vector<17xf32> to vector<17x1xf32>
    %42 = tpu.reciprocal %41 {approx = true} : vector<17x1xf32> -> vector<17x1xf32>
    %43 = arith.truncf %39 : vector<17x17xf32> to vector<17x17xbf16>
    %cst_17 = arith.constant dense<0.000000e+00> : vector<17x64xf32>
    %44 = tpu.matmul %43, %33, %cst_17 {dimension_numbers = #tpu.dot_dimension_numbers<[1], [0], [0], [1], [0, 0, 1, 1], [], []>} : vector<17x17xbf16>, vector<17x64xbf16>, vector<17x64xf32> -> vector<17x64xf32>
    %45 = vector.broadcast %42 : vector<17x1xf32> to vector<17x64xf32>
    %46 = arith.mulf %44, %45 : vector<17x64xf32>
    %c0_18 = arith.constant 0 : index
    %c0_19 = arith.constant 0 : index
    %c64 = arith.constant 64 : index
    %47 = vector.load %arg5[%c0_18, %c0_19, %c64] : memref<1x17x128xf32, #tpu.memory_space<vmem>>, vector<1x17x64xf32>
    %48 = vector.shape_cast %47 : vector<1x17x64xf32> to vector<17x64xf32>
    %49 = vector.shape_cast %46 : vector<17x64xf32> to vector<1x17x64xf32>
    tpu.vector_store %arg5[%c0_18, %c0_19, %c64], %49 {strides = array<i32>} : memref<1x17x128xf32, #tpu.memory_space<vmem>>, vector<1x17x64xf32>,
    return
  }
  func.func @transform_0(%arg0: i32, %arg1: i32) -> (i32, i32, i32) {
    %c0_i32 = arith.constant 0 : i32
    %c0_i32_0 = arith.constant 0 : i32
    return %arg0, %c0_i32, %arg1 : i32, i32, i32
  }
  func.func @transform_1(%arg0: i32, %arg1: i32) -> (i32, i32, i32) {
    %c1_i32 = arith.constant 1 : i32
    %0 = arith.addi %c1_i32, %arg1 : i32
    %c0_i32 = arith.constant 0 : i32
    %c0_i32_0 = arith.constant 0 : i32
    return %arg0, %c0_i32, %0 : i32, i32, i32
  }
  func.func @transform_2(%arg0: i32, %arg1: i32) -> (i32, i32, i32) {
    %c2_i32 = arith.constant 2 : i32
    %0 = arith.addi %c2_i32, %arg1 : i32
    %c0_i32 = arith.constant 0 : i32
    %c0_i32_0 = arith.constant 0 : i32
    return %arg0, %c0_i32, %0 : i32, i32, i32
  }
  func.func @transform_3(%arg0: i32, %arg1: i32) -> (i32, i32, i32) {
    %c0_i32 = arith.constant 0 : i32
    %c0_i32_0 = arith.constant 0 : i32
    return %arg0, %c0_i32, %arg1 : i32, i32, i32
  }
}

module attributes {stable_mosaic.version = 11 : i64} {
  func.func @_proj_residual_kernel(%arg0: i32, %arg1: memref<1x17x128xf32, #tpu.memory_space<vmem>>, %arg2: memref<128x128xbf16, #tpu.memory_space<vmem>>, %arg3: memref<1x128xf32, #tpu.memory_space<vmem>>, %arg4: memref<1x17x128xf32, #tpu.memory_space<vmem>>, %arg5: memref<1x17x128xf32, #tpu.memory_space<vmem>>) attributes {dimension_semantics = [#tpu.dimension_semantics<parallel>], iteration_bounds = array<i64: 2>, scalar_prefetch = 0 : i64, scratch_operands = 0 : i64, tpu.core_type = #tpu.core_type<tc>, window_params = [{transform_indices = @transform_0, window_bounds = array<i64: 1, 17, 128>}, {pipeline_mode = #tpu.pipeline_mode<synchronous>, transform_indices = @transform_1, window_bounds = array<i64: 128, 128>}, {pipeline_mode = #tpu.pipeline_mode<synchronous>, transform_indices = @transform_2, window_bounds = array<i64: 1, 128>}, {transform_indices = @transform_3, window_bounds = array<i64: 1, 17, 128>}, {transform_indices = @transform_4, window_bounds = array<i64: 1, 17, 128>}]} {
    %c0 = arith.constant 0 : index
    %c0_0 = arith.constant 0 : index
    %c0_1 = arith.constant 0 : index
    %0 = vector.load %arg4[%c0, %c0_0, %c0_1] : memref<1x17x128xf32, #tpu.memory_space<vmem>>, vector<1x17x128xf32>
    %1 = vector.shape_cast %0 : vector<1x17x128xf32> to vector<17x128xf32>
    %c0_2 = arith.constant 0 : index
    %c0_3 = arith.constant 0 : index
    %2 = vector.load %arg3[%c0_2, %c0_3] : memref<1x128xf32, #tpu.memory_space<vmem>>, vector<1x128xf32>
    %3 = vector.broadcast %2 : vector<1x128xf32> to vector<17x128xf32>
    %4 = arith.addf %1, %3 : vector<17x128xf32>
    %c0_4 = arith.constant 0 : index
    %c0_5 = arith.constant 0 : index
    %c0_6 = arith.constant 0 : index
    %5 = vector.load %arg1[%c0_4, %c0_5, %c0_6] : memref<1x17x128xf32, #tpu.memory_space<vmem>>, vector<1x17x128xf32>
    %6 = vector.shape_cast %5 : vector<1x17x128xf32> to vector<17x128xf32>
    %7 = arith.truncf %6 : vector<17x128xf32> to vector<17x128xbf16>
    %c0_7 = arith.constant 0 : index
    %c0_8 = arith.constant 0 : index
    %8 = vector.load %arg2[%c0_7, %c0_8] : memref<128x128xbf16, #tpu.memory_space<vmem>>, vector<128x128xbf16>
    %cst = arith.constant dense<0.000000e+00> : vector<17x128xf32>
    %9 = tpu.matmul %7, %8, %cst {dimension_numbers = #tpu.dot_dimension_numbers<[1], [0], [0], [1], [0, 0, 1, 1], [], []>} : vector<17x128xbf16>, vector<128x128xbf16>, vector<17x128xf32> -> vector<17x128xf32>
    %10 = arith.addf %4, %9 : vector<17x128xf32>
    %c0_9 = arith.constant 0 : index
    %c0_10 = arith.constant 0 : index
    %c0_11 = arith.constant 0 : index
    %11 = vector.load %arg5[%c0_9, %c0_10, %c0_11] : memref<1x17x128xf32, #tpu.memory_space<vmem>>, vector<1x17x128xf32>
    %12 = vector.shape_cast %11 : vector<1x17x128xf32> to vector<17x128xf32>
    %13 = vector.shape_cast %10 : vector<17x128xf32> to vector<1x17x128xf32>
    tpu.vector_store %arg5[%c0_9, %c0_10, %c0_11], %13 {strides = array<i32>} : memref<1x17x128xf32, #tpu.memory_space<vmem>>, vector<1x17x128xf32>,
    return
  }
  func.func @transform_0(%arg0: i32) -> (i32, i32, i32) {
    %c0_i32 = arith.constant 0 : i32
    %c0_i32_0 = arith.constant 0 : i32
    %c0_i32_1 = arith.constant 0 : i32
    return %arg0, %c0_i32, %c0_i32_0 : i32, i32, i32
  }
  func.func @transform_1(%arg0: i32) -> (i32, i32) {
    %c0_i32 = arith.constant 0 : i32
    %c0_i32_0 = arith.constant 0 : i32
    %c0_i32_1 = arith.constant 0 : i32
    return %c0_i32, %c0_i32_0 : i32, i32
  }
  func.func @transform_2(%arg0: i32) -> (i32, i32) {
    %c0_i32 = arith.constant 0 : i32
    %c0_i32_0 = arith.constant 0 : i32
    %c0_i32_1 = arith.constant 0 : i32
    return %c0_i32, %c0_i32_0 : i32, i32
  }
  func.func @transform_3(%arg0: i32) -> (i32, i32, i32) {
    %c0_i32 = arith.constant 0 : i32
    %c0_i32_0 = arith.constant 0 : i32
    %c0_i32_1 = arith.constant 0 : i32
    return %arg0, %c0_i32, %c0_i32_0 : i32, i32, i32
  }
  func.func @transform_4(%arg0: i32) -> (i32, i32, i32) {
    %c0_i32 = arith.constant 0 : i32
    %c0_i32_0 = arith.constant 0 : i32
    %c0_i32_1 = arith.constant 0 : i32
    return %arg0, %c0_i32, %c0_i32_0 : i32, i32, i32
  }
}

module attributes {stable_mosaic.version = 11 : i64} {
  func.func @_layernorm_kernel(%arg0: i32, %arg1: memref<1x17x128xf32, #tpu.memory_space<vmem>>, %arg2: memref<1x128xf32, #tpu.memory_space<vmem>>, %arg3: memref<1x128xf32, #tpu.memory_space<vmem>>, %arg4: memref<1x17x128xf32, #tpu.memory_space<vmem>>) attributes {dimension_semantics = [#tpu.dimension_semantics<parallel>], iteration_bounds = array<i64: 2>, scalar_prefetch = 0 : i64, scratch_operands = 0 : i64, tpu.core_type = #tpu.core_type<tc>, window_params = [{transform_indices = @transform_0, window_bounds = array<i64: 1, 17, 128>}, {pipeline_mode = #tpu.pipeline_mode<synchronous>, transform_indices = @transform_1, window_bounds = array<i64: 1, 128>}, {pipeline_mode = #tpu.pipeline_mode<synchronous>, transform_indices = @transform_2, window_bounds = array<i64: 1, 128>}, {transform_indices = @transform_3, window_bounds = array<i64: 1, 17, 128>}]} {
    %c0 = arith.constant 0 : index
    %c0_0 = arith.constant 0 : index
    %c0_1 = arith.constant 0 : index
    %0 = vector.load %arg1[%c0, %c0_0, %c0_1] : memref<1x17x128xf32, #tpu.memory_space<vmem>>, vector<1x17x128xf32>
    %1 = vector.shape_cast %0 : vector<1x17x128xf32> to vector<17x128xf32>
    %c0_2 = arith.constant 0 : index
    %c0_3 = arith.constant 0 : index
    %2 = vector.load %arg2[%c0_2, %c0_3] : memref<1x128xf32, #tpu.memory_space<vmem>>, vector<1x128xf32>
    %c0_4 = arith.constant 0 : index
    %c0_5 = arith.constant 0 : index
    %3 = vector.load %arg3[%c0_4, %c0_5] : memref<1x128xf32, #tpu.memory_space<vmem>>, vector<1x128xf32>
    %cst = arith.constant dense<0.000000e+00> : vector<17xf32>
    %4 = vector.multi_reduction <add>, %1, %cst [1] : vector<17x128xf32> to vector<17xf32>
    %5 = vector.shape_cast %4 : vector<17xf32> to vector<17x1xf32>
    %cst_6 = arith.constant 1.280000e+02 : f32
    %6 = vector.broadcast %cst_6 : f32 to vector<17x1xf32>
    %7 = arith.divf %5, %6 : vector<17x1xf32>
    %8 = vector.broadcast %7 : vector<17x1xf32> to vector<17x128xf32>
    %9 = arith.subf %1, %8 : vector<17x128xf32>
    %10 = arith.mulf %9, %9 : vector<17x128xf32>
    %cst_7 = arith.constant dense<0.000000e+00> : vector<17xf32>
    %11 = vector.multi_reduction <add>, %10, %cst_7 [1] : vector<17x128xf32> to vector<17xf32>
    %12 = vector.shape_cast %11 : vector<17xf32> to vector<17x1xf32>
    %cst_8 = arith.constant 1.280000e+02 : f32
    %13 = vector.broadcast %cst_8 : f32 to vector<17x1xf32>
    %14 = arith.divf %12, %13 : vector<17x1xf32>
    %15 = vector.broadcast %7 : vector<17x1xf32> to vector<17x128xf32>
    %16 = arith.subf %1, %15 : vector<17x128xf32>
    %cst_9 = arith.constant 9.99999997E-7 : f32
    %17 = vector.broadcast %cst_9 : f32 to vector<17x1xf32>
    %18 = arith.addf %14, %17 : vector<17x1xf32>
    %19 = math.rsqrt %18 : vector<17x1xf32>
    %20 = vector.broadcast %19 : vector<17x1xf32> to vector<17x128xf32>
    %21 = arith.mulf %16, %20 : vector<17x128xf32>
    %22 = vector.broadcast %2 : vector<1x128xf32> to vector<17x128xf32>
    %23 = arith.mulf %21, %22 : vector<17x128xf32>
    %24 = vector.broadcast %3 : vector<1x128xf32> to vector<17x128xf32>
    %25 = arith.addf %23, %24 : vector<17x128xf32>
    %c0_10 = arith.constant 0 : index
    %c0_11 = arith.constant 0 : index
    %c0_12 = arith.constant 0 : index
    %26 = vector.load %arg4[%c0_10, %c0_11, %c0_12] : memref<1x17x128xf32, #tpu.memory_space<vmem>>, vector<1x17x128xf32>
    %27 = vector.shape_cast %26 : vector<1x17x128xf32> to vector<17x128xf32>
    %28 = vector.shape_cast %25 : vector<17x128xf32> to vector<1x17x128xf32>
    tpu.vector_store %arg4[%c0_10, %c0_11, %c0_12], %28 {strides = array<i32>} : memref<1x17x128xf32, #tpu.memory_space<vmem>>, vector<1x17x128xf32>,
    return
  }
  func.func @transform_0(%arg0: i32) -> (i32, i32, i32) {
    %c0_i32 = arith.constant 0 : i32
    %c0_i32_0 = arith.constant 0 : i32
    %c0_i32_1 = arith.constant 0 : i32
    return %arg0, %c0_i32, %c0_i32_0 : i32, i32, i32
  }
  func.func @transform_1(%arg0: i32) -> (i32, i32) {
    %c0_i32 = arith.constant 0 : i32
    %c0_i32_0 = arith.constant 0 : i32
    %c0_i32_1 = arith.constant 0 : i32
    return %c0_i32, %c0_i32_0 : i32, i32
  }
  func.func @transform_2(%arg0: i32) -> (i32, i32) {
    %c0_i32 = arith.constant 0 : i32
    %c0_i32_0 = arith.constant 0 : i32
    %c0_i32_1 = arith.constant 0 : i32
    return %c0_i32, %c0_i32_0 : i32, i32
  }
  func.func @transform_3(%arg0: i32) -> (i32, i32, i32) {
    %c0_i32 = arith.constant 0 : i32
    %c0_i32_0 = arith.constant 0 : i32
    %c0_i32_1 = arith.constant 0 : i32
    return %arg0, %c0_i32, %c0_i32_0 : i32, i32, i32
  }
}

module attributes {stable_mosaic.version = 11 : i64} {
  func.func @_ln_mlp_residual_kernel(%arg0: i32, %arg1: memref<1x17x128xf32, #tpu.memory_space<vmem>>, %arg2: memref<1x128xf32, #tpu.memory_space<vmem>>, %arg3: memref<1x128xf32, #tpu.memory_space<vmem>>, %arg4: memref<128x512xbf16, #tpu.memory_space<vmem>>, %arg5: memref<1x512xf32, #tpu.memory_space<vmem>>, %arg6: memref<512x128xbf16, #tpu.memory_space<vmem>>, %arg7: memref<1x128xf32, #tpu.memory_space<vmem>>, %arg8: memref<1x17x128xf32, #tpu.memory_space<vmem>>) attributes {dimension_semantics = [#tpu.dimension_semantics<parallel>], iteration_bounds = array<i64: 2>, scalar_prefetch = 0 : i64, scratch_operands = 0 : i64, tpu.core_type = #tpu.core_type<tc>, window_params = [{transform_indices = @transform_0, window_bounds = array<i64: 1, 17, 128>}, {pipeline_mode = #tpu.pipeline_mode<synchronous>, transform_indices = @transform_1, window_bounds = array<i64: 1, 128>}, {pipeline_mode = #tpu.pipeline_mode<synchronous>, transform_indices = @transform_2, window_bounds = array<i64: 1, 128>}, {pipeline_mode = #tpu.pipeline_mode<synchronous>, transform_indices = @transform_3, window_bounds = array<i64: 128, 512>}, {pipeline_mode = #tpu.pipeline_mode<synchronous>, transform_indices = @transform_4, window_bounds = array<i64: 1, 512>}, {pipeline_mode = #tpu.pipeline_mode<synchronous>, transform_indices = @transform_5, window_bounds = array<i64: 512, 128>}, {pipeline_mode = #tpu.pipeline_mode<synchronous>, transform_indices = @transform_6, window_bounds = array<i64: 1, 128>}, {transform_indices = @transform_7, window_bounds = array<i64: 1, 17, 128>}]} {
    %c0 = arith.constant 0 : index
    %c0_0 = arith.constant 0 : index
    %c0_1 = arith.constant 0 : index
    %0 = vector.load %arg1[%c0, %c0_0, %c0_1] : memref<1x17x128xf32, #tpu.memory_space<vmem>>, vector<1x17x128xf32>
    %1 = vector.shape_cast %0 : vector<1x17x128xf32> to vector<17x128xf32>
    %c0_2 = arith.constant 0 : index
    %c0_3 = arith.constant 0 : index
    %2 = vector.load %arg2[%c0_2, %c0_3] : memref<1x128xf32, #tpu.memory_space<vmem>>, vector<1x128xf32>
    %c0_4 = arith.constant 0 : index
    %c0_5 = arith.constant 0 : index
    %3 = vector.load %arg3[%c0_4, %c0_5] : memref<1x128xf32, #tpu.memory_space<vmem>>, vector<1x128xf32>
    %cst = arith.constant dense<0.000000e+00> : vector<17xf32>
    %4 = vector.multi_reduction <add>, %1, %cst [1] : vector<17x128xf32> to vector<17xf32>
    %5 = vector.shape_cast %4 : vector<17xf32> to vector<17x1xf32>
    %cst_6 = arith.constant 1.280000e+02 : f32
    %6 = vector.broadcast %cst_6 : f32 to vector<17x1xf32>
    %7 = arith.divf %5, %6 : vector<17x1xf32>
    %8 = vector.broadcast %7 : vector<17x1xf32> to vector<17x128xf32>
    %9 = arith.subf %1, %8 : vector<17x128xf32>
    %10 = arith.mulf %9, %9 : vector<17x128xf32>
    %cst_7 = arith.constant dense<0.000000e+00> : vector<17xf32>
    %11 = vector.multi_reduction <add>, %10, %cst_7 [1] : vector<17x128xf32> to vector<17xf32>
    %12 = vector.shape_cast %11 : vector<17xf32> to vector<17x1xf32>
    %cst_8 = arith.constant 1.280000e+02 : f32
    %13 = vector.broadcast %cst_8 : f32 to vector<17x1xf32>
    %14 = arith.divf %12, %13 : vector<17x1xf32>
    %15 = vector.broadcast %7 : vector<17x1xf32> to vector<17x128xf32>
    %16 = arith.subf %1, %15 : vector<17x128xf32>
    %cst_9 = arith.constant 9.99999997E-7 : f32
    %17 = vector.broadcast %cst_9 : f32 to vector<17x1xf32>
    %18 = arith.addf %14, %17 : vector<17x1xf32>
    %19 = math.rsqrt %18 : vector<17x1xf32>
    %20 = vector.broadcast %19 : vector<17x1xf32> to vector<17x128xf32>
    %21 = arith.mulf %16, %20 : vector<17x128xf32>
    %22 = vector.broadcast %2 : vector<1x128xf32> to vector<17x128xf32>
    %23 = arith.mulf %21, %22 : vector<17x128xf32>
    %24 = vector.broadcast %3 : vector<1x128xf32> to vector<17x128xf32>
    %25 = arith.addf %23, %24 : vector<17x128xf32>
    %26 = arith.truncf %25 : vector<17x128xf32> to vector<17x128xbf16>
    %c0_10 = arith.constant 0 : index
    %c0_11 = arith.constant 0 : index
    %27 = vector.load %arg4[%c0_10, %c0_11] : memref<128x512xbf16, #tpu.memory_space<vmem>>, vector<128x512xbf16>
    %cst_12 = arith.constant dense<0.000000e+00> : vector<17x512xf32>
    %28 = tpu.matmul %26, %27, %cst_12 {dimension_numbers = #tpu.dot_dimension_numbers<[1], [0], [0], [1], [0, 0, 1, 1], [], []>} : vector<17x128xbf16>, vector<128x512xbf16>, vector<17x512xf32> -> vector<17x512xf32>
    %c0_13 = arith.constant 0 : index
    %c0_14 = arith.constant 0 : index
    %29 = vector.load %arg5[%c0_13, %c0_14] : memref<1x512xf32, #tpu.memory_space<vmem>>, vector<1x512xf32>
    %30 = vector.broadcast %29 : vector<1x512xf32> to vector<17x512xf32>
    %31 = arith.addf %28, %30 : vector<17x512xf32>
    %32 = arith.mulf %31, %31 : vector<17x512xf32>
    %33 = arith.mulf %31, %32 : vector<17x512xf32>
    %cst_15 = arith.constant 4.471500e-02 : f32
    %34 = vector.broadcast %cst_15 : f32 to vector<17x512xf32>
    %35 = arith.mulf %34, %33 : vector<17x512xf32>
    %36 = arith.addf %31, %35 : vector<17x512xf32>
    %cst_16 = arith.constant 0.797884583 : f32
    %37 = vector.broadcast %cst_16 : f32 to vector<17x512xf32>
    %38 = arith.mulf %37, %36 : vector<17x512xf32>
    %39 = math.tanh %38 : vector<17x512xf32>
    %cst_17 = arith.constant 1.000000e+00 : f32
    %40 = vector.broadcast %cst_17 : f32 to vector<17x512xf32>
    %41 = arith.addf %40, %39 : vector<17x512xf32>
    %cst_18 = arith.constant 5.000000e-01 : f32
    %42 = vector.broadcast %cst_18 : f32 to vector<17x512xf32>
    %43 = arith.mulf %42, %41 : vector<17x512xf32>
    %44 = arith.mulf %31, %43 : vector<17x512xf32>
    %c0_19 = arith.constant 0 : index
    %c0_20 = arith.constant 0 : index
    %45 = vector.load %arg7[%c0_19, %c0_20] : memref<1x128xf32, #tpu.memory_space<vmem>>, vector<1x128xf32>
    %46 = vector.broadcast %45 : vector<1x128xf32> to vector<17x128xf32>
    %47 = arith.addf %1, %46 : vector<17x128xf32>
    %48 = arith.truncf %44 : vector<17x512xf32> to vector<17x512xbf16>
    %c0_21 = arith.constant 0 : index
    %c0_22 = arith.constant 0 : index
    %49 = vector.load %arg6[%c0_21, %c0_22] : memref<512x128xbf16, #tpu.memory_space<vmem>>, vector<512x128xbf16>
    %cst_23 = arith.constant dense<0.000000e+00> : vector<17x128xf32>
    %50 = tpu.matmul %48, %49, %cst_23 {dimension_numbers = #tpu.dot_dimension_numbers<[1], [0], [0], [1], [0, 0, 1, 1], [], []>} : vector<17x512xbf16>, vector<512x128xbf16>, vector<17x128xf32> -> vector<17x128xf32>
    %51 = arith.addf %47, %50 : vector<17x128xf32>
    %c0_24 = arith.constant 0 : index
    %c0_25 = arith.constant 0 : index
    %c0_26 = arith.constant 0 : index
    %52 = vector.load %arg8[%c0_24, %c0_25, %c0_26] : memref<1x17x128xf32, #tpu.memory_space<vmem>>, vector<1x17x128xf32>
    %53 = vector.shape_cast %52 : vector<1x17x128xf32> to vector<17x128xf32>
    %54 = vector.shape_cast %51 : vector<17x128xf32> to vector<1x17x128xf32>
    tpu.vector_store %arg8[%c0_24, %c0_25, %c0_26], %54 {strides = array<i32>} : memref<1x17x128xf32, #tpu.memory_space<vmem>>, vector<1x17x128xf32>,
    return
  }
  func.func @transform_0(%arg0: i32) -> (i32, i32, i32) {
    %c0_i32 = arith.constant 0 : i32
    %c0_i32_0 = arith.constant 0 : i32
    %c0_i32_1 = arith.constant 0 : i32
    return %arg0, %c0_i32, %c0_i32_0 : i32, i32, i32
  }
  func.func @transform_1(%arg0: i32) -> (i32, i32) {
    %c0_i32 = arith.constant 0 : i32
    %c0_i32_0 = arith.constant 0 : i32
    %c0_i32_1 = arith.constant 0 : i32
    return %c0_i32, %c0_i32_0 : i32, i32
  }
  func.func @transform_2(%arg0: i32) -> (i32, i32) {
    %c0_i32 = arith.constant 0 : i32
    %c0_i32_0 = arith.constant 0 : i32
    %c0_i32_1 = arith.constant 0 : i32
    return %c0_i32, %c0_i32_0 : i32, i32
  }
  func.func @transform_3(%arg0: i32) -> (i32, i32) {
    %c0_i32 = arith.constant 0 : i32
    %c0_i32_0 = arith.constant 0 : i32
    %c0_i32_1 = arith.constant 0 : i32
    return %c0_i32, %c0_i32_0 : i32, i32
  }
  func.func @transform_4(%arg0: i32) -> (i32, i32) {
    %c0_i32 = arith.constant 0 : i32
    %c0_i32_0 = arith.constant 0 : i32
    %c0_i32_1 = arith.constant 0 : i32
    return %c0_i32, %c0_i32_0 : i32, i32
  }
  func.func @transform_5(%arg0: i32) -> (i32, i32) {
    %c0_i32 = arith.constant 0 : i32
    %c0_i32_0 = arith.constant 0 : i32
    %c0_i32_1 = arith.constant 0 : i32
    return %c0_i32, %c0_i32_0 : i32, i32
  }
  func.func @transform_6(%arg0: i32) -> (i32, i32) {
    %c0_i32 = arith.constant 0 : i32
    %c0_i32_0 = arith.constant 0 : i32
    %c0_i32_1 = arith.constant 0 : i32
    return %c0_i32, %c0_i32_0 : i32, i32
  }
  func.func @transform_7(%arg0: i32) -> (i32, i32, i32) {
    %c0_i32 = arith.constant 0 : i32
    %c0_i32_0 = arith.constant 0 : i32
    %c0_i32_1 = arith.constant 0 : i32
    return %arg0, %c0_i32, %c0_i32_0 : i32, i32, i32
  }
}

module attributes {stable_mosaic.version = 11 : i64} {
  func.func @_adaptive_maxpool_kernel(%arg0: i32, %arg1: memref<1x4x4x128xf32, #tpu.memory_space<vmem>>, %arg2: memref<1x16x128xf32, #tpu.memory_space<vmem>>) attributes {dimension_semantics = [#tpu.dimension_semantics<parallel>], iteration_bounds = array<i64: 2>, scalar_prefetch = 0 : i64, scratch_operands = 0 : i64, tpu.core_type = #tpu.core_type<tc>, window_params = [{transform_indices = @transform_0, window_bounds = array<i64: 1, 4, 4, 128>}, {transform_indices = @transform_1, window_bounds = array<i64: 1, 16, 128>}]} {
    %c0 = arith.constant 0 : index
    %c0_0 = arith.constant 0 : index
    %c0_1 = arith.constant 0 : index
    %c0_2 = arith.constant 0 : index
    %0 = vector.load %arg1[%c0, %c0_0, %c0_1, %c0_2] : memref<1x4x4x128xf32, #tpu.memory_space<vmem>>, vector<1x4x4x128xf32>
    %1 = vector.shape_cast %0 : vector<1x4x4x128xf32> to vector<4x4x128xf32>
    %2 = vector.extract_strided_slice %1 {offsets = [0, 0, 0], sizes = [1, 1, 128], strides = [1, 1, 1]} : vector<4x4x128xf32> to vector<1x1x128xf32>
    %cst = arith.constant dense<0xFF800000> : vector<1x128xf32>
    %3 = vector.multi_reduction <maximumf>, %2, %cst [0] : vector<1x1x128xf32> to vector<1x128xf32>
    %cst_3 = arith.constant dense<0xFF800000> : vector<128xf32>
    %4 = vector.multi_reduction <maximumf>, %3, %cst_3 [0] : vector<1x128xf32> to vector<128xf32>
    %c0_4 = arith.constant 0 : index
    %c0_5 = arith.constant 0 : index
    %c0_6 = arith.constant 0 : index
    %5 = vector.load %arg2[%c0_4, %c0_5, %c0_6] : memref<1x16x128xf32, #tpu.memory_space<vmem>>, vector<1x1x128xf32>
    %6 = vector.shape_cast %5 : vector<1x1x128xf32> to vector<128xf32>
    %7 = vector.shape_cast %4 : vector<128xf32> to vector<1x1x128xf32>
    tpu.vector_store %arg2[%c0_4, %c0_5, %c0_6], %7 {strides = array<i32>} : memref<1x16x128xf32, #tpu.memory_space<vmem>>, vector<1x1x128xf32>,
    %8 = vector.extract_strided_slice %1 {offsets = [0, 1, 0], sizes = [1, 1, 128], strides = [1, 1, 1]} : vector<4x4x128xf32> to vector<1x1x128xf32>
    %cst_7 = arith.constant dense<0xFF800000> : vector<1x128xf32>
    %9 = vector.multi_reduction <maximumf>, %8, %cst_7 [0] : vector<1x1x128xf32> to vector<1x128xf32>
    %cst_8 = arith.constant dense<0xFF800000> : vector<128xf32>
    %10 = vector.multi_reduction <maximumf>, %9, %cst_8 [0] : vector<1x128xf32> to vector<128xf32>
    %c0_9 = arith.constant 0 : index
    %c1 = arith.constant 1 : index
    %c0_10 = arith.constant 0 : index
    %11 = vector.load %arg2[%c0_9, %c1, %c0_10] : memref<1x16x128xf32, #tpu.memory_space<vmem>>, vector<1x1x128xf32>
    %12 = vector.shape_cast %11 : vector<1x1x128xf32> to vector<128xf32>
    %13 = vector.shape_cast %10 : vector<128xf32> to vector<1x1x128xf32>
    tpu.vector_store %arg2[%c0_9, %c1, %c0_10], %13 {strides = array<i32>} : memref<1x16x128xf32, #tpu.memory_space<vmem>>, vector<1x1x128xf32>,
    %14 = vector.extract_strided_slice %1 {offsets = [0, 2, 0], sizes = [1, 1, 128], strides = [1, 1, 1]} : vector<4x4x128xf32> to vector<1x1x128xf32>
    %cst_11 = arith.constant dense<0xFF800000> : vector<1x128xf32>
    %15 = vector.multi_reduction <maximumf>, %14, %cst_11 [0] : vector<1x1x128xf32> to vector<1x128xf32>
    %cst_12 = arith.constant dense<0xFF800000> : vector<128xf32>
    %16 = vector.multi_reduction <maximumf>, %15, %cst_12 [0] : vector<1x128xf32> to vector<128xf32>
    %c0_13 = arith.constant 0 : index
    %c2 = arith.constant 2 : index
    %c0_14 = arith.constant 0 : index
    %17 = vector.load %arg2[%c0_13, %c2, %c0_14] : memref<1x16x128xf32, #tpu.memory_space<vmem>>, vector<1x1x128xf32>
    %18 = vector.shape_cast %17 : vector<1x1x128xf32> to vector<128xf32>
    %19 = vector.shape_cast %16 : vector<128xf32> to vector<1x1x128xf32>
    tpu.vector_store %arg2[%c0_13, %c2, %c0_14], %19 {strides = array<i32>} : memref<1x16x128xf32, #tpu.memory_space<vmem>>, vector<1x1x128xf32>,
    %20 = vector.extract_strided_slice %1 {offsets = [0, 3, 0], sizes = [1, 1, 128], strides = [1, 1, 1]} : vector<4x4x128xf32> to vector<1x1x128xf32>
    %cst_15 = arith.constant dense<0xFF800000> : vector<1x128xf32>
    %21 = vector.multi_reduction <maximumf>, %20, %cst_15 [0] : vector<1x1x128xf32> to vector<1x128xf32>
    %cst_16 = arith.constant dense<0xFF800000> : vector<128xf32>
    %22 = vector.multi_reduction <maximumf>, %21, %cst_16 [0] : vector<1x128xf32> to vector<128xf32>
    %c0_17 = arith.constant 0 : index
    %c3 = arith.constant 3 : index
    %c0_18 = arith.constant 0 : index
    %23 = vector.load %arg2[%c0_17, %c3, %c0_18] : memref<1x16x128xf32, #tpu.memory_space<vmem>>, vector<1x1x128xf32>
    %24 = vector.shape_cast %23 : vector<1x1x128xf32> to vector<128xf32>
    %25 = vector.shape_cast %22 : vector<128xf32> to vector<1x1x128xf32>
    tpu.vector_store %arg2[%c0_17, %c3, %c0_18], %25 {strides = array<i32>} : memref<1x16x128xf32, #tpu.memory_space<vmem>>, vector<1x1x128xf32>,
    %26 = vector.extract_strided_slice %1 {offsets = [1, 0, 0], sizes = [1, 1, 128], strides = [1, 1, 1]} : vector<4x4x128xf32> to vector<1x1x128xf32>
    %cst_19 = arith.constant dense<0xFF800000> : vector<1x128xf32>
    %27 = vector.multi_reduction <maximumf>, %26, %cst_19 [0] : vector<1x1x128xf32> to vector<1x128xf32>
    %cst_20 = arith.constant dense<0xFF800000> : vector<128xf32>
    %28 = vector.multi_reduction <maximumf>, %27, %cst_20 [0] : vector<1x128xf32> to vector<128xf32>
    %c0_21 = arith.constant 0 : index
    %c4 = arith.constant 4 : index
    %c0_22 = arith.constant 0 : index
    %29 = vector.load %arg2[%c0_21, %c4, %c0_22] : memref<1x16x128xf32, #tpu.memory_space<vmem>>, vector<1x1x128xf32>
    %30 = vector.shape_cast %29 : vector<1x1x128xf32> to vector<128xf32>
    %31 = vector.shape_cast %28 : vector<128xf32> to vector<1x1x128xf32>
    tpu.vector_store %arg2[%c0_21, %c4, %c0_22], %31 {strides = array<i32>} : memref<1x16x128xf32, #tpu.memory_space<vmem>>, vector<1x1x128xf32>,
    %32 = vector.extract_strided_slice %1 {offsets = [1, 1, 0], sizes = [1, 1, 128], strides = [1, 1, 1]} : vector<4x4x128xf32> to vector<1x1x128xf32>
    %cst_23 = arith.constant dense<0xFF800000> : vector<1x128xf32>
    %33 = vector.multi_reduction <maximumf>, %32, %cst_23 [0] : vector<1x1x128xf32> to vector<1x128xf32>
    %cst_24 = arith.constant dense<0xFF800000> : vector<128xf32>
    %34 = vector.multi_reduction <maximumf>, %33, %cst_24 [0] : vector<1x128xf32> to vector<128xf32>
    %c0_25 = arith.constant 0 : index
    %c5 = arith.constant 5 : index
    %c0_26 = arith.constant 0 : index
    %35 = vector.load %arg2[%c0_25, %c5, %c0_26] : memref<1x16x128xf32, #tpu.memory_space<vmem>>, vector<1x1x128xf32>
    %36 = vector.shape_cast %35 : vector<1x1x128xf32> to vector<128xf32>
    %37 = vector.shape_cast %34 : vector<128xf32> to vector<1x1x128xf32>
    tpu.vector_store %arg2[%c0_25, %c5, %c0_26], %37 {strides = array<i32>} : memref<1x16x128xf32, #tpu.memory_space<vmem>>, vector<1x1x128xf32>,
    %38 = vector.extract_strided_slice %1 {offsets = [1, 2, 0], sizes = [1, 1, 128], strides = [1, 1, 1]} : vector<4x4x128xf32> to vector<1x1x128xf32>
    %cst_27 = arith.constant dense<0xFF800000> : vector<1x128xf32>
    %39 = vector.multi_reduction <maximumf>, %38, %cst_27 [0] : vector<1x1x128xf32> to vector<1x128xf32>
    %cst_28 = arith.constant dense<0xFF800000> : vector<128xf32>
    %40 = vector.multi_reduction <maximumf>, %39, %cst_28 [0] : vector<1x128xf32> to vector<128xf32>
    %c0_29 = arith.constant 0 : index
    %c6 = arith.constant 6 : index
    %c0_30 = arith.constant 0 : index
    %41 = vector.load %arg2[%c0_29, %c6, %c0_30] : memref<1x16x128xf32, #tpu.memory_space<vmem>>, vector<1x1x128xf32>
    %42 = vector.shape_cast %41 : vector<1x1x128xf32> to vector<128xf32>
    %43 = vector.shape_cast %40 : vector<128xf32> to vector<1x1x128xf32>
    tpu.vector_store %arg2[%c0_29, %c6, %c0_30], %43 {strides = array<i32>} : memref<1x16x128xf32, #tpu.memory_space<vmem>>, vector<1x1x128xf32>,
    %44 = vector.extract_strided_slice %1 {offsets = [1, 3, 0], sizes = [1, 1, 128], strides = [1, 1, 1]} : vector<4x4x128xf32> to vector<1x1x128xf32>
    %cst_31 = arith.constant dense<0xFF800000> : vector<1x128xf32>
    %45 = vector.multi_reduction <maximumf>, %44, %cst_31 [0] : vector<1x1x128xf32> to vector<1x128xf32>
    %cst_32 = arith.constant dense<0xFF800000> : vector<128xf32>
    %46 = vector.multi_reduction <maximumf>, %45, %cst_32 [0] : vector<1x128xf32> to vector<128xf32>
    %c0_33 = arith.constant 0 : index
    %c7 = arith.constant 7 : index
    %c0_34 = arith.constant 0 : index
    %47 = vector.load %arg2[%c0_33, %c7, %c0_34] : memref<1x16x128xf32, #tpu.memory_space<vmem>>, vector<1x1x128xf32>
    %48 = vector.shape_cast %47 : vector<1x1x128xf32> to vector<128xf32>
    %49 = vector.shape_cast %46 : vector<128xf32> to vector<1x1x128xf32>
    tpu.vector_store %arg2[%c0_33, %c7, %c0_34], %49 {strides = array<i32>} : memref<1x16x128xf32, #tpu.memory_space<vmem>>, vector<1x1x128xf32>,
    %50 = vector.extract_strided_slice %1 {offsets = [2, 0, 0], sizes = [1, 1, 128], strides = [1, 1, 1]} : vector<4x4x128xf32> to vector<1x1x128xf32>
    %cst_35 = arith.constant dense<0xFF800000> : vector<1x128xf32>
    %51 = vector.multi_reduction <maximumf>, %50, %cst_35 [0] : vector<1x1x128xf32> to vector<1x128xf32>
    %cst_36 = arith.constant dense<0xFF800000> : vector<128xf32>
    %52 = vector.multi_reduction <maximumf>, %51, %cst_36 [0] : vector<1x128xf32> to vector<128xf32>
    %c0_37 = arith.constant 0 : index
    %c8 = arith.constant 8 : index
    %c0_38 = arith.constant 0 : index
    %53 = vector.load %arg2[%c0_37, %c8, %c0_38] : memref<1x16x128xf32, #tpu.memory_space<vmem>>, vector<1x1x128xf32>
    %54 = vector.shape_cast %53 : vector<1x1x128xf32> to vector<128xf32>
    %55 = vector.shape_cast %52 : vector<128xf32> to vector<1x1x128xf32>
    tpu.vector_store %arg2[%c0_37, %c8, %c0_38], %55 {strides = array<i32>} : memref<1x16x128xf32, #tpu.memory_space<vmem>>, vector<1x1x128xf32>,
    %56 = vector.extract_strided_slice %1 {offsets = [2, 1, 0], sizes = [1, 1, 128], strides = [1, 1, 1]} : vector<4x4x128xf32> to vector<1x1x128xf32>
    %cst_39 = arith.constant dense<0xFF800000> : vector<1x128xf32>
    %57 = vector.multi_reduction <maximumf>, %56, %cst_39 [0] : vector<1x1x128xf32> to vector<1x128xf32>
    %cst_40 = arith.constant dense<0xFF800000> : vector<128xf32>
    %58 = vector.multi_reduction <maximumf>, %57, %cst_40 [0] : vector<1x128xf32> to vector<128xf32>
    %c0_41 = arith.constant 0 : index
    %c9 = arith.constant 9 : index
    %c0_42 = arith.constant 0 : index
    %59 = vector.load %arg2[%c0_41, %c9, %c0_42] : memref<1x16x128xf32, #tpu.memory_space<vmem>>, vector<1x1x128xf32>
    %60 = vector.shape_cast %59 : vector<1x1x128xf32> to vector<128xf32>
    %61 = vector.shape_cast %58 : vector<128xf32> to vector<1x1x128xf32>
    tpu.vector_store %arg2[%c0_41, %c9, %c0_42], %61 {strides = array<i32>} : memref<1x16x128xf32, #tpu.memory_space<vmem>>, vector<1x1x128xf32>,
    %62 = vector.extract_strided_slice %1 {offsets = [2, 2, 0], sizes = [1, 1, 128], strides = [1, 1, 1]} : vector<4x4x128xf32> to vector<1x1x128xf32>
    %cst_43 = arith.constant dense<0xFF800000> : vector<1x128xf32>
    %63 = vector.multi_reduction <maximumf>, %62, %cst_43 [0] : vector<1x1x128xf32> to vector<1x128xf32>
    %cst_44 = arith.constant dense<0xFF800000> : vector<128xf32>
    %64 = vector.multi_reduction <maximumf>, %63, %cst_44 [0] : vector<1x128xf32> to vector<128xf32>
    %c0_45 = arith.constant 0 : index
    %c10 = arith.constant 10 : index
    %c0_46 = arith.constant 0 : index
    %65 = vector.load %arg2[%c0_45, %c10, %c0_46] : memref<1x16x128xf32, #tpu.memory_space<vmem>>, vector<1x1x128xf32>
    %66 = vector.shape_cast %65 : vector<1x1x128xf32> to vector<128xf32>
    %67 = vector.shape_cast %64 : vector<128xf32> to vector<1x1x128xf32>
    tpu.vector_store %arg2[%c0_45, %c10, %c0_46], %67 {strides = array<i32>} : memref<1x16x128xf32, #tpu.memory_space<vmem>>, vector<1x1x128xf32>,
    %68 = vector.extract_strided_slice %1 {offsets = [2, 3, 0], sizes = [1, 1, 128], strides = [1, 1, 1]} : vector<4x4x128xf32> to vector<1x1x128xf32>
    %cst_47 = arith.constant dense<0xFF800000> : vector<1x128xf32>
    %69 = vector.multi_reduction <maximumf>, %68, %cst_47 [0] : vector<1x1x128xf32> to vector<1x128xf32>
    %cst_48 = arith.constant dense<0xFF800000> : vector<128xf32>
    %70 = vector.multi_reduction <maximumf>, %69, %cst_48 [0] : vector<1x128xf32> to vector<128xf32>
    %c0_49 = arith.constant 0 : index
    %c11 = arith.constant 11 : index
    %c0_50 = arith.constant 0 : index
    %71 = vector.load %arg2[%c0_49, %c11, %c0_50] : memref<1x16x128xf32, #tpu.memory_space<vmem>>, vector<1x1x128xf32>
    %72 = vector.shape_cast %71 : vector<1x1x128xf32> to vector<128xf32>
    %73 = vector.shape_cast %70 : vector<128xf32> to vector<1x1x128xf32>
    tpu.vector_store %arg2[%c0_49, %c11, %c0_50], %73 {strides = array<i32>} : memref<1x16x128xf32, #tpu.memory_space<vmem>>, vector<1x1x128xf32>,
    %74 = vector.extract_strided_slice %1 {offsets = [3, 0, 0], sizes = [1, 1, 128], strides = [1, 1, 1]} : vector<4x4x128xf32> to vector<1x1x128xf32>
    %cst_51 = arith.constant dense<0xFF800000> : vector<1x128xf32>
    %75 = vector.multi_reduction <maximumf>, %74, %cst_51 [0] : vector<1x1x128xf32> to vector<1x128xf32>
    %cst_52 = arith.constant dense<0xFF800000> : vector<128xf32>
    %76 = vector.multi_reduction <maximumf>, %75, %cst_52 [0] : vector<1x128xf32> to vector<128xf32>
    %c0_53 = arith.constant 0 : index
    %c12 = arith.constant 12 : index
    %c0_54 = arith.constant 0 : index
    %77 = vector.load %arg2[%c0_53, %c12, %c0_54] : memref<1x16x128xf32, #tpu.memory_space<vmem>>, vector<1x1x128xf32>
    %78 = vector.shape_cast %77 : vector<1x1x128xf32> to vector<128xf32>
    %79 = vector.shape_cast %76 : vector<128xf32> to vector<1x1x128xf32>
    tpu.vector_store %arg2[%c0_53, %c12, %c0_54], %79 {strides = array<i32>} : memref<1x16x128xf32, #tpu.memory_space<vmem>>, vector<1x1x128xf32>,
    %80 = vector.extract_strided_slice %1 {offsets = [3, 1, 0], sizes = [1, 1, 128], strides = [1, 1, 1]} : vector<4x4x128xf32> to vector<1x1x128xf32>
    %cst_55 = arith.constant dense<0xFF800000> : vector<1x128xf32>
    %81 = vector.multi_reduction <maximumf>, %80, %cst_55 [0] : vector<1x1x128xf32> to vector<1x128xf32>
    %cst_56 = arith.constant dense<0xFF800000> : vector<128xf32>
    %82 = vector.multi_reduction <maximumf>, %81, %cst_56 [0] : vector<1x128xf32> to vector<128xf32>
    %c0_57 = arith.constant 0 : index
    %c13 = arith.constant 13 : index
    %c0_58 = arith.constant 0 : index
    %83 = vector.load %arg2[%c0_57, %c13, %c0_58] : memref<1x16x128xf32, #tpu.memory_space<vmem>>, vector<1x1x128xf32>
    %84 = vector.shape_cast %83 : vector<1x1x128xf32> to vector<128xf32>
    %85 = vector.shape_cast %82 : vector<128xf32> to vector<1x1x128xf32>
    tpu.vector_store %arg2[%c0_57, %c13, %c0_58], %85 {strides = array<i32>} : memref<1x16x128xf32, #tpu.memory_space<vmem>>, vector<1x1x128xf32>,
    %86 = vector.extract_strided_slice %1 {offsets = [3, 2, 0], sizes = [1, 1, 128], strides = [1, 1, 1]} : vector<4x4x128xf32> to vector<1x1x128xf32>
    %cst_59 = arith.constant dense<0xFF800000> : vector<1x128xf32>
    %87 = vector.multi_reduction <maximumf>, %86, %cst_59 [0] : vector<1x1x128xf32> to vector<1x128xf32>
    %cst_60 = arith.constant dense<0xFF800000> : vector<128xf32>
    %88 = vector.multi_reduction <maximumf>, %87, %cst_60 [0] : vector<1x128xf32> to vector<128xf32>
    %c0_61 = arith.constant 0 : index
    %c14 = arith.constant 14 : index
    %c0_62 = arith.constant 0 : index
    %89 = vector.load %arg2[%c0_61, %c14, %c0_62] : memref<1x16x128xf32, #tpu.memory_space<vmem>>, vector<1x1x128xf32>
    %90 = vector.shape_cast %89 : vector<1x1x128xf32> to vector<128xf32>
    %91 = vector.shape_cast %88 : vector<128xf32> to vector<1x1x128xf32>
    tpu.vector_store %arg2[%c0_61, %c14, %c0_62], %91 {strides = array<i32>} : memref<1x16x128xf32, #tpu.memory_space<vmem>>, vector<1x1x128xf32>,
    %92 = vector.extract_strided_slice %1 {offsets = [3, 3, 0], sizes = [1, 1, 128], strides = [1, 1, 1]} : vector<4x4x128xf32> to vector<1x1x128xf32>
    %cst_63 = arith.constant dense<0xFF800000> : vector<1x128xf32>
    %93 = vector.multi_reduction <maximumf>, %92, %cst_63 [0] : vector<1x1x128xf32> to vector<1x128xf32>
    %cst_64 = arith.constant dense<0xFF800000> : vector<128xf32>
    %94 = vector.multi_reduction <maximumf>, %93, %cst_64 [0] : vector<1x128xf32> to vector<128xf32>
    %c0_65 = arith.constant 0 : index
    %c15 = arith.constant 15 : index
    %c0_66 = arith.constant 0 : index
    %95 = vector.load %arg2[%c0_65, %c15, %c0_66] : memref<1x16x128xf32, #tpu.memory_space<vmem>>, vector<1x1x128xf32>
    %96 = vector.shape_cast %95 : vector<1x1x128xf32> to vector<128xf32>
    %97 = vector.shape_cast %94 : vector<128xf32> to vector<1x1x128xf32>
    tpu.vector_store %arg2[%c0_65, %c15, %c0_66], %97 {strides = array<i32>} : memref<1x16x128xf32, #tpu.memory_space<vmem>>, vector<1x1x128xf32>,
    return
  }
  func.func @transform_0(%arg0: i32) -> (i32, i32, i32, i32) {
    %c0_i32 = arith.constant 0 : i32
    %c0_i32_0 = arith.constant 0 : i32
    %c0_i32_1 = arith.constant 0 : i32
    %c0_i32_2 = arith.constant 0 : i32
    return %arg0, %c0_i32, %c0_i32_0, %c0_i32_1 : i32, i32, i32, i32
  }
  func.func @transform_1(%arg0: i32) -> (i32, i32, i32) {
    %c0_i32 = arith.constant 0 : i32
    %c0_i32_0 = arith.constant 0 : i32
    %c0_i32_1 = arith.constant 0 : i32
    return %arg0, %c0_i32, %c0_i32_0 : i32, i32, i32
  }
}

module attributes {stable_mosaic.version = 11 : i64} {
  func.func @_adaptive_maxpool_kernel(%arg0: i32, %arg1: memref<1x4x4x128xf32, #tpu.memory_space<vmem>>, %arg2: memref<1x4x128xf32, #tpu.memory_space<vmem>>) attributes {dimension_semantics = [#tpu.dimension_semantics<parallel>], iteration_bounds = array<i64: 2>, scalar_prefetch = 0 : i64, scratch_operands = 0 : i64, tpu.core_type = #tpu.core_type<tc>, window_params = [{transform_indices = @transform_0, window_bounds = array<i64: 1, 4, 4, 128>}, {transform_indices = @transform_1, window_bounds = array<i64: 1, 4, 128>}]} {
    %c0 = arith.constant 0 : index
    %c0_0 = arith.constant 0 : index
    %c0_1 = arith.constant 0 : index
    %c0_2 = arith.constant 0 : index
    %0 = vector.load %arg1[%c0, %c0_0, %c0_1, %c0_2] : memref<1x4x4x128xf32, #tpu.memory_space<vmem>>, vector<1x4x4x128xf32>
    %1 = vector.shape_cast %0 : vector<1x4x4x128xf32> to vector<4x4x128xf32>
    %2 = vector.extract_strided_slice %1 {offsets = [0, 0, 0], sizes = [2, 2, 128], strides = [1, 1, 1]} : vector<4x4x128xf32> to vector<2x2x128xf32>
    %cst = arith.constant dense<0xFF800000> : vector<2x128xf32>
    %3 = vector.multi_reduction <maximumf>, %2, %cst [0] : vector<2x2x128xf32> to vector<2x128xf32>
    %cst_3 = arith.constant dense<0xFF800000> : vector<128xf32>
    %4 = vector.multi_reduction <maximumf>, %3, %cst_3 [0] : vector<2x128xf32> to vector<128xf32>
    %c0_4 = arith.constant 0 : index
    %c0_5 = arith.constant 0 : index
    %c0_6 = arith.constant 0 : index
    %5 = vector.load %arg2[%c0_4, %c0_5, %c0_6] : memref<1x4x128xf32, #tpu.memory_space<vmem>>, vector<1x1x128xf32>
    %6 = vector.shape_cast %5 : vector<1x1x128xf32> to vector<128xf32>
    %7 = vector.shape_cast %4 : vector<128xf32> to vector<1x1x128xf32>
    tpu.vector_store %arg2[%c0_4, %c0_5, %c0_6], %7 {strides = array<i32>} : memref<1x4x128xf32, #tpu.memory_space<vmem>>, vector<1x1x128xf32>,
    %8 = vector.extract_strided_slice %1 {offsets = [0, 2, 0], sizes = [2, 2, 128], strides = [1, 1, 1]} : vector<4x4x128xf32> to vector<2x2x128xf32>
    %cst_7 = arith.constant dense<0xFF800000> : vector<2x128xf32>
    %9 = vector.multi_reduction <maximumf>, %8, %cst_7 [0] : vector<2x2x128xf32> to vector<2x128xf32>
    %cst_8 = arith.constant dense<0xFF800000> : vector<128xf32>
    %10 = vector.multi_reduction <maximumf>, %9, %cst_8 [0] : vector<2x128xf32> to vector<128xf32>
    %c0_9 = arith.constant 0 : index
    %c1 = arith.constant 1 : index
    %c0_10 = arith.constant 0 : index
    %11 = vector.load %arg2[%c0_9, %c1, %c0_10] : memref<1x4x128xf32, #tpu.memory_space<vmem>>, vector<1x1x128xf32>
    %12 = vector.shape_cast %11 : vector<1x1x128xf32> to vector<128xf32>
    %13 = vector.shape_cast %10 : vector<128xf32> to vector<1x1x128xf32>
    tpu.vector_store %arg2[%c0_9, %c1, %c0_10], %13 {strides = array<i32>} : memref<1x4x128xf32, #tpu.memory_space<vmem>>, vector<1x1x128xf32>,
    %14 = vector.extract_strided_slice %1 {offsets = [2, 0, 0], sizes = [2, 2, 128], strides = [1, 1, 1]} : vector<4x4x128xf32> to vector<2x2x128xf32>
    %cst_11 = arith.constant dense<0xFF800000> : vector<2x128xf32>
    %15 = vector.multi_reduction <maximumf>, %14, %cst_11 [0] : vector<2x2x128xf32> to vector<2x128xf32>
    %cst_12 = arith.constant dense<0xFF800000> : vector<128xf32>
    %16 = vector.multi_reduction <maximumf>, %15, %cst_12 [0] : vector<2x128xf32> to vector<128xf32>
    %c0_13 = arith.constant 0 : index
    %c2 = arith.constant 2 : index
    %c0_14 = arith.constant 0 : index
    %17 = vector.load %arg2[%c0_13, %c2, %c0_14] : memref<1x4x128xf32, #tpu.memory_space<vmem>>, vector<1x1x128xf32>
    %18 = vector.shape_cast %17 : vector<1x1x128xf32> to vector<128xf32>
    %19 = vector.shape_cast %16 : vector<128xf32> to vector<1x1x128xf32>
    tpu.vector_store %arg2[%c0_13, %c2, %c0_14], %19 {strides = array<i32>} : memref<1x4x128xf32, #tpu.memory_space<vmem>>, vector<1x1x128xf32>,
    %20 = vector.extract_strided_slice %1 {offsets = [2, 2, 0], sizes = [2, 2, 128], strides = [1, 1, 1]} : vector<4x4x128xf32> to vector<2x2x128xf32>
    %cst_15 = arith.constant dense<0xFF800000> : vector<2x128xf32>
    %21 = vector.multi_reduction <maximumf>, %20, %cst_15 [0] : vector<2x2x128xf32> to vector<2x128xf32>
    %cst_16 = arith.constant dense<0xFF800000> : vector<128xf32>
    %22 = vector.multi_reduction <maximumf>, %21, %cst_16 [0] : vector<2x128xf32> to vector<128xf32>
    %c0_17 = arith.constant 0 : index
    %c3 = arith.constant 3 : index
    %c0_18 = arith.constant 0 : index
    %23 = vector.load %arg2[%c0_17, %c3, %c0_18] : memref<1x4x128xf32, #tpu.memory_space<vmem>>, vector<1x1x128xf32>
    %24 = vector.shape_cast %23 : vector<1x1x128xf32> to vector<128xf32>
    %25 = vector.shape_cast %22 : vector<128xf32> to vector<1x1x128xf32>
    tpu.vector_store %arg2[%c0_17, %c3, %c0_18], %25 {strides = array<i32>} : memref<1x4x128xf32, #tpu.memory_space<vmem>>, vector<1x1x128xf32>,
    return
  }
  func.func @transform_0(%arg0: i32) -> (i32, i32, i32, i32) {
    %c0_i32 = arith.constant 0 : i32
    %c0_i32_0 = arith.constant 0 : i32
    %c0_i32_1 = arith.constant 0 : i32
    %c0_i32_2 = arith.constant 0 : i32
    return %arg0, %c0_i32, %c0_i32_0, %c0_i32_1 : i32, i32, i32, i32
  }
  func.func @transform_1(%arg0: i32) -> (i32, i32, i32) {
    %c0_i32 = arith.constant 0 : i32
    %c0_i32_0 = arith.constant 0 : i32
    %c0_i32_1 = arith.constant 0 : i32
    return %arg0, %c0_i32, %c0_i32_0 : i32, i32, i32
  }
}

module attributes {stable_mosaic.version = 11 : i64} {
  func.func @_adaptive_maxpool_kernel(%arg0: i32, %arg1: memref<1x4x4x128xf32, #tpu.memory_space<vmem>>, %arg2: memref<1x1x128xf32, #tpu.memory_space<vmem>>) attributes {dimension_semantics = [#tpu.dimension_semantics<parallel>], iteration_bounds = array<i64: 2>, scalar_prefetch = 0 : i64, scratch_operands = 0 : i64, tpu.core_type = #tpu.core_type<tc>, window_params = [{transform_indices = @transform_0, window_bounds = array<i64: 1, 4, 4, 128>}, {transform_indices = @transform_1, window_bounds = array<i64: 1, 1, 128>}]} {
    %c0 = arith.constant 0 : index
    %c0_0 = arith.constant 0 : index
    %c0_1 = arith.constant 0 : index
    %c0_2 = arith.constant 0 : index
    %0 = vector.load %arg1[%c0, %c0_0, %c0_1, %c0_2] : memref<1x4x4x128xf32, #tpu.memory_space<vmem>>, vector<1x4x4x128xf32>
    %1 = vector.shape_cast %0 : vector<1x4x4x128xf32> to vector<4x4x128xf32>
    %cst = arith.constant dense<0xFF800000> : vector<4x128xf32>
    %2 = vector.multi_reduction <maximumf>, %1, %cst [0] : vector<4x4x128xf32> to vector<4x128xf32>
    %cst_3 = arith.constant dense<0xFF800000> : vector<128xf32>
    %3 = vector.multi_reduction <maximumf>, %2, %cst_3 [0] : vector<4x128xf32> to vector<128xf32>
    %c0_4 = arith.constant 0 : index
    %c0_5 = arith.constant 0 : index
    %c0_6 = arith.constant 0 : index
    %4 = vector.load %arg2[%c0_4, %c0_5, %c0_6] : memref<1x1x128xf32, #tpu.memory_space<vmem>>, vector<1x1x128xf32>
    %5 = vector.shape_cast %4 : vector<1x1x128xf32> to vector<128xf32>
    %6 = vector.shape_cast %3 : vector<128xf32> to vector<1x1x128xf32>
    tpu.vector_store %arg2[%c0_4, %c0_5, %c0_6], %6 {strides = array<i32>} : memref<1x1x128xf32, #tpu.memory_space<vmem>>, vector<1x1x128xf32>,
    return
  }
  func.func @transform_0(%arg0: i32) -> (i32, i32, i32, i32) {
    %c0_i32 = arith.constant 0 : i32
    %c0_i32_0 = arith.constant 0 : i32
    %c0_i32_1 = arith.constant 0 : i32
    %c0_i32_2 = arith.constant 0 : i32
    return %arg0, %c0_i32, %c0_i32_0, %c0_i32_1 : i32, i32, i32, i32
  }
  func.func @transform_1(%arg0: i32) -> (i32, i32, i32) {
    %c0_i32 = arith.constant 0 : i32
    %c0_i32_0 = arith.constant 0 : i32
    %c0_i32_1 = arith.constant 0 : i32
    return %arg0, %c0_i32, %c0_i32_0 : i32, i32, i32
  }
}

</mosaic_0001>

<llo_original>
// kernel: deit_backbone_forward.59
$region0: #{deit_backbone_forward.59}
  #allocation0 [shape = 'u32[]', space=smem, size = 0x4, offset = 0x4, fixed_abs, tag = 'smem constant byte address 0x4 - core index']
  #allocation1 [shape = 'u32[72,128]{1,0:T(1,128)}', space=vmem, size = 0x9000, scoped, tag = 'internal scratch']
  %s0 = inlined_call_operand.vmem [shape: f32[2,17,128], index: 0, kind: input, shape index: {}]
  %s1 = inlined_call_operand.vmem [shape: f32[1,128], index: 1, kind: input, shape index: {}]
  %s2 = inlined_call_operand.vmem [shape: f32[1,128], index: 2, kind: input, shape index: {}]
  %s3 = inlined_call_operand.vmem [shape: bf16[128,384], index: 3, kind: input, shape index: {}]
  %s4 = inlined_call_operand.vmem [shape: f32[1,384], index: 4, kind: input, shape index: {}]
  %s5 = inlined_call_operand.vmem [shape: f32[2,17,384], index: 5, kind: output, shape index: {}]
  %s6 = sld [smem:[#allocation0]]
  $region53: #{deit_backbone_forward.59} parent=0
    _
  %s8 = ssub.s32 1, %s6
  %s9 = scalar_select 0, %s8, %s6
  loop: start=0, step=1, limit=4
  $region2: #{deit_backbone_forward.59} parent=0 // loop_pre_header
    _
  $region3: #{deit_backbone_forward.59} parent=0 // loop_header
    %s11 = sphi 0, %s15
    %p12 = scmp.ge.s32.totalorder %s11, 4
    %s21 = sphi 0, %s23
    %s24 = sphi 0, %s21
    %s25 = sphi 0, %s24
    %s41 = sphi 0, %s25
    %s45 = sphi 0, %s45
    %s47 = sphi 0, %s45
    %s48 = sphi 0, %s47
    %s62 = sphi 0, %s48
    %s66 = sphi 0, %s66
    %s68 = sphi 0, %s66
    %s69 = sphi 0, %s68
    %s83 = sphi 0, %s69
    %s87 = sphi 0, %s87
    %s89 = sphi 0, %s87
    %s90 = sphi 0, %s89
    %s104 = sphi 0, %s90
    %s108 = sphi 0, %s108
    %s110 = sphi 0, %s108
    %s111 = sphi 0, %s110
    %s125 = sphi 0, %s111
    %s131 = sphi 0, %s133
    %s134 = sphi 0, %s131
    %s135 = sphi 0, %s134
    %s151 = sphi 0, %s135
  $region4: #{deit_backbone_forward.59} parent=0 // loop_header_branch
    %14 = sbr.rel (%p12) target = $region8
  $region5: #{deit_backbone_forward.59} parent=0 // loop_body
    %s16 = ssub.s32 %s11, 1
    %s17 = ssub.s32 %s11, 2
    %s18 = sadd.s32 %s11, 1
    %s19 = ssub.s32 %s11, %s18
    %p20 = scmp.eq.s32.totalorder %s19, 0
    %s22 = sadd.s32 %s21, 1
    %s23 = scalar_select %p20, %s21, %s22
    %p26 = pneg %p20
    %p27 = scmp.eq.s32.totalorder %s11, 1
    %p28 = por %p26, %p27
    %p29 = scmp.ne.s32.totalorder %s21, %s24
    %p30 = scmp.eq.s32.totalorder %s11, 0
    %p31 = por %p29, %p30
    %p32 = scmp.ne.s32.totalorder %s21, %s24
    %p33 = scmp.eq.s32.totalorder %s16, 1
    %p34 = por %p32, %p33
    %p35 = scmp.ne.s32.totalorder %s24, %s25
    %p36 = scmp.eq.s32.totalorder %s16, 0
    %p37 = por %p35, %p36
    %p38 = scmp.ne.s32.totalorder %s24, %s25
    %p39 = scmp.eq.s32.totalorder %s17, 1
    %p40 = por %p38, %p39
    %p42 = scmp.ne.s32.totalorder %s25, %s41
    %p43 = scmp.eq.s32.totalorder %s17, 0
    %p44 = por %p42, %p43
    %s46 = sadd.s32 %s45, 1
    %p49 = scmp.eq.s32.totalorder %s11, 1
    %p50 = scmp.ne.s32.totalorder %s45, %s47
    %p51 = scmp.eq.s32.totalorder %s11, 0
    %p52 = por %p50, %p51
    %p53 = scmp.ne.s32.totalorder %s45, %s47
    %p54 = scmp.eq.s32.totalorder %s16, 1
    %p55 = por %p53, %p54
    %p56 = scmp.ne.s32.totalorder %s47, %s48
    %p57 = scmp.eq.s32.totalorder %s16, 0
    %p58 = por %p56, %p57
    %p59 = scmp.ne.s32.totalorder %s47, %s48
    %p60 = scmp.eq.s32.totalorder %s17, 1
    %p61 = por %p59, %p60
    %p63 = scmp.ne.s32.totalorder %s48, %s62
    %p64 = scmp.eq.s32.totalorder %s17, 0
    %p65 = por %p63, %p64
    %s67 = sadd.s32 %s66, 1
    %p70 = scmp.eq.s32.totalorder %s11, 1
    %p71 = scmp.ne.s32.totalorder %s66, %s68
    %p72 = scmp.eq.s32.totalorder %s11, 0
    %p73 = por %p71, %p72
    %p74 = scmp.ne.s32.totalorder %s66, %s68
    %p75 = scmp.eq.s32.totalorder %s16, 1
    %p76 = por %p74, %p75
    %p77 = scmp.ne.s32.totalorder %s68, %s69
    %p78 = scmp.eq.s32.totalorder %s16, 0
    %p79 = por %p77, %p78
    %p80 = scmp.ne.s32.totalorder %s68, %s69
    %p81 = scmp.eq.s32.totalorder %s17, 1
    %p82 = por %p80, %p81
    %p84 = scmp.ne.s32.totalorder %s69, %s83
    %p85 = scmp.eq.s32.totalorder %s17, 0
    %p86 = por %p84, %p85
    %s88 = sadd.s32 %s87, 1
    %p91 = scmp.eq.s32.totalorder %s11, 1
    %p92 = scmp.ne.s32.totalorder %s87, %s89
    %p93 = scmp.eq.s32.totalorder %s11, 0
    %p94 = por %p92, %p93
    %p95 = scmp.ne.s32.totalorder %s87, %s89
    %p96 = scmp.eq.s32.totalorder %s16, 1
    %p97 = por %p95, %p96
    %p98 = scmp.ne.s32.totalorder %s89, %s90
    %p99 = scmp.eq.s32.totalorder %s16, 0
    %p100 = por %p98, %p99
    %p101 = scmp.ne.s32.totalorder %s89, %s90
    %p102 = scmp.eq.s32.totalorder %s17, 1
    %p103 = por %p101, %p102
    %p105 = scmp.ne.s32.totalorder %s90, %s104
    %p106 = scmp.eq.s32.totalorder %s17, 0
    %p107 = por %p105, %p106
    %s109 = sadd.s32 %s108, 1
    %p112 = scmp.eq.s32.totalorder %s11, 1
    %p113 = scmp.ne.s32.totalorder %s108, %s110
    %p114 = scmp.eq.s32.totalorder %s11, 0
    %p115 = por %p113, %p114
    %p116 = scmp.ne.s32.totalorder %s108, %s110
    %p117 = scmp.eq.s32.totalorder %s16, 1
    %p118 = por %p116, %p117
    %p119 = scmp.ne.s32.totalorder %s110, %s111
    %p120 = scmp.eq.s32.totalorder %s16, 0
    %p121 = por %p119, %p120
    %p122 = scmp.ne.s32.totalorder %s110, %s111
    %p123 = scmp.eq.s32.totalorder %s17, 1
    %p124 = por %p122, %p123
    %p126 = scmp.ne.s32.totalorder %s111, %s125
    %p127 = scmp.eq.s32.totalorder %s17, 0
    %p128 = por %p126, %p127
    %s129 = ssub.s32 %s11, %s18
    %p130 = scmp.eq.s32.totalorder %s129, 0
    %s132 = sadd.s32 %s131, 1
    %s133 = scalar_select %p130, %s131, %s132
    %p136 = pneg %p130
    %p137 = scmp.eq.s32.totalorder %s11, 1
    %p138 = por %p136, %p137
    %p139 = scmp.ne.s32.totalorder %s131, %s134
    %p140 = scmp.eq.s32.totalorder %s11, 0
    %p141 = por %p139, %p140
    %p142 = scmp.ne.s32.totalorder %s131, %s134
    %p143 = scmp.eq.s32.totalorder %s16, 1
    %p144 = por %p142, %p143
    %p145 = scmp.ne.s32.totalorder %s134, %s135
    %p146 = scmp.eq.s32.totalorder %s16, 0
    %p147 = por %p145, %p146
    %p148 = scmp.ne.s32.totalorder %s134, %s135
    %p149 = scmp.eq.s32.totalorder %s17, 1
    %p150 = por %p148, %p149
    %p152 = scmp.ne.s32.totalorder %s135, %s151
    %p153 = scmp.eq.s32.totalorder %s17, 0
    %p154 = por %p152, %p153
    %p155 = scmp.le.s32.totalorder 1, %s11
    %p156 = scmp.lt.s32.totalorder %s11, 3
    %p157 = pnand %p155, %p156
    %p158 = pneg %p157
    // Predicated region
    $region9: #{deit_backbone_forward.59} parent=5 // pred_check
      _
    $region10: #{deit_backbone_forward.59} parent=5 // pred_check_branch
      %160 = sbr.rel (%p157) target = $region12
    $region11: #{deit_backbone_forward.59} parent=5 // pred_region
      %s161 = ssub.s32 %s11, 1
      // Predicated region
      $region13: #{deit_backbone_forward.59} parent=11 // pred_check
        %p162 = pneg %p58
      $region14: #{deit_backbone_forward.59} parent=11 // pred_check_branch
        %164 = sbr.rel (%p162) target = $region16
      $region15: #{deit_backbone_forward.59} parent=11 // pred_region
        _
      $region16: #{deit_backbone_forward.59} parent=11 // pred_fallthru
        _
      // Predicated region
      $region17: #{deit_backbone_forward.59} parent=11 // pred_check
        %p165 = pneg %p79
      $region18: #{deit_backbone_forward.59} parent=11 // pred_check_branch
        %167 = sbr.rel (%p165) target = $region20
      $region19: #{deit_backbone_forward.59} parent=11 // pred_region
        _
      $region20: #{deit_backbone_forward.59} parent=11 // pred_fallthru
        _
      // Predicated region
      $region21: #{deit_backbone_forward.59} parent=11 // pred_check
        %p168 = pneg %p100
      $region22: #{deit_backbone_forward.59} parent=11 // pred_check_branch
        %170 = sbr.rel (%p168) target = $region24
      $region23: #{deit_backbone_forward.59} parent=11 // pred_region
        _
      $region24: #{deit_backbone_forward.59} parent=11 // pred_fallthru
        _
      // Predicated region
      $region25: #{deit_backbone_forward.59} parent=11 // pred_check
        %p171 = pneg %p121
      $region26: #{deit_backbone_forward.59} parent=11 // pred_check_branch
        %173 = sbr.rel (%p171) target = $region28
      $region27: #{deit_backbone_forward.59} parent=11 // pred_region
        _
      $region28: #{deit_backbone_forward.59} parent=11 // pred_fallthru
        _
    $region12: #{deit_backbone_forward.59} parent=5 // pred_fallthru
      _
    %p174 = scmp.lt.s32.totalorder %s11, 2
    // Predicated region
    $region29: #{deit_backbone_forward.59} parent=5 // pred_check
      %p175 = pneg %p174
    $region30: #{deit_backbone_forward.59} parent=5 // pred_check_branch
      %177 = sbr.rel (%p175) target = $region32
    $region31: #{deit_backbone_forward.59} parent=5 // pred_region
      // Predicated region
      $region33: #{deit_backbone_forward.59} parent=31 // pred_check
        %p178 = pneg %p31
      $region34: #{deit_backbone_forward.59} parent=31 // pred_check_branch
        %180 = sbr.rel (%p178) target = $region36
      $region35: #{deit_backbone_forward.59} parent=31 // pred_region
        %p181 = scmp.lt.s32.totalorder %s11, 1
        %s182 = scalar_select %p181, %s11, 1
        %s183 = smul.addr %s182, 3
        %s184 = smul.addr %s183, 8
        %s185 = scalar_lea.vmem %s0, %s184
      $region36: #{deit_backbone_forward.59} parent=31 // pred_fallthru
        _
    $region32: #{deit_backbone_forward.59} parent=5 // pred_fallthru
      _
    %p186 = scmp.le.s32.totalorder 1, %s11
    %p187 = scmp.lt.s32.totalorder %s11, 3
    %p188 = pnand %p186, %p187
    %p189 = pneg %p188
    // Predicated region
    $region37: #{deit_backbone_forward.59} parent=5 // pred_check
      _
    $region38: #{deit_backbone_forward.59} parent=5 // pred_check_branch
      %191 = sbr.rel (%p188) target = $region40
    $region39: #{deit_backbone_forward.59} parent=5 // pred_region
      %s192 = ssub.s32 %s11, 1
      %p193 = scmp.lt.s32.totalorder %s16, 1
      %s194 = scalar_select %p193, %s16, 1
      %s195 = smul.addr %s194, 3
      %s196 = smul.addr %s195, 8
      %s197 = scalar_lea.vmem %s0, %s196
      %p198 = pneg %p37
      %p199 = pneg %p34
      %p200 = pneg %p58
      %p201 = pneg %p55
      %p202 = pneg %p79
      %p203 = pneg %p76
      %p204 = pneg %p100
      %p205 = pneg %p97
      %p206 = pneg %p121
      %p207 = pneg %p118
      %p208 = pneg %p147
      %p209 = pneg %p144
      %p210 = scmp.lt.s32.totalorder %s16, 1
      %s211 = scalar_select %p210, %s16, 1
      %s212 = smul.addr %s211, 9
      %s213 = smul.addr %s212, 8
      %s214 = scalar_lea.vmem %s5, %s213
      %p215 = scmp.lt.s32.totalorder %s16, 1
      %s216 = scalar_select %p215, %s16, 1
      %s217 = smul.addr %s216, 3
      %s218 = smul.addr %s217, 8
      %s219 = scalar_lea.vmem %s0, %s218
      %p220 = scmp.lt.s32.totalorder %s16, 1
      %s221 = scalar_select %p220, %s16, 1
      %s222 = smul.addr %s221, 9
      %s223 = smul.addr %s222, 8
      %s224 = scalar_lea.vmem %s5, %s223
      %v225 = vld [vmem:[%s219] sm:$0xff]
      %v226 = vld [vmem:[%s219 + $0x8] sm:$0xff]
      %v227 = vld [vmem:[%s219 + $0x10] sm:$0x1]
      %v228 = vld [vmem:[%s1] sm:$0x1]
      %v229 = vld [vmem:[%s2] sm:$0x1]
      %230 = vadd.xlane.f32.xlu0 %v225
      %v231 = vpop.xlane.xlu0 %230
      %232 = vadd.xlane.f32.xlu0 %v226
      %v233 = vpop.xlane.xlu0 %232
      %vm234 = vcmask 1040384
      %v235 = vsel %vm234, %v227, 0.0
      %236 = vadd.xlane.f32.xlu0 %v235
      %v237 = vpop.xlane.xlu0 %236
      %v238 = vrcp.pop 128.0
      %v239 = vmul.f32 128.0, %v238
      %v240 = vsub.f32 1.0, %v239
      %v241 = vmul.f32 %v238, %v240
      %v242 = vadd.f32 %v238, %v241
      %vm243 = vweird.f32 %v238
      %v244 = vsel %vm243, %v238, %v242
      %v245 = vmul.f32 %v231, %v244
      %v246 = vmul.f32 %v233, %v244
      %v247 = vmul.f32 %v237, %v244
      %v248 = vsub.f32 %v225, %v245
      %v249 = vsub.f32 %v226, %v246
      %v250 = vsub.f32 %v227, %v247
      %v251 = vmul.f32 %v248, %v248
      %v252 = vmul.f32 %v249, %v249
      %v253 = vmul.f32 %v250, %v250
      %254 = vadd.xlane.f32.xlu0 %v251
      %v255 = vpop.xlane.xlu0 %254
      %256 = vadd.xlane.f32.xlu0 %v252
      %v257 = vpop.xlane.xlu0 %256
      %v258 = vsel %vm234, %v253, 0.0
      %259 = vadd.xlane.f32.xlu0 %v258
      %v260 = vpop.xlane.xlu0 %259
      %v261 = vmul.f32 %v255, %v244
      %v262 = vmul.f32 %v257, %v244
      %v263 = vmul.f32 %v260, %v244
      %v264 = vadd.f32 %v261, 1e-06
      %v265 = vadd.f32 %v262, 1e-06
      %v266 = vadd.f32 %v263, 1e-06
      %v267 = vrsqrt.pop %v264
      %v268 = vmul.f32 %v267, %v264
      %v269 = vmul.f32 %v268, %v267
      %v270 = vmul.f32 0.5, %v269
      %v271 = vsub.f32 1.5, %v270
      %v272 = vmul.f32 %v267, %v271
      %vm273 = vweird.f32 %v264
      %vm274 = vweird.f32 %v267
      %vm275 = vmor %vm273, %vm274
      %v276 = vsel %vm275, %v267, %v272
      %v277 = vrsqrt.pop %v265
      %v278 = vmul.f32 %v277, %v265
      %v279 = vmul.f32 %v278, %v277
      %v280 = vmul.f32 0.5, %v279
      %v281 = vsub.f32 1.5, %v280
      %v282 = vmul.f32 %v277, %v281
      %vm283 = vweird.f32 %v265
      %vm284 = vweird.f32 %v277
      %vm285 = vmor %vm283, %vm284
      %v286 = vsel %vm285, %v277, %v282
      %v287 = vrsqrt.pop %v266
      %v288 = vmul.f32 %v287, %v266
      %v289 = vmul.f32 %v288, %v287
      %v290 = vmul.f32 0.5, %v289
      %v291 = vsub.f32 1.5, %v290
      %v292 = vmul.f32 %v287, %v291
      %vm293 = vweird.f32 %v266
      %vm294 = vweird.f32 %v287
      %vm295 = vmor %vm293, %vm294
      %v296 = vsel %vm295, %v287, %v292
      %v297 = vmul.f32 %v248, %v276
      %v298 = vmul.f32 %v249, %v286
      %v299 = vmul.f32 %v250, %v296
      %v301 = vperm.slane %v228, 0
      %v303 = vmul.f32 %v297, %v301
      %v304 = vmul.f32 %v298, %v301
      %v305 = vmul.f32 %v299, %v301
      %v307 = vperm.slane %v229, 0
      %v309 = vadd.f32 %v303, %v307
      %v310 = vadd.f32 %v304, %v307
      %v311 = vadd.f32 %v305, %v307
      %v312 = vpack.c.bf16 %v310, %v309
      %v313 = vpack.c.bf16 %v311, %v311
      %v314 = vld [vmem:[%s3] sm:$0xff]
      %v315 = vld [vmem:[%s3 + $0x8] sm:$0xf]
      %v316 = vld [vmem:[%s3 + $0xc] sm:$0xff]
      %v317 = vld [vmem:[%s3 + $0x14] sm:$0xf]
      %v318 = vld [vmem:[%s3 + $0x18] sm:$0xff]
      %v319 = vld [vmem:[%s3 + $0x20] sm:$0xf]
      %v320 = vld [vmem:[%s3 + $0x24] sm:$0xff]
      %v321 = vld [vmem:[%s3 + $0x2c] sm:$0xf]
      %v322 = vld [vmem:[%s3 + $0x30] sm:$0xff]
      %v323 = vld [vmem:[%s3 + $0x38] sm:$0xf]
      %v324 = vld [vmem:[%s3 + $0x3c] sm:$0xff]
      %v325 = vld [vmem:[%s3 + $0x44] sm:$0xf]
      %v326 = vld [vmem:[%s3 + $0x48] sm:$0xff]
      %v327 = vld [vmem:[%s3 + $0x50] sm:$0xf]
      %v328 = vld [vmem:[%s3 + $0x54] sm:$0xff]
      %v329 = vld [vmem:[%s3 + $0x5c] sm:$0xf]
      %v330 = vld [vmem:[%s3 + $0x60] sm:$0xff]
      %v331 = vld [vmem:[%s3 + $0x68] sm:$0xf]
      %v332 = vld [vmem:[%s3 + $0x6c] sm:$0xff]
      %v333 = vld [vmem:[%s3 + $0x74] sm:$0xf]
      %v334 = vld [vmem:[%s3 + $0x78] sm:$0xff]
      %v335 = vld [vmem:[%s3 + $0x80] sm:$0xf]
      %v336 = vld [vmem:[%s3 + $0x84] sm:$0xff]
      %v337 = vld [vmem:[%s3 + $0x8c] sm:$0xf]
      %v338 = vld [vmem:[%s3 + $0x90] sm:$0xff]
      %v339 = vld [vmem:[%s3 + $0x98] sm:$0xf]
      %v340 = vld [vmem:[%s3 + $0x9c] sm:$0xff]
      %v341 = vld [vmem:[%s3 + $0xa4] sm:$0xf]
      %v342 = vld [vmem:[%s3 + $0xa8] sm:$0xff]
      %v343 = vld [vmem:[%s3 + $0xb0] sm:$0xf]
      %v344 = vld [vmem:[%s3 + $0xb4] sm:$0xff]
      %v345 = vld [vmem:[%s3 + $0xbc] sm:$0xf]
      %v346 = vld [vmem:[%s4] sm:$0x7]
      %v348 = vperm.slane %v346, 0
      %v349 = vperm.slane %v346, 1
      %v350 = vperm.slane %v346, 2
      %v386 = vunpack.c.l.b16 %v314
      %v387 = vunpack.c.h.b16 %v314
      %v388 = vunpack.c.l.b16 %v315
      %v389 = vunpack.c.l.b16 %v316
      %v390 = vunpack.c.h.b16 %v316
      %v391 = vunpack.c.l.b16 %v317
      %v392 = vunpack.c.l.b16 %v318
      %v393 = vunpack.c.h.b16 %v318
      %v394 = vunpack.c.l.b16 %v319
      %v395 = vunpack.c.l.b16 %v320
      %v396 = vunpack.c.h.b16 %v320
      %v397 = vunpack.c.l.b16 %v321
      %v398 = vunpack.c.l.b16 %v322
      %v399 = vunpack.c.h.b16 %v322
      %v400 = vunpack.c.l.b16 %v323
      %v401 = vunpack.c.l.b16 %v324
      %v402 = vunpack.c.h.b16 %v324
      %v403 = vunpack.c.l.b16 %v325
      %v404 = vunpack.c.l.b16 %v326
      %v405 = vunpack.c.h.b16 %v326
      %v406 = vunpack.c.l.b16 %v327
      %v407 = vunpack.c.l.b16 %v328
      %v408 = vunpack.c.h.b16 %v328
      %v409 = vunpack.c.l.b16 %v329
      %v410 = vunpack.c.l.b16 %v330
      %v411 = vunpack.c.h.b16 %v330
      %v412 = vunpack.c.l.b16 %v331
      %v413 = vunpack.c.l.b16 %v332
      %v414 = vunpack.c.h.b16 %v332
      %v415 = vunpack.c.l.b16 %v333
      %v416 = vunpack.c.l.b16 %v334
      %v417 = vunpack.c.h.b16 %v334
      %v418 = vunpack.c.l.b16 %v335
      %v419 = vunpack.c.l.b16 %v336
      %v420 = vunpack.c.h.b16 %v336
      %v421 = vunpack.c.l.b16 %v337
      %v422 = vunpack.c.l.b16 %v338
      %v423 = vunpack.c.h.b16 %v338
      %v424 = vunpack.c.l.b16 %v339
      %v425 = vunpack.c.l.b16 %v340
      %v426 = vunpack.c.h.b16 %v340
      %v427 = vunpack.c.l.b16 %v341
      %v428 = vunpack.c.l.b16 %v342
      %v429 = vunpack.c.h.b16 %v342
      %v430 = vunpack.c.l.b16 %v343
      %v431 = vunpack.c.l.b16 %v344
      %v432 = vunpack.c.h.b16 %v344
      %v433 = vunpack.c.l.b16 %v345
      %v434 = vpack.c.b16 %v389, %v386
      %v435 = vpack.c.b16 %v390, %v387
      %v436 = vpack.c.b16 %v391, %v388
      %v437 = vpack.c.b16 %v395, %v392
      %v438 = vpack.c.b16 %v396, %v393
      %v439 = vpack.c.b16 %v397, %v394
      %v440 = vpack.c.b16 %v401, %v398
      %v441 = vpack.c.b16 %v402, %v399
      %v442 = vpack.c.b16 %v403, %v400
      %v443 = vpack.c.b16 %v407, %v404
      %v444 = vpack.c.b16 %v408, %v405
      %v445 = vpack.c.b16 %v409, %v406
      %v446 = vpack.c.b16 %v413, %v410
      %v447 = vpack.c.b16 %v414, %v411
      %v448 = vpack.c.b16 %v415, %v412
      %v449 = vpack.c.b16 %v419, %v416
      %v450 = vpack.c.b16 %v420, %v417
      %v451 = vpack.c.b16 %v421, %v418
      %v452 = vpack.c.b16 %v425, %v422
      %v453 = vpack.c.b16 %v426, %v423
      %v454 = vpack.c.b16 %v427, %v424
      %v455 = vpack.c.b16 %v431, %v428
      %v456 = vpack.c.b16 %v432, %v429
      %v457 = vpack.c.b16 %v433, %v430
      %482 = vmatpush.bf16.msra.mxu0 %v455
      %483 = vmatpush.bf16.msra.mxu0 %v452
      %484 = vmatpush.bf16.msra.mxu0 %v449
      %485 = vmatpush.bf16.msra.mxu0 %v446
      %486 = vmatpush.bf16.msra.mxu0 %v443
      %487 = vmatpush.bf16.msra.mxu0 %v440
      %488 = vmatpush.bf16.msra.mxu0 %v437
      %489 = vmatpush.bf16.msra.mxu0 %v434
      %490 = vmatmul.bf16.gmra.mxu0 %v312
      %v491 = vpop.f32.mrf.mxu0
      %v492 = vadd.f32 %v348, %v491
      %v493 = vpop.f32.mrf.mxu0
      %v494 = vadd.f32 %v348, %v493
      %495 = vmatmul.bf16.gmra.mxu0 %v313
      %v496 = vpop.f32.mrf.mxu0
      %v497 = vadd.f32 %v348, %v496
      %v498 = vpop.f32.mrf.mxu0
      %499 = vdwg.mxu0
      %500 = vmatpush.bf16.msra.mxu0 %v456
      %501 = vmatpush.bf16.msra.mxu0 %v453
      %502 = vmatpush.bf16.msra.mxu0 %v450
      %503 = vmatpush.bf16.msra.mxu0 %v447
      %504 = vmatpush.bf16.msra.mxu0 %v444
      %505 = vmatpush.bf16.msra.mxu0 %v441
      %506 = vmatpush.bf16.msra.mxu0 %v438
      %507 = vmatpush.bf16.msra.mxu0 %v435
      %508 = vmatmul.bf16.gmra.mxu0 %v312
      %v509 = vpop.f32.mrf.mxu0
      %v510 = vadd.f32 %v349, %v509
      %v511 = vpop.f32.mrf.mxu0
      %v512 = vadd.f32 %v349, %v511
      %513 = vmatmul.bf16.gmra.mxu0 %v313
      %v514 = vpop.f32.mrf.mxu0
      %v515 = vadd.f32 %v349, %v514
      %v516 = vpop.f32.mrf.mxu0
      %517 = vdwg.mxu0
      %518 = vmatpush.bf16.msra.mxu0 %v457
      %519 = vmatpush.bf16.msra.mxu0 %v454
      %520 = vmatpush.bf16.msra.mxu0 %v451
      %521 = vmatpush.bf16.msra.mxu0 %v448
      %522 = vmatpush.bf16.msra.mxu0 %v445
      %523 = vmatpush.bf16.msra.mxu0 %v442
      %524 = vmatpush.bf16.msra.mxu0 %v439
      %525 = vmatpush.bf16.msra.mxu0 %v436
      %526 = vmatmul.bf16.gmra.mxu0 %v312
      %v527 = vpop.f32.mrf.mxu0
      %v528 = vadd.f32 %v350, %v527
      %v529 = vpop.f32.mrf.mxu0
      %v530 = vadd.f32 %v350, %v529
      %531 = vmatmul.bf16.gmra.mxu0 %v313
      %v532 = vpop.f32.mrf.mxu0
      %v533 = vadd.f32 %v350, %v532
      %v534 = vpop.f32.mrf.mxu0
      %535 = vdwg.mxu0
      %536 = vst [vmem:[%s224] sm:$0xff] %v492
      %537 = vst [vmem:[%s224 + $0x8] sm:$0xff] %v510
      %538 = vst [vmem:[%s224 + $0x10] sm:$0xff] %v528
      %539 = vst [vmem:[%s224 + $0x18] sm:$0xff] %v494
      %540 = vst [vmem:[%s224 + $0x20] sm:$0xff] %v512
      %541 = vst [vmem:[%s224 + $0x28] sm:$0xff] %v530
      %542 = vst [vmem:[%s224 + $0x30] sm:$0x1] %v497
      %543 = vst [vmem:[%s224 + $0x38] sm:$0x1] %v515
      %544 = vst [vmem:[%s224 + $0x40] sm:$0x1] %v533
      %p545 = scmp.lt.s32.totalorder %s16, 1
      %s546 = scalar_select %p545, %s16, 1
      %s547 = smul.addr %s546, 9
      %s548 = smul.addr %s547, 8
      %s549 = scalar_lea.vmem %s5, %s548
      // Predicated region
      $region41: #{deit_backbone_forward.59} parent=39 // pred_check
        %p550 = pneg %p144
      $region42: #{deit_backbone_forward.59} parent=39 // pred_check_branch
        %552 = sbr.rel (%p550) target = $region44
      $region43: #{deit_backbone_forward.59} parent=39 // pred_region
        _
      $region44: #{deit_backbone_forward.59} parent=39 // pred_fallthru
        _
    $region40: #{deit_backbone_forward.59} parent=5 // pred_fallthru
      _
    %p553 = scmp.le.s32.totalorder 2, %s11
    // Predicated region
    $region45: #{deit_backbone_forward.59} parent=5 // pred_check
      %p554 = pneg %p553
    $region46: #{deit_backbone_forward.59} parent=5 // pred_check_branch
      %556 = sbr.rel (%p554) target = $region48
    $region47: #{deit_backbone_forward.59} parent=5 // pred_region
      %s557 = ssub.s32 %s11, 2
      // Predicated region
      $region49: #{deit_backbone_forward.59} parent=47 // pred_check
        %p558 = pneg %p150
      $region50: #{deit_backbone_forward.59} parent=47 // pred_check_branch
        %560 = sbr.rel (%p558) target = $region52
      $region51: #{deit_backbone_forward.59} parent=47 // pred_region
        %p561 = scmp.lt.s32.totalorder %s17, 1
        %s562 = scalar_select %p561, %s17, 1
        %s563 = smul.addr %s562, 9
        %s564 = smul.addr %s563, 8
        %s565 = scalar_lea.vmem %s5, %s564
      $region52: #{deit_backbone_forward.59} parent=47 // pred_fallthru
        _
    $region48: #{deit_backbone_forward.59} parent=5 // pred_fallthru
      _
  $region6: #{deit_backbone_forward.59} parent=0 // loop_footer
    %s15 = sadd.s32 1, %s11
  $region7: #{deit_backbone_forward.59} parent=0 // loop_footer_branch
    %10 = sbr.rel target = $region3
  $region8: #{deit_backbone_forward.59} parent=0 // loop_exit
    _

// kernel: deit_backbone_forward.58
$region0: #{deit_backbone_forward.58}
  #allocation0 [shape = 'u32[]', space=smem, size = 0x4, offset = 0x4, fixed_abs, tag = 'smem constant byte address 0x4 - core index']
  #allocation1 [shape = 'u32[72,128]{1,0:T(1,128)}', space=vmem, size = 0x9000, scoped, tag = 'internal scratch']
  %s0 = inlined_call_operand.vmem [shape: f32[2,16,768], index: 0, kind: input, shape index: {}]
  %s1 = inlined_call_operand.vmem [shape: bf16[768,128], index: 1, kind: input, shape index: {}]
  %s2 = inlined_call_operand.vmem [shape: f32[1,128], index: 2, kind: input, shape index: {}]
  %s3 = inlined_call_operand.vmem [shape: f32[16,128], index: 3, kind: input, shape index: {}]
  %s4 = inlined_call_operand.vmem [shape: f32[2,16,128], index: 4, kind: output, shape index: {}]
  %s5 = sld [smem:[#allocation0]]
  $region49: #{deit_backbone_forward.58} parent=0
    _
  %s7 = ssub.s32 1, %s5
  %s8 = scalar_select 0, %s7, %s5
  loop: start=0, step=1, limit=4
  $region2: #{deit_backbone_forward.58} parent=0 // loop_pre_header
    _
  $region3: #{deit_backbone_forward.58} parent=0 // loop_header
    %s10 = sphi 0, %s14
    %p11 = scmp.ge.s32.totalorder %s10, 4
    %s20 = sphi 0, %s22
    %s23 = sphi 0, %s20
    %s24 = sphi 0, %s23
    %s40 = sphi 0, %s24
    %s44 = sphi 0, %s44
    %s46 = sphi 0, %s44
    %s47 = sphi 0, %s46
    %s61 = sphi 0, %s47
    %s65 = sphi 0, %s65
    %s67 = sphi 0, %s65
    %s68 = sphi 0, %s67
    %s82 = sphi 0, %s68
    %s86 = sphi 0, %s86
    %s88 = sphi 0, %s86
    %s89 = sphi 0, %s88
    %s103 = sphi 0, %s89
    %s109 = sphi 0, %s111
    %s112 = sphi 0, %s109
    %s113 = sphi 0, %s112
    %s129 = sphi 0, %s113
  $region4: #{deit_backbone_forward.58} parent=0 // loop_header_branch
    %13 = sbr.rel (%p11) target = $region8
  $region5: #{deit_backbone_forward.58} parent=0 // loop_body
    %s15 = ssub.s32 %s10, 1
    %s16 = ssub.s32 %s10, 2
    %s17 = sadd.s32 %s10, 1
    %s18 = ssub.s32 %s10, %s17
    %p19 = scmp.eq.s32.totalorder %s18, 0
    %s21 = sadd.s32 %s20, 1
    %s22 = scalar_select %p19, %s20, %s21
    %p25 = pneg %p19
    %p26 = scmp.eq.s32.totalorder %s10, 1
    %p27 = por %p25, %p26
    %p28 = scmp.ne.s32.totalorder %s20, %s23
    %p29 = scmp.eq.s32.totalorder %s10, 0
    %p30 = por %p28, %p29
    %p31 = scmp.ne.s32.totalorder %s20, %s23
    %p32 = scmp.eq.s32.totalorder %s15, 1
    %p33 = por %p31, %p32
    %p34 = scmp.ne.s32.totalorder %s23, %s24
    %p35 = scmp.eq.s32.totalorder %s15, 0
    %p36 = por %p34, %p35
    %p37 = scmp.ne.s32.totalorder %s23, %s24
    %p38 = scmp.eq.s32.totalorder %s16, 1
    %p39 = por %p37, %p38
    %p41 = scmp.ne.s32.totalorder %s24, %s40
    %p42 = scmp.eq.s32.totalorder %s16, 0
    %p43 = por %p41, %p42
    %s45 = sadd.s32 %s44, 1
    %p48 = scmp.eq.s32.totalorder %s10, 1
    %p49 = scmp.ne.s32.totalorder %s44, %s46
    %p50 = scmp.eq.s32.totalorder %s10, 0
    %p51 = por %p49, %p50
    %p52 = scmp.ne.s32.totalorder %s44, %s46
    %p53 = scmp.eq.s32.totalorder %s15, 1
    %p54 = por %p52, %p53
    %p55 = scmp.ne.s32.totalorder %s46, %s47
    %p56 = scmp.eq.s32.totalorder %s15, 0
    %p57 = por %p55, %p56
    %p58 = scmp.ne.s32.totalorder %s46, %s47
    %p59 = scmp.eq.s32.totalorder %s16, 1
    %p60 = por %p58, %p59
    %p62 = scmp.ne.s32.totalorder %s47, %s61
    %p63 = scmp.eq.s32.totalorder %s16, 0
    %p64 = por %p62, %p63
    %s66 = sadd.s32 %s65, 1
    %p69 = scmp.eq.s32.totalorder %s10, 1
    %p70 = scmp.ne.s32.totalorder %s65, %s67
    %p71 = scmp.eq.s32.totalorder %s10, 0
    %p72 = por %p70, %p71
    %p73 = scmp.ne.s32.totalorder %s65, %s67
    %p74 = scmp.eq.s32.totalorder %s15, 1
    %p75 = por %p73, %p74
    %p76 = scmp.ne.s32.totalorder %s67, %s68
    %p77 = scmp.eq.s32.totalorder %s15, 0
    %p78 = por %p76, %p77
    %p79 = scmp.ne.s32.totalorder %s67, %s68
    %p80 = scmp.eq.s32.totalorder %s16, 1
    %p81 = por %p79, %p80
    %p83 = scmp.ne.s32.totalorder %s68, %s82
    %p84 = scmp.eq.s32.totalorder %s16, 0
    %p85 = por %p83, %p84
    %s87 = sadd.s32 %s86, 1
    %p90 = scmp.eq.s32.totalorder %s10, 1
    %p91 = scmp.ne.s32.totalorder %s86, %s88
    %p92 = scmp.eq.s32.totalorder %s10, 0
    %p93 = por %p91, %p92
    %p94 = scmp.ne.s32.totalorder %s86, %s88
    %p95 = scmp.eq.s32.totalorder %s15, 1
    %p96 = por %p94, %p95
    %p97 = scmp.ne.s32.totalorder %s88, %s89
    %p98 = scmp.eq.s32.totalorder %s15, 0
    %p99 = por %p97, %p98
    %p100 = scmp.ne.s32.totalorder %s88, %s89
    %p101 = scmp.eq.s32.totalorder %s16, 1
    %p102 = por %p100, %p101
    %p104 = scmp.ne.s32.totalorder %s89, %s103
    %p105 = scmp.eq.s32.totalorder %s16, 0
    %p106 = por %p104, %p105
    %s107 = ssub.s32 %s10, %s17
    %p108 = scmp.eq.s32.totalorder %s107, 0
    %s110 = sadd.s32 %s109, 1
    %s111 = scalar_select %p108, %s109, %s110
    %p114 = pneg %p108
    %p115 = scmp.eq.s32.totalorder %s10, 1
    %p116 = por %p114, %p115
    %p117 = scmp.ne.s32.totalorder %s109, %s112
    %p118 = scmp.eq.s32.totalorder %s10, 0
    %p119 = por %p117, %p118
    %p120 = scmp.ne.s32.totalorder %s109, %s112
    %p121 = scmp.eq.s32.totalorder %s15, 1
    %p122 = por %p120, %p121
    %p123 = scmp.ne.s32.totalorder %s112, %s113
    %p124 = scmp.eq.s32.totalorder %s15, 0
    %p125 = por %p123, %p124
    %p126 = scmp.ne.s32.totalorder %s112, %s113
    %p127 = scmp.eq.s32.totalorder %s16, 1
    %p128 = por %p126, %p127
    %p130 = scmp.ne.s32.totalorder %s113, %s129
    %p131 = scmp.eq.s32.totalorder %s16, 0
    %p132 = por %p130, %p131
    %p133 = scmp.le.s32.totalorder 1, %s10
    %p134 = scmp.lt.s32.totalorder %s10, 3
    %p135 = pnand %p133, %p134
    %p136 = pneg %p135
    // Predicated region
    $region9: #{deit_backbone_forward.58} parent=5 // pred_check
      _
    $region10: #{deit_backbone_forward.58} parent=5 // pred_check_branch
      %138 = sbr.rel (%p135) target = $region12
    $region11: #{deit_backbone_forward.58} parent=5 // pred_region
      %s139 = ssub.s32 %s10, 1
      // Predicated region
      $region13: #{deit_backbone_forward.58} parent=11 // pred_check
        %p140 = pneg %p57
      $region14: #{deit_backbone_forward.58} parent=11 // pred_check_branch
        %142 = sbr.rel (%p140) target = $region16
      $region15: #{deit_backbone_forward.58} parent=11 // pred_region
        _
      $region16: #{deit_backbone_forward.58} parent=11 // pred_fallthru
        _
      // Predicated region
      $region17: #{deit_backbone_forward.58} parent=11 // pred_check
        %p143 = pneg %p78
      $region18: #{deit_backbone_forward.58} parent=11 // pred_check_branch
        %145 = sbr.rel (%p143) target = $region20
      $region19: #{deit_backbone_forward.58} parent=11 // pred_region
        _
      $region20: #{deit_backbone_forward.58} parent=11 // pred_fallthru
        _
      // Predicated region
      $region21: #{deit_backbone_forward.58} parent=11 // pred_check
        %p146 = pneg %p99
      $region22: #{deit_backbone_forward.58} parent=11 // pred_check_branch
        %148 = sbr.rel (%p146) target = $region24
      $region23: #{deit_backbone_forward.58} parent=11 // pred_region
        _
      $region24: #{deit_backbone_forward.58} parent=11 // pred_fallthru
        _
    $region12: #{deit_backbone_forward.58} parent=5 // pred_fallthru
      _
    %p149 = scmp.lt.s32.totalorder %s10, 2
    // Predicated region
    $region25: #{deit_backbone_forward.58} parent=5 // pred_check
      %p150 = pneg %p149
    $region26: #{deit_backbone_forward.58} parent=5 // pred_check_branch
      %152 = sbr.rel (%p150) target = $region28
    $region27: #{deit_backbone_forward.58} parent=5 // pred_region
      // Predicated region
      $region29: #{deit_backbone_forward.58} parent=27 // pred_check
        %p153 = pneg %p30
      $region30: #{deit_backbone_forward.58} parent=27 // pred_check_branch
        %155 = sbr.rel (%p153) target = $region32
      $region31: #{deit_backbone_forward.58} parent=27 // pred_region
        %p156 = scmp.lt.s32.totalorder %s10, 1
        %s157 = scalar_select %p156, %s10, 1
        %s158 = smul.addr %s157, 12
        %s159 = smul.addr %s158, 8
        %s160 = scalar_lea.vmem %s0, %s159
      $region32: #{deit_backbone_forward.58} parent=27 // pred_fallthru
        _
    $region28: #{deit_backbone_forward.58} parent=5 // pred_fallthru
      _
    %p161 = scmp.le.s32.totalorder 1, %s10
    %p162 = scmp.lt.s32.totalorder %s10, 3
    %p163 = pnand %p161, %p162
    %p164 = pneg %p163
    // Predicated region
    $region33: #{deit_backbone_forward.58} parent=5 // pred_check
      _
    $region34: #{deit_backbone_forward.58} parent=5 // pred_check_branch
      %166 = sbr.rel (%p163) target = $region36
    $region35: #{deit_backbone_forward.58} parent=5 // pred_region
      %s167 = ssub.s32 %s10, 1
      %p168 = scmp.lt.s32.totalorder %s15, 1
      %s169 = scalar_select %p168, %s15, 1
      %s170 = smul.addr %s169, 12
      %s171 = smul.addr %s170, 8
      %s172 = scalar_lea.vmem %s0, %s171
      %p173 = pneg %p36
      %p174 = pneg %p33
      %p175 = pneg %p57
      %p176 = pneg %p54
      %p177 = pneg %p78
      %p178 = pneg %p75
      %p179 = pneg %p99
      %p180 = pneg %p96
      %p181 = pneg %p125
      %p182 = pneg %p122
      %p183 = scmp.lt.s32.totalorder %s15, 1
      %s184 = scalar_select %p183, %s15, 1
      %s185 = smul.addr %s184, 2
      %s186 = smul.addr %s185, 8
      %s187 = scalar_lea.vmem %s4, %s186
      %p188 = scmp.lt.s32.totalorder %s15, 1
      %s189 = scalar_select %p188, %s15, 1
      %s190 = smul.addr %s189, 12
      %s191 = smul.addr %s190, 8
      %s192 = scalar_lea.vmem %s0, %s191
      %p193 = scmp.lt.s32.totalorder %s15, 1
      %s194 = scalar_select %p193, %s15, 1
      %s195 = smul.addr %s194, 2
      %s196 = smul.addr %s195, 8
      %s197 = scalar_lea.vmem %s4, %s196
      %v198 = vld [vmem:[%s192] sm:$0xff]
      %v199 = vld [vmem:[%s192 + $0x8] sm:$0xff]
      %v200 = vld [vmem:[%s192 + $0x10] sm:$0xff]
      %v201 = vld [vmem:[%s192 + $0x18] sm:$0xff]
      %v202 = vld [vmem:[%s192 + $0x20] sm:$0xff]
      %v203 = vld [vmem:[%s192 + $0x28] sm:$0xff]
      %v204 = vld [vmem:[%s192 + $0x30] sm:$0xff]
      %v205 = vld [vmem:[%s192 + $0x38] sm:$0xff]
      %v206 = vld [vmem:[%s192 + $0x40] sm:$0xff]
      %v207 = vld [vmem:[%s192 + $0x48] sm:$0xff]
      %v208 = vld [vmem:[%s192 + $0x50] sm:$0xff]
      %v209 = vld [vmem:[%s192 + $0x58] sm:$0xff]
      %v210 = vpack.c.bf16 %v204, %v198
      %v211 = vpack.c.bf16 %v205, %v199
      %v212 = vpack.c.bf16 %v206, %v200
      %v213 = vpack.c.bf16 %v207, %v201
      %v214 = vpack.c.bf16 %v208, %v202
      %v215 = vpack.c.bf16 %v209, %v203
      %v216 = vld [vmem:[%s1] sm:$0xf]
      %v217 = vld [vmem:[%s1 + $0x4] sm:$0xf]
      %v218 = vld [vmem:[%s1 + $0x8] sm:$0xf]
      %v219 = vld [vmem:[%s1 + $0xc] sm:$0xf]
      %v220 = vld [vmem:[%s1 + $0x10] sm:$0xf]
      %v221 = vld [vmem:[%s1 + $0x14] sm:$0xf]
      %v222 = vld [vmem:[%s1 + $0x18] sm:$0xf]
      %v223 = vld [vmem:[%s1 + $0x1c] sm:$0xf]
      %v224 = vld [vmem:[%s1 + $0x20] sm:$0xf]
      %v225 = vld [vmem:[%s1 + $0x24] sm:$0xf]
      %v226 = vld [vmem:[%s1 + $0x28] sm:$0xf]
      %v227 = vld [vmem:[%s1 + $0x2c] sm:$0xf]
      %v228 = vld [vmem:[%s1 + $0x30] sm:$0xf]
      %v229 = vld [vmem:[%s1 + $0x34] sm:$0xf]
      %v230 = vld [vmem:[%s1 + $0x38] sm:$0xf]
      %v231 = vld [vmem:[%s1 + $0x3c] sm:$0xf]
      %v232 = vld [vmem:[%s1 + $0x40] sm:$0xf]
      %v233 = vld [vmem:[%s1 + $0x44] sm:$0xf]
      %v234 = vld [vmem:[%s1 + $0x48] sm:$0xf]
      %v235 = vld [vmem:[%s1 + $0x4c] sm:$0xf]
      %v236 = vld [vmem:[%s1 + $0x50] sm:$0xf]
      %v237 = vld [vmem:[%s1 + $0x54] sm:$0xf]
      %v238 = vld [vmem:[%s1 + $0x58] sm:$0xf]
      %v239 = vld [vmem:[%s1 + $0x5c] sm:$0xf]
      %v240 = vld [vmem:[%s1 + $0x60] sm:$0xf]
      %v241 = vld [vmem:[%s1 + $0x64] sm:$0xf]
      %v242 = vld [vmem:[%s1 + $0x68] sm:$0xf]
      %v243 = vld [vmem:[%s1 + $0x6c] sm:$0xf]
      %v244 = vld [vmem:[%s1 + $0x70] sm:$0xf]
      %v245 = vld [vmem:[%s1 + $0x74] sm:$0xf]
      %v246 = vld [vmem:[%s1 + $0x78] sm:$0xf]
      %v247 = vld [vmem:[%s1 + $0x7c] sm:$0xf]
      %v248 = vld [vmem:[%s1 + $0x80] sm:$0xf]
      %v249 = vld [vmem:[%s1 + $0x84] sm:$0xf]
      %v250 = vld [vmem:[%s1 + $0x88] sm:$0xf]
      %v251 = vld [vmem:[%s1 + $0x8c] sm:$0xf]
      %v252 = vld [vmem:[%s1 + $0x90] sm:$0xf]
      %v253 = vld [vmem:[%s1 + $0x94] sm:$0xf]
      %v254 = vld [vmem:[%s1 + $0x98] sm:$0xf]
      %v255 = vld [vmem:[%s1 + $0x9c] sm:$0xf]
      %v256 = vld [vmem:[%s1 + $0xa0] sm:$0xf]
      %v257 = vld [vmem:[%s1 + $0xa4] sm:$0xf]
      %v258 = vld [vmem:[%s1 + $0xa8] sm:$0xf]
      %v259 = vld [vmem:[%s1 + $0xac] sm:$0xf]
      %v260 = vld [vmem:[%s1 + $0xb0] sm:$0xf]
      %v261 = vld [vmem:[%s1 + $0xb4] sm:$0xf]
      %v262 = vld [vmem:[%s1 + $0xb8] sm:$0xf]
      %v263 = vld [vmem:[%s1 + $0xbc] sm:$0xf]
      %v264 = vld [vmem:[%s1 + $0xc0] sm:$0xf]
      %v265 = vld [vmem:[%s1 + $0xc4] sm:$0xf]
      %v266 = vld [vmem:[%s1 + $0xc8] sm:$0xf]
      %v267 = vld [vmem:[%s1 + $0xcc] sm:$0xf]
      %v268 = vld [vmem:[%s1 + $0xd0] sm:$0xf]
      %v269 = vld [vmem:[%s1 + $0xd4] sm:$0xf]
      %v270 = vld [vmem:[%s1 + $0xd8] sm:$0xf]
      %v271 = vld [vmem:[%s1 + $0xdc] sm:$0xf]
      %v272 = vld [vmem:[%s1 + $0xe0] sm:$0xf]
      %v273 = vld [vmem:[%s1 + $0xe4] sm:$0xf]
      %v274 = vld [vmem:[%s1 + $0xe8] sm:$0xf]
      %v275 = vld [vmem:[%s1 + $0xec] sm:$0xf]
      %v276 = vld [vmem:[%s1 + $0xf0] sm:$0xf]
      %v277 = vld [vmem:[%s1 + $0xf4] sm:$0xf]
      %v278 = vld [vmem:[%s1 + $0xf8] sm:$0xf]
      %v279 = vld [vmem:[%s1 + $0xfc] sm:$0xf]
      %v280 = vld [vmem:[%s1 + $0x100] sm:$0xf]
      %v281 = vld [vmem:[%s1 + $0x104] sm:$0xf]
      %v282 = vld [vmem:[%s1 + $0x108] sm:$0xf]
      %v283 = vld [vmem:[%s1 + $0x10c] sm:$0xf]
      %v284 = vld [vmem:[%s1 + $0x110] sm:$0xf]
      %v285 = vld [vmem:[%s1 + $0x114] sm:$0xf]
      %v286 = vld [vmem:[%s1 + $0x118] sm:$0xf]
      %v287 = vld [vmem:[%s1 + $0x11c] sm:$0xf]
      %v288 = vld [vmem:[%s1 + $0x120] sm:$0xf]
      %v289 = vld [vmem:[%s1 + $0x124] sm:$0xf]
      %v290 = vld [vmem:[%s1 + $0x128] sm:$0xf]
      %v291 = vld [vmem:[%s1 + $0x12c] sm:$0xf]
      %v292 = vld [vmem:[%s1 + $0x130] sm:$0xf]
      %v293 = vld [vmem:[%s1 + $0x134] sm:$0xf]
      %v294 = vld [vmem:[%s1 + $0x138] sm:$0xf]
      %v295 = vld [vmem:[%s1 + $0x13c] sm:$0xf]
      %v296 = vld [vmem:[%s1 + $0x140] sm:$0xf]
      %v297 = vld [vmem:[%s1 + $0x144] sm:$0xf]
      %v298 = vld [vmem:[%s1 + $0x148] sm:$0xf]
      %v299 = vld [vmem:[%s1 + $0x14c] sm:$0xf]
      %v300 = vld [vmem:[%s1 + $0x150] sm:$0xf]
      %v301 = vld [vmem:[%s1 + $0x154] sm:$0xf]
      %v302 = vld [vmem:[%s1 + $0x158] sm:$0xf]
      %v303 = vld [vmem:[%s1 + $0x15c] sm:$0xf]
      %v304 = vld [vmem:[%s1 + $0x160] sm:$0xf]
      %v305 = vld [vmem:[%s1 + $0x164] sm:$0xf]
      %v306 = vld [vmem:[%s1 + $0x168] sm:$0xf]
      %v307 = vld [vmem:[%s1 + $0x16c] sm:$0xf]
      %v308 = vld [vmem:[%s1 + $0x170] sm:$0xf]
      %v309 = vld [vmem:[%s1 + $0x174] sm:$0xf]
      %v310 = vld [vmem:[%s1 + $0x178] sm:$0xf]
      %v311 = vld [vmem:[%s1 + $0x17c] sm:$0xf]
      %v312 = vld [vmem:[%s2] sm:$0x1]
      %v314 = vperm.slane %v312, 0
      %v412 = vunpack.c.l.b16 %v216
      %v413 = vunpack.c.l.b16 %v217
      %v414 = vunpack.c.l.b16 %v218
      %v415 = vunpack.c.l.b16 %v219
      %v416 = vunpack.c.l.b16 %v220
      %v417 = vunpack.c.l.b16 %v221
      %v418 = vunpack.c.l.b16 %v222
      %v419 = vunpack.c.l.b16 %v223
      %v420 = vunpack.c.l.b16 %v224
      %v421 = vunpack.c.l.b16 %v225
      %v422 = vunpack.c.l.b16 %v226
      %v423 = vunpack.c.l.b16 %v227
      %v424 = vunpack.c.l.b16 %v228
      %v425 = vunpack.c.l.b16 %v229
      %v426 = vunpack.c.l.b16 %v230
      %v427 = vunpack.c.l.b16 %v231
      %v428 = vunpack.c.l.b16 %v232
      %v429 = vunpack.c.l.b16 %v233
      %v430 = vunpack.c.l.b16 %v234
      %v431 = vunpack.c.l.b16 %v235
      %v432 = vunpack.c.l.b16 %v236
      %v433 = vunpack.c.l.b16 %v237
      %v434 = vunpack.c.l.b16 %v238
      %v435 = vunpack.c.l.b16 %v239
      %v436 = vunpack.c.l.b16 %v240
      %v437 = vunpack.c.l.b16 %v241
      %v438 = vunpack.c.l.b16 %v242
      %v439 = vunpack.c.l.b16 %v243
      %v440 = vunpack.c.l.b16 %v244
      %v441 = vunpack.c.l.b16 %v245
      %v442 = vunpack.c.l.b16 %v246
      %v443 = vunpack.c.l.b16 %v247
      %v444 = vunpack.c.l.b16 %v248
      %v445 = vunpack.c.l.b16 %v249
      %v446 = vunpack.c.l.b16 %v250
      %v447 = vunpack.c.l.b16 %v251
      %v448 = vunpack.c.l.b16 %v252
      %v449 = vunpack.c.l.b16 %v253
      %v450 = vunpack.c.l.b16 %v254
      %v451 = vunpack.c.l.b16 %v255
      %v452 = vunpack.c.l.b16 %v256
      %v453 = vunpack.c.l.b16 %v257
      %v454 = vunpack.c.l.b16 %v258
      %v455 = vunpack.c.l.b16 %v259
      %v456 = vunpack.c.l.b16 %v260
      %v457 = vunpack.c.l.b16 %v261
      %v458 = vunpack.c.l.b16 %v262
      %v459 = vunpack.c.l.b16 %v263
      %v460 = vunpack.c.l.b16 %v264
      %v461 = vunpack.c.l.b16 %v265
      %v462 = vunpack.c.l.b16 %v266
      %v463 = vunpack.c.l.b16 %v267
      %v464 = vunpack.c.l.b16 %v268
      %v465 = vunpack.c.l.b16 %v269
      %v466 = vunpack.c.l.b16 %v270
      %v467 = vunpack.c.l.b16 %v271
      %v468 = vunpack.c.l.b16 %v272
      %v469 = vunpack.c.l.b16 %v273
      %v470 = vunpack.c.l.b16 %v274
      %v471 = vunpack.c.l.b16 %v275
      %v472 = vunpack.c.l.b16 %v276
      %v473 = vunpack.c.l.b16 %v277
      %v474 = vunpack.c.l.b16 %v278
      %v475 = vunpack.c.l.b16 %v279
      %v476 = vunpack.c.l.b16 %v280
      %v477 = vunpack.c.l.b16 %v281
      %v478 = vunpack.c.l.b16 %v282
      %v479 = vunpack.c.l.b16 %v283
      %v480 = vunpack.c.l.b16 %v284
      %v481 = vunpack.c.l.b16 %v285
      %v482 = vunpack.c.l.b16 %v286
      %v483 = vunpack.c.l.b16 %v287
      %v484 = vunpack.c.l.b16 %v288
      %v485 = vunpack.c.l.b16 %v289
      %v486 = vunpack.c.l.b16 %v290
      %v487 = vunpack.c.l.b16 %v291
      %v488 = vunpack.c.l.b16 %v292
      %v489 = vunpack.c.l.b16 %v293
      %v490 = vunpack.c.l.b16 %v294
      %v491 = vunpack.c.l.b16 %v295
      %v492 = vunpack.c.l.b16 %v296
      %v493 = vunpack.c.l.b16 %v297
      %v494 = vunpack.c.l.b16 %v298
      %v495 = vunpack.c.l.b16 %v299
      %v496 = vunpack.c.l.b16 %v300
      %v497 = vunpack.c.l.b16 %v301
      %v498 = vunpack.c.l.b16 %v302
      %v499 = vunpack.c.l.b16 %v303
      %v500 = vunpack.c.l.b16 %v304
      %v501 = vunpack.c.l.b16 %v305
      %v502 = vunpack.c.l.b16 %v306
      %v503 = vunpack.c.l.b16 %v307
      %v504 = vunpack.c.l.b16 %v308
      %v505 = vunpack.c.l.b16 %v309
      %v506 = vunpack.c.l.b16 %v310
      %v507 = vunpack.c.l.b16 %v311
      %v508 = vpack.c.b16 %v413, %v412
      %v509 = vpack.c.b16 %v415, %v414
      %v510 = vpack.c.b16 %v417, %v416
      %v511 = vpack.c.b16 %v419, %v418
      %v512 = vpack.c.b16 %v421, %v420
      %v513 = vpack.c.b16 %v423, %v422
      %v514 = vpack.c.b16 %v425, %v424
      %v515 = vpack.c.b16 %v427, %v426
      %v516 = vpack.c.b16 %v429, %v428
      %v517 = vpack.c.b16 %v431, %v430
      %v518 = vpack.c.b16 %v433, %v432
      %v519 = vpack.c.b16 %v435, %v434
      %v520 = vpack.c.b16 %v437, %v436
      %v521 = vpack.c.b16 %v439, %v438
      %v522 = vpack.c.b16 %v441, %v440
      %v523 = vpack.c.b16 %v443, %v442
      %v524 = vpack.c.b16 %v445, %v444
      %v525 = vpack.c.b16 %v447, %v446
      %v526 = vpack.c.b16 %v449, %v448
      %v527 = vpack.c.b16 %v451, %v450
      %v528 = vpack.c.b16 %v453, %v452
      %v529 = vpack.c.b16 %v455, %v454
      %v530 = vpack.c.b16 %v457, %v456
      %v531 = vpack.c.b16 %v459, %v458
      %v532 = vpack.c.b16 %v461, %v460
      %v533 = vpack.c.b16 %v463, %v462
      %v534 = vpack.c.b16 %v465, %v464
      %v535 = vpack.c.b16 %v467, %v466
      %v536 = vpack.c.b16 %v469, %v468
      %v537 = vpack.c.b16 %v471, %v470
      %v538 = vpack.c.b16 %v473, %v472
      %v539 = vpack.c.b16 %v475, %v474
      %v540 = vpack.c.b16 %v477, %v476
      %v541 = vpack.c.b16 %v479, %v478
      %v542 = vpack.c.b16 %v481, %v480
      %v543 = vpack.c.b16 %v483, %v482
      %v544 = vpack.c.b16 %v485, %v484
      %v545 = vpack.c.b16 %v487, %v486
      %v546 = vpack.c.b16 %v489, %v488
      %v547 = vpack.c.b16 %v491, %v490
      %v548 = vpack.c.b16 %v493, %v492
      %v549 = vpack.c.b16 %v495, %v494
      %v550 = vpack.c.b16 %v497, %v496
      %v551 = vpack.c.b16 %v499, %v498
      %v552 = vpack.c.b16 %v501, %v500
      %v553 = vpack.c.b16 %v503, %v502
      %v554 = vpack.c.b16 %v505, %v504
      %v555 = vpack.c.b16 %v507, %v506
      %604 = vmatpush.bf16.msra.mxu0 %v515
      %605 = vmatpush.bf16.msra.mxu0 %v514
      %606 = vmatpush.bf16.msra.mxu0 %v513
      %607 = vmatpush.bf16.msra.mxu0 %v512
      %608 = vmatpush.bf16.msra.mxu0 %v511
      %609 = vmatpush.bf16.msra.mxu0 %v510
      %610 = vmatpush.bf16.msra.mxu0 %v509
      %611 = vmatpush.bf16.msra.mxu0 %v508
      %612 = vmatmul.bf16.gmra.mxu0 %v210
      %v613 = vpop.f32.mrf.mxu0
      %v614 = vadd.f32 %v314, %v613
      %v615 = vpop.f32.mrf.mxu0
      %v616 = vadd.f32 %v314, %v615
      %617 = vdwg.mxu0
      %618 = vmatpush.bf16.msra.mxu0 %v523
      %619 = vmatpush.bf16.msra.mxu0 %v522
      %620 = vmatpush.bf16.msra.mxu0 %v521
      %621 = vmatpush.bf16.msra.mxu0 %v520
      %622 = vmatpush.bf16.msra.mxu0 %v519
      %623 = vmatpush.bf16.msra.mxu0 %v518
      %624 = vmatpush.bf16.msra.mxu0 %v517
      %625 = vmatpush.bf16.msra.mxu0 %v516
      %626 = vmatmul.bf16.gmra.mxu0 %v211
      %v627 = vpop.f32.mrf.mxu0
      %v628 = vadd.f32 %v614, %v627
      %v629 = vpop.f32.mrf.mxu0
      %v630 = vadd.f32 %v616, %v629
      %631 = vdwg.mxu0
      %632 = vmatpush.bf16.msra.mxu0 %v531
      %633 = vmatpush.bf16.msra.mxu0 %v530
      %634 = vmatpush.bf16.msra.mxu0 %v529
      %635 = vmatpush.bf16.msra.mxu0 %v528
      %636 = vmatpush.bf16.msra.mxu0 %v527
      %637 = vmatpush.bf16.msra.mxu0 %v526
      %638 = vmatpush.bf16.msra.mxu0 %v525
      %639 = vmatpush.bf16.msra.mxu0 %v524
      %640 = vmatmul.bf16.gmra.mxu0 %v212
      %v641 = vpop.f32.mrf.mxu0
      %v642 = vadd.f32 %v628, %v641
      %v643 = vpop.f32.mrf.mxu0
      %v644 = vadd.f32 %v630, %v643
      %645 = vdwg.mxu0
      %646 = vmatpush.bf16.msra.mxu0 %v539
      %647 = vmatpush.bf16.msra.mxu0 %v538
      %648 = vmatpush.bf16.msra.mxu0 %v537
      %649 = vmatpush.bf16.msra.mxu0 %v536
      %650 = vmatpush.bf16.msra.mxu0 %v535
      %651 = vmatpush.bf16.msra.mxu0 %v534
      %652 = vmatpush.bf16.msra.mxu0 %v533
      %653 = vmatpush.bf16.msra.mxu0 %v532
      %654 = vmatmul.bf16.gmra.mxu0 %v213
      %v655 = vpop.f32.mrf.mxu0
      %v656 = vadd.f32 %v642, %v655
      %v657 = vpop.f32.mrf.mxu0
      %v658 = vadd.f32 %v644, %v657
      %659 = vdwg.mxu0
      %660 = vmatpush.bf16.msra.mxu0 %v547
      %661 = vmatpush.bf16.msra.mxu0 %v546
      %662 = vmatpush.bf16.msra.mxu0 %v545
      %663 = vmatpush.bf16.msra.mxu0 %v544
      %664 = vmatpush.bf16.msra.mxu0 %v543
      %665 = vmatpush.bf16.msra.mxu0 %v542
      %666 = vmatpush.bf16.msra.mxu0 %v541
      %667 = vmatpush.bf16.msra.mxu0 %v540
      %668 = vmatmul.bf16.gmra.mxu0 %v214
      %v669 = vpop.f32.mrf.mxu0
      %v670 = vadd.f32 %v656, %v669
      %v671 = vpop.f32.mrf.mxu0
      %v672 = vadd.f32 %v658, %v671
      %673 = vdwg.mxu0
      %674 = vmatpush.bf16.msra.mxu0 %v555
      %675 = vmatpush.bf16.msra.mxu0 %v554
      %676 = vmatpush.bf16.msra.mxu0 %v553
      %677 = vmatpush.bf16.msra.mxu0 %v552
      %678 = vmatpush.bf16.msra.mxu0 %v551
      %679 = vmatpush.bf16.msra.mxu0 %v550
      %680 = vmatpush.bf16.msra.mxu0 %v549
      %681 = vmatpush.bf16.msra.mxu0 %v548
      %682 = vmatmul.bf16.gmra.mxu0 %v215
      %v683 = vpop.f32.mrf.mxu0
      %v684 = vadd.f32 %v670, %v683
      %v685 = vpop.f32.mrf.mxu0
      %v686 = vadd.f32 %v672, %v685
      %687 = vdwg.mxu0
      %v688 = vld [vmem:[%s3] sm:$0xff]
      %v689 = vld [vmem:[%s3 + $0x8] sm:$0xff]
      %v690 = vadd.f32 %v684, %v688
      %v691 = vadd.f32 %v686, %v689
      %692 = vst [vmem:[%s197] sm:$0xff] %v690
      %693 = vst [vmem:[%s197 + $0x8] sm:$0xff] %v691
      %p694 = scmp.lt.s32.totalorder %s15, 1
      %s695 = scalar_select %p694, %s15, 1
      %s696 = smul.addr %s695, 2
      %s697 = smul.addr %s696, 8
      %s698 = scalar_lea.vmem %s4, %s697
      // Predicated region
      $region37: #{deit_backbone_forward.58} parent=35 // pred_check
        %p699 = pneg %p122
      $region38: #{deit_backbone_forward.58} parent=35 // pred_check_branch
        %701 = sbr.rel (%p699) target = $region40
      $region39: #{deit_backbone_forward.58} parent=35 // pred_region
        _
      $region40: #{deit_backbone_forward.58} parent=35 // pred_fallthru
        _
    $region36: #{deit_backbone_forward.58} parent=5 // pred_fallthru
      _
    %p702 = scmp.le.s32.totalorder 2, %s10
    // Predicated region
    $region41: #{deit_backbone_forward.58} parent=5 // pred_check
      %p703 = pneg %p702
    $region42: #{deit_backbone_forward.58} parent=5 // pred_check_branch
      %705 = sbr.rel (%p703) target = $region44
    $region43: #{deit_backbone_forward.58} parent=5 // pred_region
      %s706 = ssub.s32 %s10, 2
      // Predicated region
      $region45: #{deit_backbone_forward.58} parent=43 // pred_check
        %p707 = pneg %p128
      $region46: #{deit_backbone_forward.58} parent=43 // pred_check_branch
        %709 = sbr.rel (%p707) target = $region48
      $region47: #{deit_backbone_forward.58} parent=43 // pred_region
        %p710 = scmp.lt.s32.totalorder %s16, 1
        %s711 = scalar_select %p710, %s16, 1
        %s712 = smul.addr %s711, 2
        %s713 = smul.addr %s712, 8
        %s714 = scalar_lea.vmem %s4, %s713
      $region48: #{deit_backbone_forward.58} parent=43 // pred_fallthru
        _
    $region44: #{deit_backbone_forward.58} parent=5 // pred_fallthru
      _
  $region6: #{deit_backbone_forward.58} parent=0 // loop_footer
    %s14 = sadd.s32 1, %s10
  $region7: #{deit_backbone_forward.58} parent=0 // loop_footer_branch
    %9 = sbr.rel target = $region3
  $region8: #{deit_backbone_forward.58} parent=0 // loop_exit
    _

// kernel: deit_backbone_forward.60
$region0: #{deit_backbone_forward.60}
  #allocation0 [shape = 'u32[]', space=smem, size = 0x4, offset = 0x4, fixed_abs, tag = 'smem constant byte address 0x4 - core index']
  #allocation1 [shape = 'u32[72,128]{1,0:T(1,128)}', space=vmem, size = 0x9000, scoped, tag = 'internal scratch']
  %s0 = inlined_call_operand.vmem [shape: f32[2,17,384], index: 0, kind: input, shape index: {}, may-alias: {0,1,2}]
  %s1 = inlined_call_operand.vmem [shape: f32[2,17,384], index: 1, kind: input, shape index: {}, may-alias: {0,1,2}]
  %s2 = inlined_call_operand.vmem [shape: f32[2,17,384], index: 2, kind: input, shape index: {}, may-alias: {0,1,2}]
  %s3 = inlined_call_operand.vmem [shape: f32[2,17,128], index: 3, kind: output, shape index: {}]
  %s4 = sld [smem:[#allocation0]]
  $region159: #{deit_backbone_forward.60} parent=0
    _
  %s6 = ssub.s32 1, %s4
  %s7 = scalar_select 0, %s6, %s4
  $region1: #{deit_backbone_forward.60} parent=0
    #allocation2 [shape = 'u8[24576]{0}', space=vmem, size = 0x6000, scoped, tag = 'input window, operand 0']
    #allocation3 [shape = 'u8[24576]{0}', space=vmem, size = 0x6000, scoped, tag = 'input window, operand 1']
    #allocation4 [shape = 'u8[24576]{0}', space=vmem, size = 0x6000, scoped, tag = 'input window, operand 2']
    loop: start=0, step=1, limit=4
    $region2: #{deit_backbone_forward.60} parent=1 // loop_pre_header
      _
    $region3: #{deit_backbone_forward.60} parent=1 // loop_header
      %s9 = sphi 0, %s13
      %p10 = scmp.ge.s32.totalorder %s9, 4
      %s16 = sphi 0, %s28
      %s17 = sphi 0, %s24
      %s18 = sphi 0, %s16
      %s19 = sphi 0, %s17
      %s20 = sphi 0, %s18
      %s21 = sphi 0, %s19
      %s33 = sphi 0, %s35
      %s36 = sphi 0, %s33
      %s37 = sphi 0, %s36
      %s53 = sphi 0, %s37
      %s63 = sphi 0, %s65
      %s66 = sphi 0, %s63
      %s67 = sphi 0, %s66
      %s83 = sphi 0, %s67
      %s93 = sphi 0, %s95
      %s96 = sphi 0, %s93
      %s97 = sphi 0, %s96
      %s113 = sphi 0, %s97
      %s121 = sphi 0, %s123
      %s124 = sphi 0, %s121
      %s125 = sphi 0, %s124
      %s141 = sphi 0, %s125
    $region4: #{deit_backbone_forward.60} parent=1 // loop_header_branch
      %12 = sbr.rel (%p10) target = $region8
    $region5: #{deit_backbone_forward.60} parent=1 // loop_body
      %s14 = ssub.s32 %s9, 1
      %s15 = ssub.s32 %s9, 2
      %s22 = sadd.s32 1, %s17
      %p23 = scmp.ge.s32.totalorder %s22, 1
      %s24 = scalar_select %p23, 0, %s22
      %s25 = sadd.s32 1, %s16
      %s26 = scalar_select %p23, %s25, %s16
      %p27 = scmp.ge.s32.totalorder %s26, 2
      %s28 = scalar_select %p27, 0, %s26
      %s29 = ssub.s32 %s16, %s28
      %s30 = ssub.s32 %s17, %s24
      %s31 = sor.u32 %s29, %s30
      %p32 = scmp.eq.s32.totalorder %s31, 0
      %s34 = sadd.s32 %s33, 1
      %s35 = scalar_select %p32, %s33, %s34
      %p38 = pneg %p32
      %p39 = scmp.eq.s32.totalorder %s9, 1
      %p40 = por %p38, %p39
      %p41 = scmp.ne.s32.totalorder %s33, %s36
      %p42 = scmp.eq.s32.totalorder %s9, 0
      %p43 = por %p41, %p42
      %p44 = scmp.ne.s32.totalorder %s33, %s36
      %p45 = scmp.eq.s32.totalorder %s14, 1
      %p46 = por %p44, %p45
      %p47 = scmp.ne.s32.totalorder %s36, %s37
      %p48 = scmp.eq.s32.totalorder %s14, 0
      %p49 = por %p47, %p48
      %p50 = scmp.ne.s32.totalorder %s36, %s37
      %p51 = scmp.eq.s32.totalorder %s15, 1
      %p52 = por %p50, %p51
      %p54 = scmp.ne.s32.totalorder %s37, %s53
      %p55 = scmp.eq.s32.totalorder %s15, 0
      %p56 = por %p54, %p55
      %s57 = sadd.s32 %s17, 1
      %s58 = sadd.s32 %s24, 1
      %s59 = ssub.s32 %s16, %s28
      %s60 = ssub.s32 %s57, %s58
      %s61 = sor.u32 %s59, %s60
      %p62 = scmp.eq.s32.totalorder %s61, 0
      %s64 = sadd.s32 %s63, 1
      %s65 = scalar_select %p62, %s63, %s64
      %p68 = pneg %p62
      %p69 = scmp.eq.s32.totalorder %s9, 1
      %p70 = por %p68, %p69
      %p71 = scmp.ne.s32.totalorder %s63, %s66
      %p72 = scmp.eq.s32.totalorder %s9, 0
      %p73 = por %p71, %p72
      %p74 = scmp.ne.s32.totalorder %s63, %s66
      %p75 = scmp.eq.s32.totalorder %s14, 1
      %p76 = por %p74, %p75
      %p77 = scmp.ne.s32.totalorder %s66, %s67
      %p78 = scmp.eq.s32.totalorder %s14, 0
      %p79 = por %p77, %p78
      %p80 = scmp.ne.s32.totalorder %s66, %s67
      %p81 = scmp.eq.s32.totalorder %s15, 1
      %p82 = por %p80, %p81
      %p84 = scmp.ne.s32.totalorder %s67, %s83
      %p85 = scmp.eq.s32.totalorder %s15, 0
      %p86 = por %p84, %p85
      %s87 = sadd.s32 %s17, 2
      %s88 = sadd.s32 %s24, 2
      %s89 = ssub.s32 %s16, %s28
      %s90 = ssub.s32 %s87, %s88
      %s91 = sor.u32 %s89, %s90
      %p92 = scmp.eq.s32.totalorder %s91, 0
      %s94 = sadd.s32 %s93, 1
      %s95 = scalar_select %p92, %s93, %s94
      %p98 = pneg %p92
      %p99 = scmp.eq.s32.totalorder %s9, 1
      %p100 = por %p98, %p99
      %p101 = scmp.ne.s32.totalorder %s93, %s96
      %p102 = scmp.eq.s32.totalorder %s9, 0
      %p103 = por %p101, %p102
      %p104 = scmp.ne.s32.totalorder %s93, %s96
      %p105 = scmp.eq.s32.totalorder %s14, 1
      %p106 = por %p104, %p105
      %p107 = scmp.ne.s32.totalorder %s96, %s97
      %p108 = scmp.eq.s32.totalorder %s14, 0
      %p109 = por %p107, %p108
      %p110 = scmp.ne.s32.totalorder %s96, %s97
      %p111 = scmp.eq.s32.totalorder %s15, 1
      %p112 = por %p110, %p111
      %p114 = scmp.ne.s32.totalorder %s97, %s113
      %p115 = scmp.eq.s32.totalorder %s15, 0
      %p116 = por %p114, %p115
      %s117 = ssub.s32 %s16, %s28
      %s118 = ssub.s32 %s17, %s24
      %s119 = sor.u32 %s117, %s118
      %p120 = scmp.eq.s32.totalorder %s119, 0
      %s122 = sadd.s32 %s121, 1
      %s123 = scalar_select %p120, %s121, %s122
      %p126 = pneg %p120
      %p127 = scmp.eq.s32.totalorder %s9, 1
      %p128 = por %p126, %p127
      %p129 = scmp.ne.s32.totalorder %s121, %s124
      %p130 = scmp.eq.s32.totalorder %s9, 0
      %p131 = por %p129, %p130
      %p132 = scmp.ne.s32.totalorder %s121, %s124
      %p133 = scmp.eq.s32.totalorder %s14, 1
      %p134 = por %p132, %p133
      %p135 = scmp.ne.s32.totalorder %s124, %s125
      %p136 = scmp.eq.s32.totalorder %s14, 0
      %p137 = por %p135, %p136
      %p138 = scmp.ne.s32.totalorder %s124, %s125
      %p139 = scmp.eq.s32.totalorder %s15, 1
      %p140 = por %p138, %p139
      %p142 = scmp.ne.s32.totalorder %s125, %s141
      %p143 = scmp.eq.s32.totalorder %s15, 0
      %p144 = por %p142, %p143
      %p145 = scmp.le.s32.totalorder 1, %s9
      %p146 = scmp.lt.s32.totalorder %s9, 3
      %p147 = pnand %p145, %p146
      %p148 = pneg %p147
      // Predicated region
      $region9: #{deit_backbone_forward.60} parent=5 // pred_check
        _
      $region10: #{deit_backbone_forward.60} parent=5 // pred_check_branch
        %150 = sbr.rel (%p147) target = $region12
      $region11: #{deit_backbone_forward.60} parent=5 // pred_region
        %s151 = ssub.s32 %s9, 1
      $region12: #{deit_backbone_forward.60} parent=5 // pred_fallthru
        _
      %p152 = scmp.lt.s32.totalorder %s9, 2
      // Predicated region
      $region13: #{deit_backbone_forward.60} parent=5 // pred_check
        %p153 = pneg %p152
      $region14: #{deit_backbone_forward.60} parent=5 // pred_check_branch
        %155 = sbr.rel (%p153) target = $region16
      $region15: #{deit_backbone_forward.60} parent=5 // pred_region
        // Predicated region
        $region17: #{deit_backbone_forward.60} parent=15 // pred_check
          %p156 = pneg %p43
        $region18: #{deit_backbone_forward.60} parent=15 // pred_check_branch
          %158 = sbr.rel (%p156) target = $region20
        $region19: #{deit_backbone_forward.60} parent=15 // pred_region
          %s159 = sand.u32 %s33, 1
          %s160 = sand.u32 %s33, 1
          %s161 = smul.addr %s160, 24
          %s162 = scalar_lea.vmem [#allocation2], %s161
          %s163 = smul.addr %s16, 9
          %s164 = sadd.s32 %s17, %s163
          %s165 = smul.addr %s164, 8
          %s166 = scalar_lea.vmem %s0, %s165
          // Predicated region
          $region21: #{deit_backbone_forward.60} parent=19 // pred_check
            _
          $region22: #{deit_backbone_forward.60} parent=19 // pred_check_branch
            %168 = sbr.rel (0) target = $region24
          $region23: #{deit_backbone_forward.60} parent=19 // pred_region
            // Predicated region
            $region25: #{deit_backbone_forward.60} parent=23 // pred_check
              _
            $region26: #{deit_backbone_forward.60} parent=23 // pred_check_branch
              %170 = sbr.rel (0) target = $region28
            $region27: #{deit_backbone_forward.60} parent=23 // pred_region
              // Predicated region
              $region40: #{deit_backbone_forward.60} parent=27 // pred_check
                _
              $region41: #{deit_backbone_forward.60} parent=27 // pred_check_branch
                %190 = sbr.rel (0) target = $region43
              $region42: #{deit_backbone_forward.60} parent=27 // pred_region
                loop: start=0, step=1, limit=1
                $region44: #{deit_backbone_forward.60} parent=42 // loop_pre_header
                  _
                $region45: #{deit_backbone_forward.60} parent=42 // loop_header
                  %s192 = sphi 0, %s196
                  %p193 = scmp.ge.s32.totalorder %s192, 1
                  %s197 = sphi %s166, %s166
                  %s198 = sphi %s162, %s162
                $region46: #{deit_backbone_forward.60} parent=42 // loop_header_branch
                  %195 = sbr.rel (%p193) target = $region50
                $region47: #{deit_backbone_forward.60} parent=42 // loop_body
                  %v199 = vld [vmem:[%s197] sm:$0xff]
                  %200 = vst [vmem:[%s198] sm:$0xff] %v199
                  %v201 = vld [vmem:[%s197 + $0x18] sm:$0xff]
                  %202 = vst [vmem:[%s198 + $0x8] sm:$0xff] %v201
                  %v203 = vld [vmem:[%s197 + $0x30] sm:$0xff]
                  %204 = vst [vmem:[%s198 + $0x10] sm:$0xff] %v203
                $region48: #{deit_backbone_forward.60} parent=42 // loop_footer
                  %s196 = sadd.s32 1, %s192
                $region49: #{deit_backbone_forward.60} parent=42 // loop_footer_branch
                  %191 = sbr.rel target = $region45
                $region50: #{deit_backbone_forward.60} parent=42 // loop_exit
                  _
              $region43: #{deit_backbone_forward.60} parent=27 // pred_fallthru
                _
              // Predicated region
              $region51: #{deit_backbone_forward.60} parent=27 // pred_check
                _
              $region52: #{deit_backbone_forward.60} parent=27 // pred_check_branch
                %206 = sbr.rel target = $region54
              $region53: #{deit_backbone_forward.60} parent=27 // pred_region
                _
              $region54: #{deit_backbone_forward.60} parent=27 // pred_fallthru
                _
            $region28: #{deit_backbone_forward.60} parent=23 // pred_fallthru
              _
            // Predicated region
            $region29: #{deit_backbone_forward.60} parent=23 // pred_check
              _
            $region30: #{deit_backbone_forward.60} parent=23 // pred_check_branch
              %172 = sbr.rel target = $region32
            $region31: #{deit_backbone_forward.60} parent=23 // pred_region
              %s174 = ssub.s32 256, 1
              loop: start=0, step=1, limit=1
              $region33: #{deit_backbone_forward.60} parent=31 // loop_pre_header
                _
              $region34: #{deit_backbone_forward.60} parent=31 // loop_header
                %s176 = sphi 0, %s180
                %p177 = scmp.ge.s32.totalorder %s176, 1
                %s181 = sphi %s166, %s166
                %s182 = sphi %s162, %s162
              $region35: #{deit_backbone_forward.60} parent=31 // loop_header_branch
                %179 = sbr.rel (%p177) target = $region39
              $region36: #{deit_backbone_forward.60} parent=31 // loop_body
                %v183 = vld [vmem:[%s181] sm:%s174]
                %184 = vst [vmem:[%s182] sm:%s174] %v183
                %v185 = vld [vmem:[%s181 + $0x18] sm:%s174]
                %186 = vst [vmem:[%s182 + $0x8] sm:%s174] %v185
                %v187 = vld [vmem:[%s181 + $0x30] sm:%s174]
                %188 = vst [vmem:[%s182 + $0x10] sm:%s174] %v187
              $region37: #{deit_backbone_forward.60} parent=31 // loop_footer
                %s180 = sadd.s32 1, %s176
              $region38: #{deit_backbone_forward.60} parent=31 // loop_footer_branch
                %175 = sbr.rel target = $region34
              $region39: #{deit_backbone_forward.60} parent=31 // loop_exit
                _
            $region32: #{deit_backbone_forward.60} parent=23 // pred_fallthru
              _
          $region24: #{deit_backbone_forward.60} parent=19 // pred_fallthru
            _
          %207 = vnop
        $region20: #{deit_backbone_forward.60} parent=15 // pred_fallthru
          _
        // Predicated region
        $region55: #{deit_backbone_forward.60} parent=15 // pred_check
          %p208 = pneg %p73
        $region56: #{deit_backbone_forward.60} parent=15 // pred_check_branch
          %210 = sbr.rel (%p208) target = $region58
        $region57: #{deit_backbone_forward.60} parent=15 // pred_region
          %s211 = sand.u32 %s63, 1
          %s212 = sand.u32 %s63, 1
          %s213 = smul.addr %s212, 24
          %s214 = scalar_lea.vmem [#allocation3], %s213
          %s215 = sadd.s32 %s17, 1
          %s216 = smul.addr %s16, 9
          %s217 = sadd.s32 %s215, %s216
          %s218 = smul.addr %s217, 8
          %s219 = scalar_lea.vmem %s1, %s218
          // Predicated region
          $region59: #{deit_backbone_forward.60} parent=57 // pred_check
            _
          $region60: #{deit_backbone_forward.60} parent=57 // pred_check_branch
            %221 = sbr.rel (0) target = $region62
          $region61: #{deit_backbone_forward.60} parent=57 // pred_region
            // Predicated region
            $region63: #{deit_backbone_forward.60} parent=61 // pred_check
              _
            $region64: #{deit_backbone_forward.60} parent=61 // pred_check_branch
              %223 = sbr.rel (0) target = $region66
            $region65: #{deit_backbone_forward.60} parent=61 // pred_region
              // Predicated region
              $region78: #{deit_backbone_forward.60} parent=65 // pred_check
                _
              $region79: #{deit_backbone_forward.60} parent=65 // pred_check_branch
                %243 = sbr.rel (0) target = $region81
              $region80: #{deit_backbone_forward.60} parent=65 // pred_region
                loop: start=0, step=1, limit=1
                $region82: #{deit_backbone_forward.60} parent=80 // loop_pre_header
                  _
                $region83: #{deit_backbone_forward.60} parent=80 // loop_header
                  %s245 = sphi 0, %s249
                  %p246 = scmp.ge.s32.totalorder %s245, 1
                  %s250 = sphi %s219, %s219
                  %s251 = sphi %s214, %s214
                $region84: #{deit_backbone_forward.60} parent=80 // loop_header_branch
                  %248 = sbr.rel (%p246) target = $region88
                $region85: #{deit_backbone_forward.60} parent=80 // loop_body
                  %v252 = vld [vmem:[%s250] sm:$0xff]
                  %253 = vst [vmem:[%s251] sm:$0xff] %v252
                  %v254 = vld [vmem:[%s250 + $0x18] sm:$0xff]
                  %255 = vst [vmem:[%s251 + $0x8] sm:$0xff] %v254
                  %v256 = vld [vmem:[%s250 + $0x30] sm:$0xff]
                  %257 = vst [vmem:[%s251 + $0x10] sm:$0xff] %v256
                $region86: #{deit_backbone_forward.60} parent=80 // loop_footer
                  %s249 = sadd.s32 1, %s245
                $region87: #{deit_backbone_forward.60} parent=80 // loop_footer_branch
                  %244 = sbr.rel target = $region83
                $region88: #{deit_backbone_forward.60} parent=80 // loop_exit
                  _
              $region81: #{deit_backbone_forward.60} parent=65 // pred_fallthru
                _
              // Predicated region
              $region89: #{deit_backbone_forward.60} parent=65 // pred_check
                _
              $region90: #{deit_backbone_forward.60} parent=65 // pred_check_branch
                %259 = sbr.rel target = $region92
              $region91: #{deit_backbone_forward.60} parent=65 // pred_region
                _
              $region92: #{deit_backbone_forward.60} parent=65 // pred_fallthru
                _
            $region66: #{deit_backbone_forward.60} parent=61 // pred_fallthru
              _
            // Predicated region
            $region67: #{deit_backbone_forward.60} parent=61 // pred_check
              _
            $region68: #{deit_backbone_forward.60} parent=61 // pred_check_branch
              %225 = sbr.rel target = $region70
            $region69: #{deit_backbone_forward.60} parent=61 // pred_region
              %s227 = ssub.s32 256, 1
              loop: start=0, step=1, limit=1
              $region71: #{deit_backbone_forward.60} parent=69 // loop_pre_header
                _
              $region72: #{deit_backbone_forward.60} parent=69 // loop_header
                %s229 = sphi 0, %s233
                %p230 = scmp.ge.s32.totalorder %s229, 1
                %s234 = sphi %s219, %s219
                %s235 = sphi %s214, %s214
              $region73: #{deit_backbone_forward.60} parent=69 // loop_header_branch
                %232 = sbr.rel (%p230) target = $region77
              $region74: #{deit_backbone_forward.60} parent=69 // loop_body
                %v236 = vld [vmem:[%s234] sm:%s227]
                %237 = vst [vmem:[%s235] sm:%s227] %v236
                %v238 = vld [vmem:[%s234 + $0x18] sm:%s227]
                %239 = vst [vmem:[%s235 + $0x8] sm:%s227] %v238
                %v240 = vld [vmem:[%s234 + $0x30] sm:%s227]
                %241 = vst [vmem:[%s235 + $0x10] sm:%s227] %v240
              $region75: #{deit_backbone_forward.60} parent=69 // loop_footer
                %s233 = sadd.s32 1, %s229
              $region76: #{deit_backbone_forward.60} parent=69 // loop_footer_branch
                %228 = sbr.rel target = $region72
              $region77: #{deit_backbone_forward.60} parent=69 // loop_exit
                _
            $region70: #{deit_backbone_forward.60} parent=61 // pred_fallthru
              _
          $region62: #{deit_backbone_forward.60} parent=57 // pred_fallthru
            _
          %260 = vnop
        $region58: #{deit_backbone_forward.60} parent=15 // pred_fallthru
          _
        // Predicated region
        $region93: #{deit_backbone_forward.60} parent=15 // pred_check
          %p261 = pneg %p103
        $region94: #{deit_backbone_forward.60} parent=15 // pred_check_branch
          %263 = sbr.rel (%p261) target = $region96
        $region95: #{deit_backbone_forward.60} parent=15 // pred_region
          %s264 = sand.u32 %s93, 1
          %s265 = sand.u32 %s93, 1
          %s266 = smul.addr %s265, 24
          %s267 = scalar_lea.vmem [#allocation4], %s266
          %s268 = sadd.s32 %s17, 2
          %s269 = smul.addr %s16, 9
          %s270 = sadd.s32 %s268, %s269
          %s271 = smul.addr %s270, 8
          %s272 = scalar_lea.vmem %s2, %s271
          // Predicated region
          $region97: #{deit_backbone_forward.60} parent=95 // pred_check
            _
          $region98: #{deit_backbone_forward.60} parent=95 // pred_check_branch
            %274 = sbr.rel (0) target = $region100
          $region99: #{deit_backbone_forward.60} parent=95 // pred_region
            // Predicated region
            $region101: #{deit_backbone_forward.60} parent=99 // pred_check
              _
            $region102: #{deit_backbone_forward.60} parent=99 // pred_check_branch
              %276 = sbr.rel (0) target = $region104
            $region103: #{deit_backbone_forward.60} parent=99 // pred_region
              // Predicated region
              $region116: #{deit_backbone_forward.60} parent=103 // pred_check
                _
              $region117: #{deit_backbone_forward.60} parent=103 // pred_check_branch
                %296 = sbr.rel (0) target = $region119
              $region118: #{deit_backbone_forward.60} parent=103 // pred_region
                loop: start=0, step=1, limit=1
                $region120: #{deit_backbone_forward.60} parent=118 // loop_pre_header
                  _
                $region121: #{deit_backbone_forward.60} parent=118 // loop_header
                  %s298 = sphi 0, %s302
                  %p299 = scmp.ge.s32.totalorder %s298, 1
                  %s303 = sphi %s272, %s272
                  %s304 = sphi %s267, %s267
                $region122: #{deit_backbone_forward.60} parent=118 // loop_header_branch
                  %301 = sbr.rel (%p299) target = $region126
                $region123: #{deit_backbone_forward.60} parent=118 // loop_body
                  %v305 = vld [vmem:[%s303] sm:$0xff]
                  %306 = vst [vmem:[%s304] sm:$0xff] %v305
                  %v307 = vld [vmem:[%s303 + $0x18] sm:$0xff]
                  %308 = vst [vmem:[%s304 + $0x8] sm:$0xff] %v307
                  %v309 = vld [vmem:[%s303 + $0x30] sm:$0xff]
                  %310 = vst [vmem:[%s304 + $0x10] sm:$0xff] %v309
                $region124: #{deit_backbone_forward.60} parent=118 // loop_footer
                  %s302 = sadd.s32 1, %s298
                $region125: #{deit_backbone_forward.60} parent=118 // loop_footer_branch
                  %297 = sbr.rel target = $region121
                $region126: #{deit_backbone_forward.60} parent=118 // loop_exit
                  _
              $region119: #{deit_backbone_forward.60} parent=103 // pred_fallthru
                _
              // Predicated region
              $region127: #{deit_backbone_forward.60} parent=103 // pred_check
                _
              $region128: #{deit_backbone_forward.60} parent=103 // pred_check_branch
                %312 = sbr.rel target = $region130
              $region129: #{deit_backbone_forward.60} parent=103 // pred_region
                _
              $region130: #{deit_backbone_forward.60} parent=103 // pred_fallthru
                _
            $region104: #{deit_backbone_forward.60} parent=99 // pred_fallthru
              _
            // Predicated region
            $region105: #{deit_backbone_forward.60} parent=99 // pred_check
              _
            $region106: #{deit_backbone_forward.60} parent=99 // pred_check_branch
              %278 = sbr.rel target = $region108
            $region107: #{deit_backbone_forward.60} parent=99 // pred_region
              %s280 = ssub.s32 256, 1
              loop: start=0, step=1, limit=1
              $region109: #{deit_backbone_forward.60} parent=107 // loop_pre_header
                _
              $region110: #{deit_backbone_forward.60} parent=107 // loop_header
                %s282 = sphi 0, %s286
                %p283 = scmp.ge.s32.totalorder %s282, 1
                %s287 = sphi %s272, %s272
                %s288 = sphi %s267, %s267
              $region111: #{deit_backbone_forward.60} parent=107 // loop_header_branch
                %285 = sbr.rel (%p283) target = $region115
              $region112: #{deit_backbone_forward.60} parent=107 // loop_body
                %v289 = vld [vmem:[%s287] sm:%s280]
                %290 = vst [vmem:[%s288] sm:%s280] %v289
                %v291 = vld [vmem:[%s287 + $0x18] sm:%s280]
                %292 = vst [vmem:[%s288 + $0x8] sm:%s280] %v291
                %v293 = vld [vmem:[%s287 + $0x30] sm:%s280]
                %294 = vst [vmem:[%s288 + $0x10] sm:%s280] %v293
              $region113: #{deit_backbone_forward.60} parent=107 // loop_footer
                %s286 = sadd.s32 1, %s282
              $region114: #{deit_backbone_forward.60} parent=107 // loop_footer_branch
                %281 = sbr.rel target = $region110
              $region115: #{deit_backbone_forward.60} parent=107 // loop_exit
                _
            $region108: #{deit_backbone_forward.60} parent=99 // pred_fallthru
              _
          $region100: #{deit_backbone_forward.60} parent=95 // pred_fallthru
            _
          %313 = vnop
        $region96: #{deit_backbone_forward.60} parent=15 // pred_fallthru
          _
      $region16: #{deit_backbone_forward.60} parent=5 // pred_fallthru
        _
      %p314 = scmp.le.s32.totalorder 1, %s9
      %p315 = scmp.lt.s32.totalorder %s9, 3
      %p316 = pnand %p314, %p315
      %p317 = pneg %p316
      // Predicated region
      $region131: #{deit_backbone_forward.60} parent=5 // pred_check
        _
      $region132: #{deit_backbone_forward.60} parent=5 // pred_check_branch
        %319 = sbr.rel (%p316) target = $region134
      $region133: #{deit_backbone_forward.60} parent=5 // pred_region
        %s320 = ssub.s32 %s9, 1
        %s321 = sand.u32 %s36, 1
        %s322 = sand.u32 %s36, 1
        %s323 = smul.addr %s322, 24
        %s324 = scalar_lea.vmem [#allocation2], %s323
        // Predicated region
        $region135: #{deit_backbone_forward.60} parent=133 // pred_check
          %p325 = pneg %p49
        $region136: #{deit_backbone_forward.60} parent=133 // pred_check_branch
          %327 = sbr.rel (%p325) target = $region138
        $region137: #{deit_backbone_forward.60} parent=133 // pred_region
          _
        $region138: #{deit_backbone_forward.60} parent=133 // pred_fallthru
          _
        %s328 = sand.u32 %s66, 1
        %s329 = sand.u32 %s66, 1
        %s330 = smul.addr %s329, 24
        %s331 = scalar_lea.vmem [#allocation3], %s330
        // Predicated region
        $region139: #{deit_backbone_forward.60} parent=133 // pred_check
          %p332 = pneg %p79
        $region140: #{deit_backbone_forward.60} parent=133 // pred_check_branch
          %334 = sbr.rel (%p332) target = $region142
        $region141: #{deit_backbone_forward.60} parent=133 // pred_region
          _
        $region142: #{deit_backbone_forward.60} parent=133 // pred_fallthru
          _
        %s335 = sand.u32 %s96, 1
        %s336 = sand.u32 %s96, 1
        %s337 = smul.addr %s336, 24
        %s338 = scalar_lea.vmem [#allocation4], %s337
        // Predicated region
        $region143: #{deit_backbone_forward.60} parent=133 // pred_check
          %p339 = pneg %p109
        $region144: #{deit_backbone_forward.60} parent=133 // pred_check_branch
          %341 = sbr.rel (%p339) target = $region146
        $region145: #{deit_backbone_forward.60} parent=133 // pred_region
          _
        $region146: #{deit_backbone_forward.60} parent=133 // pred_fallthru
          _
        %s342 = sand.u32 %s36, 1
        %s343 = sand.u32 %s36, 1
        %s344 = smul.addr %s343, 24
        %s345 = scalar_lea.vmem [#allocation2], %s344
        %p346 = pneg %p49
        %p347 = pneg %p46
        %s348 = sand.u32 %s66, 1
        %s349 = sand.u32 %s66, 1
        %s350 = smul.addr %s349, 24
        %s351 = scalar_lea.vmem [#allocation3], %s350
        %p352 = pneg %p79
        %p353 = pneg %p76
        %s354 = sand.u32 %s96, 1
        %s355 = sand.u32 %s96, 1
        %s356 = smul.addr %s355, 24
        %s357 = scalar_lea.vmem [#allocation4], %s356
        %p358 = pneg %p109
        %p359 = pneg %p106
        %p360 = pneg %p137
        %p361 = pneg %p134
        %p362 = scmp.lt.s32.totalorder %s18, 1
        %s363 = scalar_select %p362, %s18, 1
        %p364 = scmp.lt.s32.totalorder %s19, 0
        %s365 = scalar_select %p364, %s19, 0
        %s366 = smul.addr %s363, 3
        %s367 = sadd.s32 %s365, %s366
        %s368 = smul.addr %s367, 8
        %s369 = scalar_lea.vmem %s3, %s368
        %s370 = sadd.s32 %s19, 1
        %s371 = sadd.s32 %s19, 2
        %p372 = scmp.lt.s32.totalorder %s18, 1
        %s373 = scalar_select %p372, %s18, 1
        %p374 = scmp.lt.s32.totalorder %s19, 0
        %s375 = scalar_select %p374, %s19, 0
        %s376 = smul.addr %s373, 3
        %s377 = sadd.s32 %s375, %s376
        %s378 = smul.addr %s377, 8
        %s379 = scalar_lea.vmem %s3, %s378
        %v381 = vld [vmem:[%s324] sm:$0xff]
        %v382 = vld [vmem:[%s324 + $0x8] sm:$0xff]
        %v383 = vld [vmem:[%s324 + $0x10] sm:$0x1]
        %v384 = vld [vmem:[%s331] sm:$0xff]
        %v385 = vld [vmem:[%s331 + $0x8] sm:$0xff]
        %v386 = vld [vmem:[%s331 + $0x10] sm:$0x1]
        %v387 = vld [vmem:[%s338] sm:$0xff]
        %v388 = vld [vmem:[%s338 + $0x8] sm:$0xff]
        %v389 = vld [vmem:[%s338 + $0x10] sm:$0x1]
        %v390 = vpack.c.bf16 %v382, %v381
        %v391 = vpack.c.bf16 %v383, %v383
        %v392 = vpack.c.bf16 %v385, %v384
        %v393 = vpack.c.bf16 %v386, %v386
        %v394 = vpack.c.bf16 %v388, %v387
        %v395 = vpack.c.bf16 %v389, %v389
        %vm396 = vcmask 523264
        %v398 = vsel %vm396, %v390, 0
        %v401 = vsel %vm396, %v391, 0
        %v404 = vsel %vm396, %v392, 0
        %v407 = vsel %vm396, %v393, 0
        %409 = vmatpush.bf16.xpose.msra.mxu0 0
        %410 = vmatpush.bf16.xpose.msra.mxu0 0
        %411 = vmatpush.bf16.xpose.msra.mxu0 0
        %412 = vmatpush.bf16.xpose.msra.mxu0 0
        %413 = vmatpush.bf16.xpose.msra.mxu0 0
        %414 = vmatpush.bf16.xpose.msra.mxu0 0
        %415 = vmatpush.bf16.xpose.msra.mxu0 %v407
        %416 = vmatpush.bf16.xpose.msra.mxu0 %v404
        %417 = vmatmul.bf16.gmra.mxu0 %v398
        %v418 = vpop.f32.mrf.mxu0
        %v419 = vadd.f32 0.0, %v418
        %v420 = vpop.f32.mrf.mxu0
        %v421 = vadd.f32 0.0, %v420
        %422 = vmatmul.bf16.gmra.mxu0 %v401
        %v423 = vpop.f32.mrf.mxu0
        %v424 = vadd.f32 0.0, %v423
        %v425 = vpop.f32.mrf.mxu0
        %426 = vdwg.mxu0
        %vm427 = vcmask 138240
        %v428 = vsel %vm427, %v419, -inf
        %429 = vmax.xlane.f32.xlu0 %v428
        %v430 = vpop.xlane.xlu0 %429
        %v431 = vsel %vm427, %v421, -inf
        %432 = vmax.xlane.f32.xlu0 %v431
        %v433 = vpop.xlane.xlu0 %432
        %vm434 = vcmask 131072
        %v435 = vsel %vm434, %v424, -inf
        %436 = vmax.xlane.f32.xlu0 %v435
        %v437 = vpop.xlane.xlu0 %436
        %v438 = vsub.f32 %v419, %v430
        %v439 = vsub.f32 %v421, %v433
        %v440 = vsub.f32 %v424, %v437
        %v441 = vmul.f32 %v438, 1.442695
        %v442 = vpow.pop %v441
        %v443 = vmul.f32 %v439, 1.442695
        %v444 = vpow.pop %v443
        %v445 = vmul.f32 %v440, 1.442695
        %v446 = vpow.pop %v445
        %v447 = vsel %vm427, %v442, 0.0
        %448 = vadd.xlane.f32.xlu0 %v447
        %v449 = vpop.xlane.xlu0 %448
        %v450 = vsel %vm427, %v444, 0.0
        %451 = vadd.xlane.f32.xlu0 %v450
        %v452 = vpop.xlane.xlu0 %451
        %v453 = vsel %vm434, %v446, 0.0
        %454 = vadd.xlane.f32.xlu0 %v453
        %v455 = vpop.xlane.xlu0 %454
        %v456 = vrcp.pop %v449
        %v457 = vrcp.pop %v452
        %v458 = vrcp.pop %v455
        %v459 = vpack.c.bf16 %v444, %v442
        %v460 = vpack.c.bf16 %v446, %v446
        %v462 = vsel %vm427, %v459, 0
        %v465 = vsel %vm427, %v460, 0
        %vm467 = vcmask 1040384
        %v468 = vsel 0, 4294967295, 65535
        %v469 = vsel %vm467, %v468, 0
        %v471 = vand.u32 %v395, %v469
        %473 = vmatpush.bf16.msra.mxu0 0
        %474 = vmatpush.bf16.msra.mxu0 0
        %475 = vmatpush.bf16.msra.mxu0 0
        %476 = vmatpush.bf16.msra.mxu0 0
        %477 = vmatpush.bf16.msra.mxu0 0
        %478 = vmatpush.bf16.msra.mxu0 0
        %479 = vmatpush.bf16.msra.mxu0 %v471
        %480 = vmatpush.bf16.msra.mxu0 %v394
        %481 = vmatmul.bf16.gmra.mxu0 %v462
        %v482 = vpop.f32.mrf.mxu0
        %v483 = vadd.f32 0.0, %v482
        %v484 = vpop.f32.mrf.mxu0
        %v485 = vadd.f32 0.0, %v484
        %486 = vmatmul.bf16.gmra.mxu0 %v465
        %v487 = vpop.f32.mrf.mxu0
        %v488 = vadd.f32 0.0, %v487
        %v489 = vpop.f32.mrf.mxu0
        %490 = vdwg.mxu0
        %v491 = vmul.f32 %v483, %v456
        %v492 = vmul.f32 %v485, %v457
        %v493 = vmul.f32 %v488, %v458
        %494 = vst.msk [vmem:[%s379] sm:$0xff] %vm396, %v491
        %495 = vst.msk [vmem:[%s379 + $0x8] sm:$0xff] %vm396, %v492
        %vm496 = vcmask 516096
        %497 = vst.msk [vmem:[%s379 + $0x10] sm:$0x1] %vm496, %v493
        %500 = vrot.lane.b32.xlu0 %v390, 64
        %v501 = vpop.permute.xlu0 %500
        %502 = vrot.lane.b32.xlu0 %v391, 64
        %v503 = vpop.permute.xlu0 %502
        %506 = vrot.lane.b32.xlu0 %v392, 64
        %v507 = vpop.permute.xlu0 %506
        %508 = vrot.lane.b32.xlu0 %v393, 64
        %v509 = vpop.permute.xlu0 %508
        %v511 = vsel %vm396, %v501, 0
        %v514 = vsel %vm396, %v503, 0
        %v517 = vsel %vm396, %v507, 0
        %v520 = vsel %vm396, %v509, 0
        %522 = vmatpush.bf16.xpose.msra.mxu0 0
        %523 = vmatpush.bf16.xpose.msra.mxu0 0
        %524 = vmatpush.bf16.xpose.msra.mxu0 0
        %525 = vmatpush.bf16.xpose.msra.mxu0 0
        %526 = vmatpush.bf16.xpose.msra.mxu0 0
        %527 = vmatpush.bf16.xpose.msra.mxu0 0
        %528 = vmatpush.bf16.xpose.msra.mxu0 %v520
        %529 = vmatpush.bf16.xpose.msra.mxu0 %v517
        %530 = vmatmul.bf16.gmra.mxu0 %v511
        %v531 = vpop.f32.mrf.mxu0
        %v532 = vadd.f32 0.0, %v531
        %v533 = vpop.f32.mrf.mxu0
        %v534 = vadd.f32 0.0, %v533
        %535 = vmatmul.bf16.gmra.mxu0 %v514
        %v536 = vpop.f32.mrf.mxu0
        %v537 = vadd.f32 0.0, %v536
        %v538 = vpop.f32.mrf.mxu0
        %539 = vdwg.mxu0
        %v540 = vsel %vm427, %v532, -inf
        %541 = vmax.xlane.f32.xlu0 %v540
        %v542 = vpop.xlane.xlu0 %541
        %v543 = vsel %vm427, %v534, -inf
        %544 = vmax.xlane.f32.xlu0 %v543
        %v545 = vpop.xlane.xlu0 %544
        %v546 = vsel %vm434, %v537, -inf
        %547 = vmax.xlane.f32.xlu0 %v546
        %v548 = vpop.xlane.xlu0 %547
        %v549 = vsub.f32 %v532, %v542
        %v550 = vsub.f32 %v534, %v545
        %v551 = vsub.f32 %v537, %v548
        %v552 = vmul.f32 %v549, 1.442695
        %v553 = vpow.pop %v552
        %v554 = vmul.f32 %v550, 1.442695
        %v555 = vpow.pop %v554
        %v556 = vmul.f32 %v551, 1.442695
        %v557 = vpow.pop %v556
        %v558 = vsel %vm427, %v553, 0.0
        %559 = vadd.xlane.f32.xlu0 %v558
        %v560 = vpop.xlane.xlu0 %559
        %v561 = vsel %vm427, %v555, 0.0
        %562 = vadd.xlane.f32.xlu0 %v561
        %v563 = vpop.xlane.xlu0 %562
        %v564 = vsel %vm434, %v557, 0.0
        %565 = vadd.xlane.f32.xlu0 %v564
        %v566 = vpop.xlane.xlu0 %565
        %v567 = vrcp.pop %v560
        %v568 = vrcp.pop %v563
        %v569 = vrcp.pop %v566
        %v570 = vpack.c.bf16 %v555, %v553
        %v571 = vpack.c.bf16 %v557, %v557
        %574 = vrot.lane.b32.xlu0 %v394, 64
        %v575 = vpop.permute.xlu0 %574
        %576 = vrot.lane.b32.xlu0 %v395, 64
        %v577 = vpop.permute.xlu0 %576
        %v580 = vsel %vm427, %v570, 0
        %v583 = vsel %vm427, %v571, 0
        %v586 = vand.u32 %v577, %v469
        %588 = vmatpush.bf16.msra.mxu0 0
        %589 = vmatpush.bf16.msra.mxu0 0
        %590 = vmatpush.bf16.msra.mxu0 0
        %591 = vmatpush.bf16.msra.mxu0 0
        %592 = vmatpush.bf16.msra.mxu0 0
        %593 = vmatpush.bf16.msra.mxu0 0
        %594 = vmatpush.bf16.msra.mxu0 %v586
        %595 = vmatpush.bf16.msra.mxu0 %v575
        %596 = vmatmul.bf16.gmra.mxu0 %v580
        %v597 = vpop.f32.mrf.mxu0
        %v598 = vadd.f32 0.0, %v597
        %v599 = vpop.f32.mrf.mxu0
        %v600 = vadd.f32 0.0, %v599
        %601 = vmatmul.bf16.gmra.mxu0 %v583
        %v602 = vpop.f32.mrf.mxu0
        %v603 = vadd.f32 0.0, %v602
        %v604 = vpop.f32.mrf.mxu0
        %605 = vdwg.mxu0
        %v606 = vmul.f32 %v598, %v567
        %v607 = vmul.f32 %v600, %v568
        %v608 = vmul.f32 %v603, %v569
        %612 = vrot.lane.b32.xlu0 %v606, 64
        %v613 = vpop.permute.xlu0 %612
        %614 = vrot.lane.b32.xlu0 %v607, 64
        %v615 = vpop.permute.xlu0 %614
        %616 = vrot.lane.b32.xlu0 %v608, 64
        %v617 = vpop.permute.xlu0 %616
        %vm621 = vcmask 1048064
        %622 = vst.msk [vmem:[%s379] sm:$0xff] %vm621, %v613
        %623 = vst.msk [vmem:[%s379 + $0x8] sm:$0xff] %vm621, %v615
        %vm624 = vcmask 1040896
        %625 = vst.msk [vmem:[%s379 + $0x10] sm:$0x1] %vm624, %v617
        %p626 = scmp.lt.s32.totalorder %s18, 1
        %s627 = scalar_select %p626, %s18, 1
        %p628 = scmp.lt.s32.totalorder %s19, 0
        %s629 = scalar_select %p628, %s19, 0
        %s630 = smul.addr %s627, 3
        %s631 = sadd.s32 %s629, %s630
        %s632 = smul.addr %s631, 8
        %s633 = scalar_lea.vmem %s3, %s632
        // Predicated region
        $region147: #{deit_backbone_forward.60} parent=133 // pred_check
          %p634 = pneg %p134
        $region148: #{deit_backbone_forward.60} parent=133 // pred_check_branch
          %636 = sbr.rel (%p634) target = $region150
        $region149: #{deit_backbone_forward.60} parent=133 // pred_region
          _
        $region150: #{deit_backbone_forward.60} parent=133 // pred_fallthru
          _
      $region134: #{deit_backbone_forward.60} parent=5 // pred_fallthru
        _
      %p637 = scmp.le.s32.totalorder 2, %s9
      // Predicated region
      $region151: #{deit_backbone_forward.60} parent=5 // pred_check
        %p638 = pneg %p637
      $region152: #{deit_backbone_forward.60} parent=5 // pred_check_branch
        %640 = sbr.rel (%p638) target = $region154
      $region153: #{deit_backbone_forward.60} parent=5 // pred_region
        %s641 = ssub.s32 %s9, 2
        // Predicated region
        $region155: #{deit_backbone_forward.60} parent=153 // pred_check
          %p642 = pneg %p140
        $region156: #{deit_backbone_forward.60} parent=153 // pred_check_branch
          %644 = sbr.rel (%p642) target = $region158
        $region157: #{deit_backbone_forward.60} parent=153 // pred_region
          %p645 = scmp.lt.s32.totalorder %s20, 1
          %s646 = scalar_select %p645, %s20, 1
          %p647 = scmp.lt.s32.totalorder %s21, 0
          %s648 = scalar_select %p647, %s21, 0
          %s649 = smul.addr %s646, 3
          %s650 = sadd.s32 %s648, %s649
          %s651 = smul.addr %s650, 8
          %s652 = scalar_lea.vmem %s3, %s651
        $region158: #{deit_backbone_forward.60} parent=153 // pred_fallthru
          _
      $region154: #{deit_backbone_forward.60} parent=5 // pred_fallthru
        _
    $region6: #{deit_backbone_forward.60} parent=1 // loop_footer
      %s13 = sadd.s32 1, %s9
    $region7: #{deit_backbone_forward.60} parent=1 // loop_footer_branch
      %8 = sbr.rel target = $region3
    $region8: #{deit_backbone_forward.60} parent=1 // loop_exit
      _

// kernel: deit_backbone_forward.61
$region0: #{deit_backbone_forward.61}
  #allocation0 [shape = 'u32[]', space=smem, size = 0x4, offset = 0x4, fixed_abs, tag = 'smem constant byte address 0x4 - core index']
  #allocation1 [shape = 'u32[72,128]{1,0:T(1,128)}', space=vmem, size = 0x9000, scoped, tag = 'internal scratch']
  %s0 = inlined_call_operand.vmem [shape: f32[2,17,128], index: 0, kind: input, shape index: {}]
  %s1 = inlined_call_operand.vmem [shape: bf16[128,128], index: 1, kind: input, shape index: {}]
  %s2 = inlined_call_operand.vmem [shape: f32[1,128], index: 2, kind: input, shape index: {}]
  %s3 = inlined_call_operand.vmem [shape: f32[2,17,128], index: 3, kind: input, shape index: {}]
  %s4 = inlined_call_operand.vmem [shape: f32[2,17,128], index: 4, kind: output, shape index: {}]
  %s5 = sld [smem:[#allocation0]]
  $region49: #{deit_backbone_forward.61} parent=0
    _
  %s7 = ssub.s32 1, %s5
  %s8 = scalar_select 0, %s7, %s5
  loop: start=0, step=1, limit=4
  $region2: #{deit_backbone_forward.61} parent=0 // loop_pre_header
    _
  $region3: #{deit_backbone_forward.61} parent=0 // loop_header
    %s10 = sphi 0, %s14
    %p11 = scmp.ge.s32.totalorder %s10, 4
    %s20 = sphi 0, %s22
    %s23 = sphi 0, %s20
    %s24 = sphi 0, %s23
    %s40 = sphi 0, %s24
    %s44 = sphi 0, %s44
    %s46 = sphi 0, %s44
    %s47 = sphi 0, %s46
    %s61 = sphi 0, %s47
    %s65 = sphi 0, %s65
    %s67 = sphi 0, %s65
    %s68 = sphi 0, %s67
    %s82 = sphi 0, %s68
    %s88 = sphi 0, %s90
    %s91 = sphi 0, %s88
    %s92 = sphi 0, %s91
    %s108 = sphi 0, %s92
    %s114 = sphi 0, %s116
    %s117 = sphi 0, %s114
    %s118 = sphi 0, %s117
    %s134 = sphi 0, %s118
  $region4: #{deit_backbone_forward.61} parent=0 // loop_header_branch
    %13 = sbr.rel (%p11) target = $region8
  $region5: #{deit_backbone_forward.61} parent=0 // loop_body
    %s15 = ssub.s32 %s10, 1
    %s16 = ssub.s32 %s10, 2
    %s17 = sadd.s32 %s10, 1
    %s18 = ssub.s32 %s10, %s17
    %p19 = scmp.eq.s32.totalorder %s18, 0
    %s21 = sadd.s32 %s20, 1
    %s22 = scalar_select %p19, %s20, %s21
    %p25 = pneg %p19
    %p26 = scmp.eq.s32.totalorder %s10, 1
    %p27 = por %p25, %p26
    %p28 = scmp.ne.s32.totalorder %s20, %s23
    %p29 = scmp.eq.s32.totalorder %s10, 0
    %p30 = por %p28, %p29
    %p31 = scmp.ne.s32.totalorder %s20, %s23
    %p32 = scmp.eq.s32.totalorder %s15, 1
    %p33 = por %p31, %p32
    %p34 = scmp.ne.s32.totalorder %s23, %s24
    %p35 = scmp.eq.s32.totalorder %s15, 0
    %p36 = por %p34, %p35
    %p37 = scmp.ne.s32.totalorder %s23, %s24
    %p38 = scmp.eq.s32.totalorder %s16, 1
    %p39 = por %p37, %p38
    %p41 = scmp.ne.s32.totalorder %s24, %s40
    %p42 = scmp.eq.s32.totalorder %s16, 0
    %p43 = por %p41, %p42
    %s45 = sadd.s32 %s44, 1
    %p48 = scmp.eq.s32.totalorder %s10, 1
    %p49 = scmp.ne.s32.totalorder %s44, %s46
    %p50 = scmp.eq.s32.totalorder %s10, 0
    %p51 = por %p49, %p50
    %p52 = scmp.ne.s32.totalorder %s44, %s46
    %p53 = scmp.eq.s32.totalorder %s15, 1
    %p54 = por %p52, %p53
    %p55 = scmp.ne.s32.totalorder %s46, %s47
    %p56 = scmp.eq.s32.totalorder %s15, 0
    %p57 = por %p55, %p56
    %p58 = scmp.ne.s32.totalorder %s46, %s47
    %p59 = scmp.eq.s32.totalorder %s16, 1
    %p60 = por %p58, %p59
    %p62 = scmp.ne.s32.totalorder %s47, %s61
    %p63 = scmp.eq.s32.totalorder %s16, 0
    %p64 = por %p62, %p63
    %s66 = sadd.s32 %s65, 1
    %p69 = scmp.eq.s32.totalorder %s10, 1
    %p70 = scmp.ne.s32.totalorder %s65, %s67
    %p71 = scmp.eq.s32.totalorder %s10, 0
    %p72 = por %p70, %p71
    %p73 = scmp.ne.s32.totalorder %s65, %s67
    %p74 = scmp.eq.s32.totalorder %s15, 1
    %p75 = por %p73, %p74
    %p76 = scmp.ne.s32.totalorder %s67, %s68
    %p77 = scmp.eq.s32.totalorder %s15, 0
    %p78 = por %p76, %p77
    %p79 = scmp.ne.s32.totalorder %s67, %s68
    %p80 = scmp.eq.s32.totalorder %s16, 1
    %p81 = por %p79, %p80
    %p83 = scmp.ne.s32.totalorder %s68, %s82
    %p84 = scmp.eq.s32.totalorder %s16, 0
    %p85 = por %p83, %p84
    %s86 = ssub.s32 %s10, %s17
    %p87 = scmp.eq.s32.totalorder %s86, 0
    %s89 = sadd.s32 %s88, 1
    %s90 = scalar_select %p87, %s88, %s89
    %p93 = pneg %p87
    %p94 = scmp.eq.s32.totalorder %s10, 1
    %p95 = por %p93, %p94
    %p96 = scmp.ne.s32.totalorder %s88, %s91
    %p97 = scmp.eq.s32.totalorder %s10, 0
    %p98 = por %p96, %p97
    %p99 = scmp.ne.s32.totalorder %s88, %s91
    %p100 = scmp.eq.s32.totalorder %s15, 1
    %p101 = por %p99, %p100
    %p102 = scmp.ne.s32.totalorder %s91, %s92
    %p103 = scmp.eq.s32.totalorder %s15, 0
    %p104 = por %p102, %p103
    %p105 = scmp.ne.s32.totalorder %s91, %s92
    %p106 = scmp.eq.s32.totalorder %s16, 1
    %p107 = por %p105, %p106
    %p109 = scmp.ne.s32.totalorder %s92, %s108
    %p110 = scmp.eq.s32.totalorder %s16, 0
    %p111 = por %p109, %p110
    %s112 = ssub.s32 %s10, %s17
    %p113 = scmp.eq.s32.totalorder %s112, 0
    %s115 = sadd.s32 %s114, 1
    %s116 = scalar_select %p113, %s114, %s115
    %p119 = pneg %p113
    %p120 = scmp.eq.s32.totalorder %s10, 1
    %p121 = por %p119, %p120
    %p122 = scmp.ne.s32.totalorder %s114, %s117
    %p123 = scmp.eq.s32.totalorder %s10, 0
    %p124 = por %p122, %p123
    %p125 = scmp.ne.s32.totalorder %s114, %s117
    %p126 = scmp.eq.s32.totalorder %s15, 1
    %p127 = por %p125, %p126
    %p128 = scmp.ne.s32.totalorder %s117, %s118
    %p129 = scmp.eq.s32.totalorder %s15, 0
    %p130 = por %p128, %p129
    %p131 = scmp.ne.s32.totalorder %s117, %s118
    %p132 = scmp.eq.s32.totalorder %s16, 1
    %p133 = por %p131, %p132
    %p135 = scmp.ne.s32.totalorder %s118, %s134
    %p136 = scmp.eq.s32.totalorder %s16, 0
    %p137 = por %p135, %p136
    %p138 = scmp.le.s32.totalorder 1, %s10
    %p139 = scmp.lt.s32.totalorder %s10, 3
    %p140 = pnand %p138, %p139
    %p141 = pneg %p140
    // Predicated region
    $region9: #{deit_backbone_forward.61} parent=5 // pred_check
      _
    $region10: #{deit_backbone_forward.61} parent=5 // pred_check_branch
      %143 = sbr.rel (%p140) target = $region12
    $region11: #{deit_backbone_forward.61} parent=5 // pred_region
      %s144 = ssub.s32 %s10, 1
      // Predicated region
      $region13: #{deit_backbone_forward.61} parent=11 // pred_check
        %p145 = pneg %p57
      $region14: #{deit_backbone_forward.61} parent=11 // pred_check_branch
        %147 = sbr.rel (%p145) target = $region16
      $region15: #{deit_backbone_forward.61} parent=11 // pred_region
        _
      $region16: #{deit_backbone_forward.61} parent=11 // pred_fallthru
        _
      // Predicated region
      $region17: #{deit_backbone_forward.61} parent=11 // pred_check
        %p148 = pneg %p78
      $region18: #{deit_backbone_forward.61} parent=11 // pred_check_branch
        %150 = sbr.rel (%p148) target = $region20
      $region19: #{deit_backbone_forward.61} parent=11 // pred_region
        _
      $region20: #{deit_backbone_forward.61} parent=11 // pred_fallthru
        _
    $region12: #{deit_backbone_forward.61} parent=5 // pred_fallthru
      _
    %p151 = scmp.lt.s32.totalorder %s10, 2
    // Predicated region
    $region21: #{deit_backbone_forward.61} parent=5 // pred_check
      %p152 = pneg %p151
    $region22: #{deit_backbone_forward.61} parent=5 // pred_check_branch
      %154 = sbr.rel (%p152) target = $region24
    $region23: #{deit_backbone_forward.61} parent=5 // pred_region
      // Predicated region
      $region25: #{deit_backbone_forward.61} parent=23 // pred_check
        %p155 = pneg %p30
      $region26: #{deit_backbone_forward.61} parent=23 // pred_check_branch
        %157 = sbr.rel (%p155) target = $region28
      $region27: #{deit_backbone_forward.61} parent=23 // pred_region
        %p158 = scmp.lt.s32.totalorder %s10, 1
        %s159 = scalar_select %p158, %s10, 1
        %s160 = smul.addr %s159, 3
        %s161 = smul.addr %s160, 8
        %s162 = scalar_lea.vmem %s0, %s161
      $region28: #{deit_backbone_forward.61} parent=23 // pred_fallthru
        _
      // Predicated region
      $region29: #{deit_backbone_forward.61} parent=23 // pred_check
        %p163 = pneg %p98
      $region30: #{deit_backbone_forward.61} parent=23 // pred_check_branch
        %165 = sbr.rel (%p163) target = $region32
      $region31: #{deit_backbone_forward.61} parent=23 // pred_region
        %p166 = scmp.lt.s32.totalorder %s10, 1
        %s167 = scalar_select %p166, %s10, 1
        %s168 = smul.addr %s167, 3
        %s169 = smul.addr %s168, 8
        %s170 = scalar_lea.vmem %s3, %s169
      $region32: #{deit_backbone_forward.61} parent=23 // pred_fallthru
        _
    $region24: #{deit_backbone_forward.61} parent=5 // pred_fallthru
      _
    %p171 = scmp.le.s32.totalorder 1, %s10
    %p172 = scmp.lt.s32.totalorder %s10, 3
    %p173 = pnand %p171, %p172
    %p174 = pneg %p173
    // Predicated region
    $region33: #{deit_backbone_forward.61} parent=5 // pred_check
      _
    $region34: #{deit_backbone_forward.61} parent=5 // pred_check_branch
      %176 = sbr.rel (%p173) target = $region36
    $region35: #{deit_backbone_forward.61} parent=5 // pred_region
      %s177 = ssub.s32 %s10, 1
      %p178 = scmp.lt.s32.totalorder %s15, 1
      %s179 = scalar_select %p178, %s15, 1
      %s180 = smul.addr %s179, 3
      %s181 = smul.addr %s180, 8
      %s182 = scalar_lea.vmem %s0, %s181
      %p183 = pneg %p36
      %p184 = pneg %p33
      %p185 = pneg %p57
      %p186 = pneg %p54
      %p187 = pneg %p78
      %p188 = pneg %p75
      %p189 = scmp.lt.s32.totalorder %s15, 1
      %s190 = scalar_select %p189, %s15, 1
      %s191 = smul.addr %s190, 3
      %s192 = smul.addr %s191, 8
      %s193 = scalar_lea.vmem %s3, %s192
      %p194 = pneg %p104
      %p195 = pneg %p101
      %p196 = pneg %p130
      %p197 = pneg %p127
      %p198 = scmp.lt.s32.totalorder %s15, 1
      %s199 = scalar_select %p198, %s15, 1
      %s200 = smul.addr %s199, 3
      %s201 = smul.addr %s200, 8
      %s202 = scalar_lea.vmem %s4, %s201
      %p203 = scmp.lt.s32.totalorder %s15, 1
      %s204 = scalar_select %p203, %s15, 1
      %s205 = smul.addr %s204, 3
      %s206 = smul.addr %s205, 8
      %s207 = scalar_lea.vmem %s0, %s206
      %p208 = scmp.lt.s32.totalorder %s15, 1
      %s209 = scalar_select %p208, %s15, 1
      %s210 = smul.addr %s209, 3
      %s211 = smul.addr %s210, 8
      %s212 = scalar_lea.vmem %s3, %s211
      %p213 = scmp.lt.s32.totalorder %s15, 1
      %s214 = scalar_select %p213, %s15, 1
      %s215 = smul.addr %s214, 3
      %s216 = smul.addr %s215, 8
      %s217 = scalar_lea.vmem %s4, %s216
      %v218 = vld [vmem:[%s212] sm:$0xff]
      %v219 = vld [vmem:[%s212 + $0x8] sm:$0xff]
      %v220 = vld [vmem:[%s212 + $0x10] sm:$0x1]
      %v221 = vld [vmem:[%s2] sm:$0x1]
      %v223 = vperm.slane %v221, 0
      %v225 = vadd.f32 %v218, %v223
      %v226 = vadd.f32 %v219, %v223
      %v227 = vadd.f32 %v220, %v223
      %v228 = vld [vmem:[%s207] sm:$0xff]
      %v229 = vld [vmem:[%s207 + $0x8] sm:$0xff]
      %v230 = vld [vmem:[%s207 + $0x10] sm:$0x1]
      %v231 = vpack.c.bf16 %v229, %v228
      %v232 = vpack.c.bf16 %v230, %v230
      %v233 = vld [vmem:[%s1] sm:$0xf]
      %v234 = vld [vmem:[%s1 + $0x4] sm:$0xf]
      %v235 = vld [vmem:[%s1 + $0x8] sm:$0xf]
      %v236 = vld [vmem:[%s1 + $0xc] sm:$0xf]
      %v237 = vld [vmem:[%s1 + $0x10] sm:$0xf]
      %v238 = vld [vmem:[%s1 + $0x14] sm:$0xf]
      %v239 = vld [vmem:[%s1 + $0x18] sm:$0xf]
      %v240 = vld [vmem:[%s1 + $0x1c] sm:$0xf]
      %v241 = vld [vmem:[%s1 + $0x20] sm:$0xf]
      %v242 = vld [vmem:[%s1 + $0x24] sm:$0xf]
      %v243 = vld [vmem:[%s1 + $0x28] sm:$0xf]
      %v244 = vld [vmem:[%s1 + $0x2c] sm:$0xf]
      %v245 = vld [vmem:[%s1 + $0x30] sm:$0xf]
      %v246 = vld [vmem:[%s1 + $0x34] sm:$0xf]
      %v247 = vld [vmem:[%s1 + $0x38] sm:$0xf]
      %v248 = vld [vmem:[%s1 + $0x3c] sm:$0xf]
      %v265 = vunpack.c.l.b16 %v233
      %v266 = vunpack.c.l.b16 %v234
      %v267 = vunpack.c.l.b16 %v235
      %v268 = vunpack.c.l.b16 %v236
      %v269 = vunpack.c.l.b16 %v237
      %v270 = vunpack.c.l.b16 %v238
      %v271 = vunpack.c.l.b16 %v239
      %v272 = vunpack.c.l.b16 %v240
      %v273 = vunpack.c.l.b16 %v241
      %v274 = vunpack.c.l.b16 %v242
      %v275 = vunpack.c.l.b16 %v243
      %v276 = vunpack.c.l.b16 %v244
      %v277 = vunpack.c.l.b16 %v245
      %v278 = vunpack.c.l.b16 %v246
      %v279 = vunpack.c.l.b16 %v247
      %v280 = vunpack.c.l.b16 %v248
      %v281 = vpack.c.b16 %v266, %v265
      %v282 = vpack.c.b16 %v268, %v267
      %v283 = vpack.c.b16 %v270, %v269
      %v284 = vpack.c.b16 %v272, %v271
      %v285 = vpack.c.b16 %v274, %v273
      %v286 = vpack.c.b16 %v276, %v275
      %v287 = vpack.c.b16 %v278, %v277
      %v288 = vpack.c.b16 %v280, %v279
      %297 = vmatpush.bf16.msra.mxu0 %v288
      %298 = vmatpush.bf16.msra.mxu0 %v287
      %299 = vmatpush.bf16.msra.mxu0 %v286
      %300 = vmatpush.bf16.msra.mxu0 %v285
      %301 = vmatpush.bf16.msra.mxu0 %v284
      %302 = vmatpush.bf16.msra.mxu0 %v283
      %303 = vmatpush.bf16.msra.mxu0 %v282
      %304 = vmatpush.bf16.msra.mxu0 %v281
      %305 = vmatmul.bf16.gmra.mxu0 %v231
      %v306 = vpop.f32.mrf.mxu0
      %v307 = vadd.f32 0.0, %v306
      %v308 = vpop.f32.mrf.mxu0
      %v309 = vadd.f32 0.0, %v308
      %310 = vmatmul.bf16.gmra.mxu0 %v232
      %v311 = vpop.f32.mrf.mxu0
      %v312 = vadd.f32 0.0, %v311
      %v313 = vpop.f32.mrf.mxu0
      %314 = vdwg.mxu0
      %v315 = vadd.f32 %v225, %v307
      %v316 = vadd.f32 %v226, %v309
      %v317 = vadd.f32 %v227, %v312
      %318 = vst [vmem:[%s217] sm:$0xff] %v315
      %319 = vst [vmem:[%s217 + $0x8] sm:$0xff] %v316
      %320 = vst [vmem:[%s217 + $0x10] sm:$0x1] %v317
      %p321 = scmp.lt.s32.totalorder %s15, 1
      %s322 = scalar_select %p321, %s15, 1
      %s323 = smul.addr %s322, 3
      %s324 = smul.addr %s323, 8
      %s325 = scalar_lea.vmem %s4, %s324
      // Predicated region
      $region37: #{deit_backbone_forward.61} parent=35 // pred_check
        %p326 = pneg %p127
      $region38: #{deit_backbone_forward.61} parent=35 // pred_check_branch
        %328 = sbr.rel (%p326) target = $region40
      $region39: #{deit_backbone_forward.61} parent=35 // pred_region
        _
      $region40: #{deit_backbone_forward.61} parent=35 // pred_fallthru
        _
    $region36: #{deit_backbone_forward.61} parent=5 // pred_fallthru
      _
    %p329 = scmp.le.s32.totalorder 2, %s10
    // Predicated region
    $region41: #{deit_backbone_forward.61} parent=5 // pred_check
      %p330 = pneg %p329
    $region42: #{deit_backbone_forward.61} parent=5 // pred_check_branch
      %332 = sbr.rel (%p330) target = $region44
    $region43: #{deit_backbone_forward.61} parent=5 // pred_region
      %s333 = ssub.s32 %s10, 2
      // Predicated region
      $region45: #{deit_backbone_forward.61} parent=43 // pred_check
        %p334 = pneg %p133
      $region46: #{deit_backbone_forward.61} parent=43 // pred_check_branch
        %336 = sbr.rel (%p334) target = $region48
      $region47: #{deit_backbone_forward.61} parent=43 // pred_region
        %p337 = scmp.lt.s32.totalorder %s16, 1
        %s338 = scalar_select %p337, %s16, 1
        %s339 = smul.addr %s338, 3
        %s340 = smul.addr %s339, 8
        %s341 = scalar_lea.vmem %s4, %s340
      $region48: #{deit_backbone_forward.61} parent=43 // pred_fallthru
        _
    $region44: #{deit_backbone_forward.61} parent=5 // pred_fallthru
      _
  $region6: #{deit_backbone_forward.61} parent=0 // loop_footer
    %s14 = sadd.s32 1, %s10
  $region7: #{deit_backbone_forward.61} parent=0 // loop_footer_branch
    %9 = sbr.rel target = $region3
  $region8: #{deit_backbone_forward.61} parent=0 // loop_exit
    _

// kernel: deit_backbone_forward.112
$region0: #{deit_backbone_forward.112}
  #allocation0 [shape = 'u32[]', space=smem, size = 0x4, offset = 0x4, fixed_abs, tag = 'smem constant byte address 0x4 - core index']
  #allocation1 [shape = 'u32[72,128]{1,0:T(1,128)}', space=vmem, size = 0x9000, scoped, tag = 'internal scratch']
  %s0 = inlined_call_operand.vmem [shape: f32[2,17,128], index: 0, kind: input, shape index: {}]
  %s1 = inlined_call_operand.vmem [shape: f32[1,128], index: 1, kind: input, shape index: {}]
  %s2 = inlined_call_operand.vmem [shape: f32[1,128], index: 2, kind: input, shape index: {}]
  %s3 = inlined_call_operand.vmem [shape: f32[2,17,128], index: 3, kind: output, shape index: {}]
  %s4 = sld [smem:[#allocation0]]
  $region45: #{deit_backbone_forward.112} parent=0
    _
  %s6 = ssub.s32 1, %s4
  %s7 = scalar_select 0, %s6, %s4
  loop: start=0, step=1, limit=4
  $region2: #{deit_backbone_forward.112} parent=0 // loop_pre_header
    _
  $region3: #{deit_backbone_forward.112} parent=0 // loop_header
    %s9 = sphi 0, %s13
    %p10 = scmp.ge.s32.totalorder %s9, 4
    %s19 = sphi 0, %s21
    %s22 = sphi 0, %s19
    %s23 = sphi 0, %s22
    %s39 = sphi 0, %s23
    %s43 = sphi 0, %s43
    %s45 = sphi 0, %s43
    %s46 = sphi 0, %s45
    %s60 = sphi 0, %s46
    %s64 = sphi 0, %s64
    %s66 = sphi 0, %s64
    %s67 = sphi 0, %s66
    %s81 = sphi 0, %s67
    %s87 = sphi 0, %s89
    %s90 = sphi 0, %s87
    %s91 = sphi 0, %s90
    %s107 = sphi 0, %s91
  $region4: #{deit_backbone_forward.112} parent=0 // loop_header_branch
    %12 = sbr.rel (%p10) target = $region8
  $region5: #{deit_backbone_forward.112} parent=0 // loop_body
    %s14 = ssub.s32 %s9, 1
    %s15 = ssub.s32 %s9, 2
    %s16 = sadd.s32 %s9, 1
    %s17 = ssub.s32 %s9, %s16
    %p18 = scmp.eq.s32.totalorder %s17, 0
    %s20 = sadd.s32 %s19, 1
    %s21 = scalar_select %p18, %s19, %s20
    %p24 = pneg %p18
    %p25 = scmp.eq.s32.totalorder %s9, 1
    %p26 = por %p24, %p25
    %p27 = scmp.ne.s32.totalorder %s19, %s22
    %p28 = scmp.eq.s32.totalorder %s9, 0
    %p29 = por %p27, %p28
    %p30 = scmp.ne.s32.totalorder %s19, %s22
    %p31 = scmp.eq.s32.totalorder %s14, 1
    %p32 = por %p30, %p31
    %p33 = scmp.ne.s32.totalorder %s22, %s23
    %p34 = scmp.eq.s32.totalorder %s14, 0
    %p35 = por %p33, %p34
    %p36 = scmp.ne.s32.totalorder %s22, %s23
    %p37 = scmp.eq.s32.totalorder %s15, 1
    %p38 = por %p36, %p37
    %p40 = scmp.ne.s32.totalorder %s23, %s39
    %p41 = scmp.eq.s32.totalorder %s15, 0
    %p42 = por %p40, %p41
    %s44 = sadd.s32 %s43, 1
    %p47 = scmp.eq.s32.totalorder %s9, 1
    %p48 = scmp.ne.s32.totalorder %s43, %s45
    %p49 = scmp.eq.s32.totalorder %s9, 0
    %p50 = por %p48, %p49
    %p51 = scmp.ne.s32.totalorder %s43, %s45
    %p52 = scmp.eq.s32.totalorder %s14, 1
    %p53 = por %p51, %p52
    %p54 = scmp.ne.s32.totalorder %s45, %s46
    %p55 = scmp.eq.s32.totalorder %s14, 0
    %p56 = por %p54, %p55
    %p57 = scmp.ne.s32.totalorder %s45, %s46
    %p58 = scmp.eq.s32.totalorder %s15, 1
    %p59 = por %p57, %p58
    %p61 = scmp.ne.s32.totalorder %s46, %s60
    %p62 = scmp.eq.s32.totalorder %s15, 0
    %p63 = por %p61, %p62
    %s65 = sadd.s32 %s64, 1
    %p68 = scmp.eq.s32.totalorder %s9, 1
    %p69 = scmp.ne.s32.totalorder %s64, %s66
    %p70 = scmp.eq.s32.totalorder %s9, 0
    %p71 = por %p69, %p70
    %p72 = scmp.ne.s32.totalorder %s64, %s66
    %p73 = scmp.eq.s32.totalorder %s14, 1
    %p74 = por %p72, %p73
    %p75 = scmp.ne.s32.totalorder %s66, %s67
    %p76 = scmp.eq.s32.totalorder %s14, 0
    %p77 = por %p75, %p76
    %p78 = scmp.ne.s32.totalorder %s66, %s67
    %p79 = scmp.eq.s32.totalorder %s15, 1
    %p80 = por %p78, %p79
    %p82 = scmp.ne.s32.totalorder %s67, %s81
    %p83 = scmp.eq.s32.totalorder %s15, 0
    %p84 = por %p82, %p83
    %s85 = ssub.s32 %s9, %s16
    %p86 = scmp.eq.s32.totalorder %s85, 0
    %s88 = sadd.s32 %s87, 1
    %s89 = scalar_select %p86, %s87, %s88
    %p92 = pneg %p86
    %p93 = scmp.eq.s32.totalorder %s9, 1
    %p94 = por %p92, %p93
    %p95 = scmp.ne.s32.totalorder %s87, %s90
    %p96 = scmp.eq.s32.totalorder %s9, 0
    %p97 = por %p95, %p96
    %p98 = scmp.ne.s32.totalorder %s87, %s90
    %p99 = scmp.eq.s32.totalorder %s14, 1
    %p100 = por %p98, %p99
    %p101 = scmp.ne.s32.totalorder %s90, %s91
    %p102 = scmp.eq.s32.totalorder %s14, 0
    %p103 = por %p101, %p102
    %p104 = scmp.ne.s32.totalorder %s90, %s91
    %p105 = scmp.eq.s32.totalorder %s15, 1
    %p106 = por %p104, %p105
    %p108 = scmp.ne.s32.totalorder %s91, %s107
    %p109 = scmp.eq.s32.totalorder %s15, 0
    %p110 = por %p108, %p109
    %p111 = scmp.le.s32.totalorder 1, %s9
    %p112 = scmp.lt.s32.totalorder %s9, 3
    %p113 = pnand %p111, %p112
    %p114 = pneg %p113
    // Predicated region
    $region9: #{deit_backbone_forward.112} parent=5 // pred_check
      _
    $region10: #{deit_backbone_forward.112} parent=5 // pred_check_branch
      %116 = sbr.rel (%p113) target = $region12
    $region11: #{deit_backbone_forward.112} parent=5 // pred_region
      %s117 = ssub.s32 %s9, 1
      // Predicated region
      $region13: #{deit_backbone_forward.112} parent=11 // pred_check
        %p118 = pneg %p56
      $region14: #{deit_backbone_forward.112} parent=11 // pred_check_branch
        %120 = sbr.rel (%p118) target = $region16
      $region15: #{deit_backbone_forward.112} parent=11 // pred_region
        _
      $region16: #{deit_backbone_forward.112} parent=11 // pred_fallthru
        _
      // Predicated region
      $region17: #{deit_backbone_forward.112} parent=11 // pred_check
        %p121 = pneg %p77
      $region18: #{deit_backbone_forward.112} parent=11 // pred_check_branch
        %123 = sbr.rel (%p121) target = $region20
      $region19: #{deit_backbone_forward.112} parent=11 // pred_region
        _
      $region20: #{deit_backbone_forward.112} parent=11 // pred_fallthru
        _
    $region12: #{deit_backbone_forward.112} parent=5 // pred_fallthru
      _
    %p124 = scmp.lt.s32.totalorder %s9, 2
    // Predicated region
    $region21: #{deit_backbone_forward.112} parent=5 // pred_check
      %p125 = pneg %p124
    $region22: #{deit_backbone_forward.112} parent=5 // pred_check_branch
      %127 = sbr.rel (%p125) target = $region24
    $region23: #{deit_backbone_forward.112} parent=5 // pred_region
      // Predicated region
      $region25: #{deit_backbone_forward.112} parent=23 // pred_check
        %p128 = pneg %p29
      $region26: #{deit_backbone_forward.112} parent=23 // pred_check_branch
        %130 = sbr.rel (%p128) target = $region28
      $region27: #{deit_backbone_forward.112} parent=23 // pred_region
        %p131 = scmp.lt.s32.totalorder %s9, 1
        %s132 = scalar_select %p131, %s9, 1
        %s133 = smul.addr %s132, 3
        %s134 = smul.addr %s133, 8
        %s135 = scalar_lea.vmem %s0, %s134
      $region28: #{deit_backbone_forward.112} parent=23 // pred_fallthru
        _
    $region24: #{deit_backbone_forward.112} parent=5 // pred_fallthru
      _
    %p136 = scmp.le.s32.totalorder 1, %s9
    %p137 = scmp.lt.s32.totalorder %s9, 3
    %p138 = pnand %p136, %p137
    %p139 = pneg %p138
    // Predicated region
    $region29: #{deit_backbone_forward.112} parent=5 // pred_check
      _
    $region30: #{deit_backbone_forward.112} parent=5 // pred_check_branch
      %141 = sbr.rel (%p138) target = $region32
    $region31: #{deit_backbone_forward.112} parent=5 // pred_region
      %s142 = ssub.s32 %s9, 1
      %p143 = scmp.lt.s32.totalorder %s14, 1
      %s144 = scalar_select %p143, %s14, 1
      %s145 = smul.addr %s144, 3
      %s146 = smul.addr %s145, 8
      %s147 = scalar_lea.vmem %s0, %s146
      %p148 = pneg %p35
      %p149 = pneg %p32
      %p150 = pneg %p56
      %p151 = pneg %p53
      %p152 = pneg %p77
      %p153 = pneg %p74
      %p154 = pneg %p103
      %p155 = pneg %p100
      %p156 = scmp.lt.s32.totalorder %s14, 1
      %s157 = scalar_select %p156, %s14, 1
      %s158 = smul.addr %s157, 3
      %s159 = smul.addr %s158, 8
      %s160 = scalar_lea.vmem %s3, %s159
      %p161 = scmp.lt.s32.totalorder %s14, 1
      %s162 = scalar_select %p161, %s14, 1
      %s163 = smul.addr %s162, 3
      %s164 = smul.addr %s163, 8
      %s165 = scalar_lea.vmem %s0, %s164
      %p166 = scmp.lt.s32.totalorder %s14, 1
      %s167 = scalar_select %p166, %s14, 1
      %s168 = smul.addr %s167, 3
      %s169 = smul.addr %s168, 8
      %s170 = scalar_lea.vmem %s3, %s169
      %v171 = vld [vmem:[%s165] sm:$0xff]
      %v172 = vld [vmem:[%s165 + $0x8] sm:$0xff]
      %v173 = vld [vmem:[%s165 + $0x10] sm:$0x1]
      %v174 = vld [vmem:[%s1] sm:$0x1]
      %v175 = vld [vmem:[%s2] sm:$0x1]
      %176 = vadd.xlane.f32.xlu0 %v171
      %v177 = vpop.xlane.xlu0 %176
      %178 = vadd.xlane.f32.xlu0 %v172
      %v179 = vpop.xlane.xlu0 %178
      %vm180 = vcmask 1040384
      %v181 = vsel %vm180, %v173, 0.0
      %182 = vadd.xlane.f32.xlu0 %v181
      %v183 = vpop.xlane.xlu0 %182
      %v184 = vrcp.pop 128.0
      %v185 = vmul.f32 128.0, %v184
      %v186 = vsub.f32 1.0, %v185
      %v187 = vmul.f32 %v184, %v186
      %v188 = vadd.f32 %v184, %v187
      %vm189 = vweird.f32 %v184
      %v190 = vsel %vm189, %v184, %v188
      %v191 = vmul.f32 %v177, %v190
      %v192 = vmul.f32 %v179, %v190
      %v193 = vmul.f32 %v183, %v190
      %v194 = vsub.f32 %v171, %v191
      %v195 = vsub.f32 %v172, %v192
      %v196 = vsub.f32 %v173, %v193
      %v197 = vmul.f32 %v194, %v194
      %v198 = vmul.f32 %v195, %v195
      %v199 = vmul.f32 %v196, %v196
      %200 = vadd.xlane.f32.xlu0 %v197
      %v201 = vpop.xlane.xlu0 %200
      %202 = vadd.xlane.f32.xlu0 %v198
      %v203 = vpop.xlane.xlu0 %202
      %v204 = vsel %vm180, %v199, 0.0
      %205 = vadd.xlane.f32.xlu0 %v204
      %v206 = vpop.xlane.xlu0 %205
      %v207 = vmul.f32 %v201, %v190
      %v208 = vmul.f32 %v203, %v190
      %v209 = vmul.f32 %v206, %v190
      %v210 = vadd.f32 %v207, 1e-06
      %v211 = vadd.f32 %v208, 1e-06
      %v212 = vadd.f32 %v209, 1e-06
      %v213 = vrsqrt.pop %v210
      %v214 = vmul.f32 %v213, %v210
      %v215 = vmul.f32 %v214, %v213
      %v216 = vmul.f32 0.5, %v215
      %v217 = vsub.f32 1.5, %v216
      %v218 = vmul.f32 %v213, %v217
      %vm219 = vweird.f32 %v210
      %vm220 = vweird.f32 %v213
      %vm221 = vmor %vm219, %vm220
      %v222 = vsel %vm221, %v213, %v218
      %v223 = vrsqrt.pop %v211
      %v224 = vmul.f32 %v223, %v211
      %v225 = vmul.f32 %v224, %v223
      %v226 = vmul.f32 0.5, %v225
      %v227 = vsub.f32 1.5, %v226
      %v228 = vmul.f32 %v223, %v227
      %vm229 = vweird.f32 %v211
      %vm230 = vweird.f32 %v223
      %vm231 = vmor %vm229, %vm230
      %v232 = vsel %vm231, %v223, %v228
      %v233 = vrsqrt.pop %v212
      %v234 = vmul.f32 %v233, %v212
      %v235 = vmul.f32 %v234, %v233
      %v236 = vmul.f32 0.5, %v235
      %v237 = vsub.f32 1.5, %v236
      %v238 = vmul.f32 %v233, %v237
      %vm239 = vweird.f32 %v212
      %vm240 = vweird.f32 %v233
      %vm241 = vmor %vm239, %vm240
      %v242 = vsel %vm241, %v233, %v238
      %v243 = vmul.f32 %v194, %v222
      %v244 = vmul.f32 %v195, %v232
      %v245 = vmul.f32 %v196, %v242
      %v247 = vperm.slane %v174, 0
      %v249 = vmul.f32 %v243, %v247
      %v250 = vmul.f32 %v244, %v247
      %v251 = vmul.f32 %v245, %v247
      %v253 = vperm.slane %v175, 0
      %v255 = vadd.f32 %v249, %v253
      %v256 = vadd.f32 %v250, %v253
      %v257 = vadd.f32 %v251, %v253
      %258 = vst [vmem:[%s170] sm:$0xff] %v255
      %259 = vst [vmem:[%s170 + $0x8] sm:$0xff] %v256
      %260 = vst [vmem:[%s170 + $0x10] sm:$0x1] %v257
      %p261 = scmp.lt.s32.totalorder %s14, 1
      %s262 = scalar_select %p261, %s14, 1
      %s263 = smul.addr %s262, 3
      %s264 = smul.addr %s263, 8
      %s265 = scalar_lea.vmem %s3, %s264
      // Predicated region
      $region33: #{deit_backbone_forward.112} parent=31 // pred_check
        %p266 = pneg %p100
      $region34: #{deit_backbone_forward.112} parent=31 // pred_check_branch
        %268 = sbr.rel (%p266) target = $region36
      $region35: #{deit_backbone_forward.112} parent=31 // pred_region
        _
      $region36: #{deit_backbone_forward.112} parent=31 // pred_fallthru
        _
    $region32: #{deit_backbone_forward.112} parent=5 // pred_fallthru
      _
    %p269 = scmp.le.s32.totalorder 2, %s9
    // Predicated region
    $region37: #{deit_backbone_forward.112} parent=5 // pred_check
      %p270 = pneg %p269
    $region38: #{deit_backbone_forward.112} parent=5 // pred_check_branch
      %272 = sbr.rel (%p270) target = $region40
    $region39: #{deit_backbone_forward.112} parent=5 // pred_region
      %s273 = ssub.s32 %s9, 2
      // Predicated region
      $region41: #{deit_backbone_forward.112} parent=39 // pred_check
        %p274 = pneg %p106
      $region42: #{deit_backbone_forward.112} parent=39 // pred_check_branch
        %276 = sbr.rel (%p274) target = $region44
      $region43: #{deit_backbone_forward.112} parent=39 // pred_region
        %p277 = scmp.lt.s32.totalorder %s15, 1
        %s278 = scalar_select %p277, %s15, 1
        %s279 = smul.addr %s278, 3
        %s280 = smul.addr %s279, 8
        %s281 = scalar_lea.vmem %s3, %s280
      $region44: #{deit_backbone_forward.112} parent=39 // pred_fallthru
        _
    $region40: #{deit_backbone_forward.112} parent=5 // pred_fallthru
      _
  $region6: #{deit_backbone_forward.112} parent=0 // loop_footer
    %s13 = sadd.s32 1, %s9
  $region7: #{deit_backbone_forward.112} parent=0 // loop_footer_branch
    %8 = sbr.rel target = $region3
  $region8: #{deit_backbone_forward.112} parent=0 // loop_exit
    _

// kernel: deit_backbone_forward.114
$region0: #{deit_backbone_forward.114}
  #allocation0 [shape = 'u32[]', space=smem, size = 0x4, offset = 0x4, fixed_abs, tag = 'smem constant byte address 0x4 - core index']
  #allocation1 [shape = 'u32[72,128]{1,0:T(1,128)}', space=vmem, size = 0x9000, scoped, tag = 'internal scratch']
  %s0 = inlined_call_operand.vmem [shape: f32[2,4,4,128], index: 0, kind: input, shape index: {}]
  %s1 = inlined_call_operand.hbm [shape: f32[2,4,128], index: 1, kind: output, shape index: {}]
  %s2 = sld [smem:[#allocation0]]
  $region37: #{deit_backbone_forward.114} parent=0
    _
  %s4 = ssub.s32 1, %s2
  %s5 = scalar_select 0, %s4, %s2
  $region1: #{deit_backbone_forward.114} parent=0
    #allocation2 [shape = 'u8[4096]{0}', space=vmem, size = 0x1000, scoped, tag = 'output window, operand 0']
    #allocation3 [shape = 's32[2]{0}', space=sflag, size = 0x8, scoped, tag = 'scoped memory for deit_backbone_forward.114']
    %6 = vsyncpa [#allocation3], 0
    %s7 = scalar_lea.sflag [#allocation3], 1
    %8 = vsyncpa %s7, 0
    loop: start=0, step=1, limit=4
    $region2: #{deit_backbone_forward.114} parent=1 // loop_pre_header
      _
    $region3: #{deit_backbone_forward.114} parent=1 // loop_header
      %s10 = sphi 0, %s14
      %p11 = scmp.ge.s32.totalorder %s10, 4
      %s20 = sphi 0, %s22
      %s23 = sphi 0, %s20
      %s24 = sphi 0, %s23
      %s40 = sphi 0, %s24
      %s46 = sphi 0, %s48
      %s49 = sphi 0, %s46
      %s50 = sphi 0, %s49
      %s66 = sphi 0, %s50
    $region4: #{deit_backbone_forward.114} parent=1 // loop_header_branch
      %13 = sbr.rel (%p11) target = $region8
    $region5: #{deit_backbone_forward.114} parent=1 // loop_body
      %s15 = ssub.s32 %s10, 1
      %s16 = ssub.s32 %s10, 2
      %s17 = sadd.s32 %s10, 1
      %s18 = ssub.s32 %s10, %s17
      %p19 = scmp.eq.s32.totalorder %s18, 0
      %s21 = sadd.s32 %s20, 1
      %s22 = scalar_select %p19, %s20, %s21
      %p25 = pneg %p19
      %p26 = scmp.eq.s32.totalorder %s10, 1
      %p27 = por %p25, %p26
      %p28 = scmp.ne.s32.totalorder %s20, %s23
      %p29 = scmp.eq.s32.totalorder %s10, 0
      %p30 = por %p28, %p29
      %p31 = scmp.ne.s32.totalorder %s20, %s23
      %p32 = scmp.eq.s32.totalorder %s15, 1
      %p33 = por %p31, %p32
      %p34 = scmp.ne.s32.totalorder %s23, %s24
      %p35 = scmp.eq.s32.totalorder %s15, 0
      %p36 = por %p34, %p35
      %p37 = scmp.ne.s32.totalorder %s23, %s24
      %p38 = scmp.eq.s32.totalorder %s16, 1
      %p39 = por %p37, %p38
      %p41 = scmp.ne.s32.totalorder %s24, %s40
      %p42 = scmp.eq.s32.totalorder %s16, 0
      %p43 = por %p41, %p42
      %s44 = ssub.s32 %s10, %s17
      %p45 = scmp.eq.s32.totalorder %s44, 0
      %s47 = sadd.s32 %s46, 1
      %s48 = scalar_select %p45, %s46, %s47
      %p51 = pneg %p45
      %p52 = scmp.eq.s32.totalorder %s10, 1
      %p53 = por %p51, %p52
      %p54 = scmp.ne.s32.totalorder %s46, %s49
      %p55 = scmp.eq.s32.totalorder %s10, 0
      %p56 = por %p54, %p55
      %p57 = scmp.ne.s32.totalorder %s46, %s49
      %p58 = scmp.eq.s32.totalorder %s15, 1
      %p59 = por %p57, %p58
      %p60 = scmp.ne.s32.totalorder %s49, %s50
      %p61 = scmp.eq.s32.totalorder %s15, 0
      %p62 = por %p60, %p61
      %p63 = scmp.ne.s32.totalorder %s49, %s50
      %p64 = scmp.eq.s32.totalorder %s16, 1
      %p65 = por %p63, %p64
      %p67 = scmp.ne.s32.totalorder %s50, %s66
      %p68 = scmp.eq.s32.totalorder %s16, 0
      %p69 = por %p67, %p68
      %p70 = scmp.le.s32.totalorder 1, %s10
      %p71 = scmp.lt.s32.totalorder %s10, 3
      %p72 = pnand %p70, %p71
      %p73 = pneg %p72
      // Predicated region
      $region9: #{deit_backbone_forward.114} parent=5 // pred_check
        _
      $region10: #{deit_backbone_forward.114} parent=5 // pred_check_branch
        %75 = sbr.rel (%p72) target = $region12
      $region11: #{deit_backbone_forward.114} parent=5 // pred_region
        %s76 = ssub.s32 %s10, 1
      $region12: #{deit_backbone_forward.114} parent=5 // pred_fallthru
        _
      %p77 = scmp.lt.s32.totalorder %s10, 2
      // Predicated region
      $region13: #{deit_backbone_forward.114} parent=5 // pred_check
        %p78 = pneg %p77
      $region14: #{deit_backbone_forward.114} parent=5 // pred_check_branch
        %80 = sbr.rel (%p78) target = $region16
      $region15: #{deit_backbone_forward.114} parent=5 // pred_region
        // Predicated region
        $region17: #{deit_backbone_forward.114} parent=15 // pred_check
          %p81 = pneg %p30
        $region18: #{deit_backbone_forward.114} parent=15 // pred_check_branch
          %83 = sbr.rel (%p81) target = $region20
        $region19: #{deit_backbone_forward.114} parent=15 // pred_region
          %p84 = scmp.lt.s32.totalorder %s10, 1
          %s85 = scalar_select %p84, %s10, 1
          %s86 = smul.addr %s85, 4
          %s87 = smul.addr %s86, 4
          %s88 = scalar_lea.vmem %s0, %s87
        $region20: #{deit_backbone_forward.114} parent=15 // pred_fallthru
          _
      $region16: #{deit_backbone_forward.114} parent=5 // pred_fallthru
        _
      %p89 = scmp.le.s32.totalorder 1, %s10
      %p90 = scmp.lt.s32.totalorder %s10, 3
      %p91 = pnand %p89, %p90
      %p92 = pneg %p91
      // Predicated region
      $region21: #{deit_backbone_forward.114} parent=5 // pred_check
        _
      $region22: #{deit_backbone_forward.114} parent=5 // pred_check_branch
        %94 = sbr.rel (%p91) target = $region24
      $region23: #{deit_backbone_forward.114} parent=5 // pred_region
        %s95 = ssub.s32 %s10, 1
        %p96 = scmp.lt.s32.totalorder %s15, 1
        %s97 = scalar_select %p96, %s15, 1
        %s98 = smul.addr %s97, 4
        %s99 = smul.addr %s98, 4
        %s100 = scalar_lea.vmem %s0, %s99
        %p101 = pneg %p36
        %p102 = pneg %p33
        %p103 = pneg %p62
        %p104 = pneg %p59
        %s105 = sand.u32 %s49, 1
        %s106 = scalar_lea.sflag [#allocation3], %s105
        %s107 = sand.u32 %s49, 1
        %s108 = smul.addr %s107, 4
        %s109 = scalar_lea.vmem [#allocation2], %s108
        %p110 = scmp.lt.s32.totalorder %s15, 1
        %s111 = scalar_select %p110, %s15, 1
        %s112 = smul.addr %s111, 4
        %s113 = smul.addr %s112, 4
        %s114 = scalar_lea.vmem %s0, %s113
        %v115 = vld [vmem:[%s114] sm:$0xf]
        %v116 = vld [vmem:[%s114 + $0x4] sm:$0xf]
        %v117 = vld [vmem:[%s114 + $0x8] sm:$0xf]
        %v118 = vld [vmem:[%s114 + $0xc] sm:$0xf]
        %vm119 = vcmask 1041408
        %v120 = vsel %vm119, %v115, -inf
        %v121 = vsel %vm119, %v116, -inf
        %v122 = vmax.f32 %v120, %v121
        %v123 = vsel %vm119, %v122, -inf
        %v124 = vrot.slane %v123, 4
        %v125 = vmax.f32 %v123, %v124
        %v126 = vrot.slane %v125, 2
        %v127 = vmax.f32 %v125, %v126
        %v128 = vrot.slane %v127, 1
        %v129 = vmax.f32 %v127, %v128
        %130 = vst [vmem:[%s109] sm:$0x1] %v129
        %vm131 = vcmask 1043458
        %v132 = vsel %vm131, %v115, -inf
        %v133 = vsel %vm131, %v116, -inf
        %v134 = vmax.f32 %v132, %v133
        %v135 = vsel %vm131, %v134, -inf
        %v136 = vrot.slane %v135, 4
        %v137 = vmax.f32 %v135, %v136
        %v138 = vrot.slane %v137, 2
        %v139 = vmax.f32 %v137, %v138
        %v140 = vrot.slane %v139, 1
        %v141 = vmax.f32 %v139, %v140
        %142 = vst [vmem:[%s109 + $0x1] sm:$0x1] %v141
        %v143 = vsel %vm119, %v117, -inf
        %v144 = vsel %vm119, %v118, -inf
        %v145 = vmax.f32 %v143, %v144
        %v146 = vsel %vm119, %v145, -inf
        %v147 = vrot.slane %v146, 4
        %v148 = vmax.f32 %v146, %v147
        %v149 = vrot.slane %v148, 2
        %v150 = vmax.f32 %v148, %v149
        %v151 = vrot.slane %v150, 1
        %v152 = vmax.f32 %v150, %v151
        %153 = vst [vmem:[%s109 + $0x2] sm:$0x1] %v152
        %v154 = vsel %vm131, %v117, -inf
        %v155 = vsel %vm131, %v118, -inf
        %v156 = vmax.f32 %v154, %v155
        %v157 = vsel %vm131, %v156, -inf
        %v158 = vrot.slane %v157, 4
        %v159 = vmax.f32 %v157, %v158
        %v160 = vrot.slane %v159, 2
        %v161 = vmax.f32 %v159, %v160
        %v162 = vrot.slane %v161, 1
        %v163 = vmax.f32 %v161, %v162
        %164 = vst [vmem:[%s109 + $0x3] sm:$0x1] %v163
        %s165 = sand.u32 %s49, 1
        %s166 = scalar_lea.sflag [#allocation3], %s165
        %s167 = sand.u32 %s49, 1
        %s168 = smul.addr %s167, 4
        %s169 = scalar_lea.vmem [#allocation2], %s168
        // Predicated region
        $region25: #{deit_backbone_forward.114} parent=23 // pred_check
          %p170 = pneg %p59
        $region26: #{deit_backbone_forward.114} parent=23 // pred_check_branch
          %172 = sbr.rel (%p170) target = $region28
        $region27: #{deit_backbone_forward.114} parent=23 // pred_region
          %174 = vsyncadd %s166, 0
          %s175 = smul.addr %s15, 4
          %s176 = scalar_lea.hbm %s1, %s175
          %s178 = sshll.u32 %s169, 4
          %s179 = int_to_ptr.vmem [resolvable:$true] %s178
          %s180 = sshll.u32 %s176, 4
          %s181 = int_to_ptr.hbm [resolvable:$true] %s180
          %183 = dma.vmem_to_hbm [thread:$0]  %s179, 64, %s181, %s166
        $region28: #{deit_backbone_forward.114} parent=23 // pred_fallthru
          _
      $region24: #{deit_backbone_forward.114} parent=5 // pred_fallthru
        _
      %p184 = scmp.le.s32.totalorder 2, %s10
      // Predicated region
      $region29: #{deit_backbone_forward.114} parent=5 // pred_check
        %p185 = pneg %p184
      $region30: #{deit_backbone_forward.114} parent=5 // pred_check_branch
        %187 = sbr.rel (%p185) target = $region32
      $region31: #{deit_backbone_forward.114} parent=5 // pred_region
        %s188 = ssub.s32 %s10, 2
        // Predicated region
        $region33: #{deit_backbone_forward.114} parent=31 // pred_check
          %p189 = pneg %p65
        $region34: #{deit_backbone_forward.114} parent=31 // pred_check_branch
          %191 = sbr.rel (%p189) target = $region36
        $region35: #{deit_backbone_forward.114} parent=31 // pred_region
          %s192 = sand.u32 %s50, 1
          %s193 = scalar_lea.sflag [#allocation3], %s192
          %s194 = sand.u32 %s50, 1
          %s195 = smul.addr %s194, 4
          %s196 = scalar_lea.vmem [#allocation2], %s195
          %198 = dma.done %s193, 64
        $region36: #{deit_backbone_forward.114} parent=31 // pred_fallthru
          _
      $region32: #{deit_backbone_forward.114} parent=5 // pred_fallthru
        _
    $region6: #{deit_backbone_forward.114} parent=1 // loop_footer
      %s14 = sadd.s32 1, %s10
    $region7: #{deit_backbone_forward.114} parent=1 // loop_footer_branch
      %9 = sbr.rel target = $region3
    $region8: #{deit_backbone_forward.114} parent=1 // loop_exit
      _
    %199 = vsyncpa [#allocation3], 1
    %s200 = scalar_lea.sflag [#allocation3], 1
    %201 = vsyncpa %s200, 1

// kernel: deit_backbone_forward.113
$region0: #{deit_backbone_forward.113}
  #allocation0 [shape = 'u32[]', space=smem, size = 0x4, offset = 0x4, fixed_abs, tag = 'smem constant byte address 0x4 - core index']
  #allocation1 [shape = 'u32[72,128]{1,0:T(1,128)}', space=vmem, size = 0x9000, scoped, tag = 'internal scratch']
  %s0 = inlined_call_operand.vmem [shape: f32[2,4,4,128], index: 0, kind: input, shape index: {}]
  %s1 = inlined_call_operand.hbm [shape: f32[2,16,128], index: 1, kind: output, shape index: {}]
  %s2 = sld [smem:[#allocation0]]
  $region37: #{deit_backbone_forward.113} parent=0
    _
  %s4 = ssub.s32 1, %s2
  %s5 = scalar_select 0, %s4, %s2
  $region1: #{deit_backbone_forward.113} parent=0
    #allocation2 [shape = 'u8[16384]{0}', space=vmem, size = 0x4000, scoped, tag = 'output window, operand 0']
    #allocation3 [shape = 's32[2]{0}', space=sflag, size = 0x8, scoped, tag = 'scoped memory for deit_backbone_forward.113']
    %6 = vsyncpa [#allocation3], 0
    %s7 = scalar_lea.sflag [#allocation3], 1
    %8 = vsyncpa %s7, 0
    loop: start=0, step=1, limit=4
    $region2: #{deit_backbone_forward.113} parent=1 // loop_pre_header
      _
    $region3: #{deit_backbone_forward.113} parent=1 // loop_header
      %s10 = sphi 0, %s14
      %p11 = scmp.ge.s32.totalorder %s10, 4
      %s20 = sphi 0, %s22
      %s23 = sphi 0, %s20
      %s24 = sphi 0, %s23
      %s40 = sphi 0, %s24
      %s46 = sphi 0, %s48
      %s49 = sphi 0, %s46
      %s50 = sphi 0, %s49
      %s66 = sphi 0, %s50
    $region4: #{deit_backbone_forward.113} parent=1 // loop_header_branch
      %13 = sbr.rel (%p11) target = $region8
    $region5: #{deit_backbone_forward.113} parent=1 // loop_body
      %s15 = ssub.s32 %s10, 1
      %s16 = ssub.s32 %s10, 2
      %s17 = sadd.s32 %s10, 1
      %s18 = ssub.s32 %s10, %s17
      %p19 = scmp.eq.s32.totalorder %s18, 0
      %s21 = sadd.s32 %s20, 1
      %s22 = scalar_select %p19, %s20, %s21
      %p25 = pneg %p19
      %p26 = scmp.eq.s32.totalorder %s10, 1
      %p27 = por %p25, %p26
      %p28 = scmp.ne.s32.totalorder %s20, %s23
      %p29 = scmp.eq.s32.totalorder %s10, 0
      %p30 = por %p28, %p29
      %p31 = scmp.ne.s32.totalorder %s20, %s23
      %p32 = scmp.eq.s32.totalorder %s15, 1
      %p33 = por %p31, %p32
      %p34 = scmp.ne.s32.totalorder %s23, %s24
      %p35 = scmp.eq.s32.totalorder %s15, 0
      %p36 = por %p34, %p35
      %p37 = scmp.ne.s32.totalorder %s23, %s24
      %p38 = scmp.eq.s32.totalorder %s16, 1
      %p39 = por %p37, %p38
      %p41 = scmp.ne.s32.totalorder %s24, %s40
      %p42 = scmp.eq.s32.totalorder %s16, 0
      %p43 = por %p41, %p42
      %s44 = ssub.s32 %s10, %s17
      %p45 = scmp.eq.s32.totalorder %s44, 0
      %s47 = sadd.s32 %s46, 1
      %s48 = scalar_select %p45, %s46, %s47
      %p51 = pneg %p45
      %p52 = scmp.eq.s32.totalorder %s10, 1
      %p53 = por %p51, %p52
      %p54 = scmp.ne.s32.totalorder %s46, %s49
      %p55 = scmp.eq.s32.totalorder %s10, 0
      %p56 = por %p54, %p55
      %p57 = scmp.ne.s32.totalorder %s46, %s49
      %p58 = scmp.eq.s32.totalorder %s15, 1
      %p59 = por %p57, %p58
      %p60 = scmp.ne.s32.totalorder %s49, %s50
      %p61 = scmp.eq.s32.totalorder %s15, 0
      %p62 = por %p60, %p61
      %p63 = scmp.ne.s32.totalorder %s49, %s50
      %p64 = scmp.eq.s32.totalorder %s16, 1
      %p65 = por %p63, %p64
      %p67 = scmp.ne.s32.totalorder %s50, %s66
      %p68 = scmp.eq.s32.totalorder %s16, 0
      %p69 = por %p67, %p68
      %p70 = scmp.le.s32.totalorder 1, %s10
      %p71 = scmp.lt.s32.totalorder %s10, 3
      %p72 = pnand %p70, %p71
      %p73 = pneg %p72
      // Predicated region
      $region9: #{deit_backbone_forward.113} parent=5 // pred_check
        _
      $region10: #{deit_backbone_forward.113} parent=5 // pred_check_branch
        %75 = sbr.rel (%p72) target = $region12
      $region11: #{deit_backbone_forward.113} parent=5 // pred_region
        %s76 = ssub.s32 %s10, 1
      $region12: #{deit_backbone_forward.113} parent=5 // pred_fallthru
        _
      %p77 = scmp.lt.s32.totalorder %s10, 2
      // Predicated region
      $region13: #{deit_backbone_forward.113} parent=5 // pred_check
        %p78 = pneg %p77
      $region14: #{deit_backbone_forward.113} parent=5 // pred_check_branch
        %80 = sbr.rel (%p78) target = $region16
      $region15: #{deit_backbone_forward.113} parent=5 // pred_region
        // Predicated region
        $region17: #{deit_backbone_forward.113} parent=15 // pred_check
          %p81 = pneg %p30
        $region18: #{deit_backbone_forward.113} parent=15 // pred_check_branch
          %83 = sbr.rel (%p81) target = $region20
        $region19: #{deit_backbone_forward.113} parent=15 // pred_region
          %p84 = scmp.lt.s32.totalorder %s10, 1
          %s85 = scalar_select %p84, %s10, 1
          %s86 = smul.addr %s85, 4
          %s87 = smul.addr %s86, 4
          %s88 = scalar_lea.vmem %s0, %s87
        $region20: #{deit_backbone_forward.113} parent=15 // pred_fallthru
          _
      $region16: #{deit_backbone_forward.113} parent=5 // pred_fallthru
        _
      %p89 = scmp.le.s32.totalorder 1, %s10
      %p90 = scmp.lt.s32.totalorder %s10, 3
      %p91 = pnand %p89, %p90
      %p92 = pneg %p91
      // Predicated region
      $region21: #{deit_backbone_forward.113} parent=5 // pred_check
        _
      $region22: #{deit_backbone_forward.113} parent=5 // pred_check_branch
        %94 = sbr.rel (%p91) target = $region24
      $region23: #{deit_backbone_forward.113} parent=5 // pred_region
        %s95 = ssub.s32 %s10, 1
        %p96 = scmp.lt.s32.totalorder %s15, 1
        %s97 = scalar_select %p96, %s15, 1
        %s98 = smul.addr %s97, 4
        %s99 = smul.addr %s98, 4
        %s100 = scalar_lea.vmem %s0, %s99
        %p101 = pneg %p36
        %p102 = pneg %p33
        %p103 = pneg %p62
        %p104 = pneg %p59
        %s105 = sand.u32 %s49, 1
        %s106 = scalar_lea.sflag [#allocation3], %s105
        %s107 = sand.u32 %s49, 1
        %s108 = smul.addr %s107, 16
        %s109 = scalar_lea.vmem [#allocation2], %s108
        %p110 = scmp.lt.s32.totalorder %s15, 1
        %s111 = scalar_select %p110, %s15, 1
        %s112 = smul.addr %s111, 4
        %s113 = smul.addr %s112, 4
        %s114 = scalar_lea.vmem %s0, %s113
        %v115 = vld [vmem:[%s114] sm:$0xf]
        %v116 = vld [vmem:[%s114 + $0x4] sm:$0xf]
        %v117 = vld [vmem:[%s114 + $0x8] sm:$0xf]
        %v118 = vld [vmem:[%s114 + $0xc] sm:$0xf]
        %119 = vst [vmem:[%s109] sm:$0x1] %v115
        %120 = vst [vmem:[%s109] sm:$0x2] %v115
        %121 = vst [vmem:[%s109] sm:$0x4] %v115
        %122 = vst [vmem:[%s109] sm:$0x8] %v115
        %123 = vst [vmem:[%s109 + $0x4] sm:$0x1] %v116
        %124 = vst [vmem:[%s109 + $0x4] sm:$0x2] %v116
        %125 = vst [vmem:[%s109 + $0x4] sm:$0x4] %v116
        %126 = vst [vmem:[%s109 + $0x4] sm:$0x8] %v116
        %127 = vst [vmem:[%s109 + $0x8] sm:$0x1] %v117
        %128 = vst [vmem:[%s109 + $0x8] sm:$0x2] %v117
        %129 = vst [vmem:[%s109 + $0x8] sm:$0x4] %v117
        %130 = vst [vmem:[%s109 + $0x8] sm:$0x8] %v117
        %131 = vst [vmem:[%s109 + $0xc] sm:$0x1] %v118
        %132 = vst [vmem:[%s109 + $0xc] sm:$0x2] %v118
        %133 = vst [vmem:[%s109 + $0xc] sm:$0x4] %v118
        %134 = vst [vmem:[%s109 + $0xc] sm:$0x8] %v118
        %s135 = sand.u32 %s49, 1
        %s136 = scalar_lea.sflag [#allocation3], %s135
        %s137 = sand.u32 %s49, 1
        %s138 = smul.addr %s137, 16
        %s139 = scalar_lea.vmem [#allocation2], %s138
        // Predicated region
        $region25: #{deit_backbone_forward.113} parent=23 // pred_check
          %p140 = pneg %p59
        $region26: #{deit_backbone_forward.113} parent=23 // pred_check_branch
          %142 = sbr.rel (%p140) target = $region28
        $region27: #{deit_backbone_forward.113} parent=23 // pred_region
          %144 = vsyncadd %s136, 0
          %s145 = smul.addr %s15, 2
          %s146 = smul.addr %s145, 8
          %s147 = scalar_lea.hbm %s1, %s146
          %s148 = sshll.u32 %s139, 4
          %s149 = int_to_ptr.vmem [resolvable:$true] %s148
          %s150 = sshll.u32 %s147, 4
          %s151 = int_to_ptr.hbm [resolvable:$true] %s150
          %156 = dma.vmem_to_hbm [thread:$0]  %s149, 256, %s151, %s136, 128, 128, 8
        $region28: #{deit_backbone_forward.113} parent=23 // pred_fallthru
          _
      $region24: #{deit_backbone_forward.113} parent=5 // pred_fallthru
        _
      %p157 = scmp.le.s32.totalorder 2, %s10
      // Predicated region
      $region29: #{deit_backbone_forward.113} parent=5 // pred_check
        %p158 = pneg %p157
      $region30: #{deit_backbone_forward.113} parent=5 // pred_check_branch
        %160 = sbr.rel (%p158) target = $region32
      $region31: #{deit_backbone_forward.113} parent=5 // pred_region
        %s161 = ssub.s32 %s10, 2
        // Predicated region
        $region33: #{deit_backbone_forward.113} parent=31 // pred_check
          %p162 = pneg %p65
        $region34: #{deit_backbone_forward.113} parent=31 // pred_check_branch
          %164 = sbr.rel (%p162) target = $region36
        $region35: #{deit_backbone_forward.113} parent=31 // pred_region
          %s165 = sand.u32 %s50, 1
          %s166 = scalar_lea.sflag [#allocation3], %s165
          %s167 = sand.u32 %s50, 1
          %s168 = smul.addr %s167, 16
          %s169 = scalar_lea.vmem [#allocation2], %s168
          %171 = dma.done %s166, 256
        $region36: #{deit_backbone_forward.113} parent=31 // pred_fallthru
          _
      $region32: #{deit_backbone_forward.113} parent=5 // pred_fallthru
        _
    $region6: #{deit_backbone_forward.113} parent=1 // loop_footer
      %s14 = sadd.s32 1, %s10
    $region7: #{deit_backbone_forward.113} parent=1 // loop_footer_branch
      %9 = sbr.rel target = $region3
    $region8: #{deit_backbone_forward.113} parent=1 // loop_exit
      _
    %172 = vsyncpa [#allocation3], 1
    %s173 = scalar_lea.sflag [#allocation3], 1
    %174 = vsyncpa %s173, 1

// kernel: deit_backbone_forward.115
$region0: #{deit_backbone_forward.115}
  #allocation0 [shape = 'u32[]', space=smem, size = 0x4, offset = 0x4, fixed_abs, tag = 'smem constant byte address 0x4 - core index']
  #allocation1 [shape = 'u32[72,128]{1,0:T(1,128)}', space=vmem, size = 0x9000, scoped, tag = 'internal scratch']
  %s0 = inlined_call_operand.vmem [shape: f32[2,4,4,128], index: 0, kind: input, shape index: {}]
  %s1 = inlined_call_operand.hbm [shape: f32[2,1,128], index: 1, kind: output, shape index: {}]
  %s2 = sld [smem:[#allocation0]]
  $region37: #{deit_backbone_forward.115} parent=0
    _
  %s4 = ssub.s32 1, %s2
  %s5 = scalar_select 0, %s4, %s2
  $region1: #{deit_backbone_forward.115} parent=0
    #allocation2 [shape = 'u8[1024]{0}', space=vmem, size = 0x400, scoped, tag = 'output window, operand 0']
    #allocation3 [shape = 's32[2]{0}', space=sflag, size = 0x8, scoped, tag = 'scoped memory for deit_backbone_forward.115']
    %6 = vsyncpa [#allocation3], 0
    %s7 = scalar_lea.sflag [#allocation3], 1
    %8 = vsyncpa %s7, 0
    loop: start=0, step=1, limit=4
    $region2: #{deit_backbone_forward.115} parent=1 // loop_pre_header
      _
    $region3: #{deit_backbone_forward.115} parent=1 // loop_header
      %s10 = sphi 0, %s14
      %p11 = scmp.ge.s32.totalorder %s10, 4
      %s20 = sphi 0, %s22
      %s23 = sphi 0, %s20
      %s24 = sphi 0, %s23
      %s40 = sphi 0, %s24
      %s46 = sphi 0, %s48
      %s49 = sphi 0, %s46
      %s50 = sphi 0, %s49
      %s66 = sphi 0, %s50
    $region4: #{deit_backbone_forward.115} parent=1 // loop_header_branch
      %13 = sbr.rel (%p11) target = $region8
    $region5: #{deit_backbone_forward.115} parent=1 // loop_body
      %s15 = ssub.s32 %s10, 1
      %s16 = ssub.s32 %s10, 2
      %s17 = sadd.s32 %s10, 1
      %s18 = ssub.s32 %s10, %s17
      %p19 = scmp.eq.s32.totalorder %s18, 0
      %s21 = sadd.s32 %s20, 1
      %s22 = scalar_select %p19, %s20, %s21
      %p25 = pneg %p19
      %p26 = scmp.eq.s32.totalorder %s10, 1
      %p27 = por %p25, %p26
      %p28 = scmp.ne.s32.totalorder %s20, %s23
      %p29 = scmp.eq.s32.totalorder %s10, 0
      %p30 = por %p28, %p29
      %p31 = scmp.ne.s32.totalorder %s20, %s23
      %p32 = scmp.eq.s32.totalorder %s15, 1
      %p33 = por %p31, %p32
      %p34 = scmp.ne.s32.totalorder %s23, %s24
      %p35 = scmp.eq.s32.totalorder %s15, 0
      %p36 = por %p34, %p35
      %p37 = scmp.ne.s32.totalorder %s23, %s24
      %p38 = scmp.eq.s32.totalorder %s16, 1
      %p39 = por %p37, %p38
      %p41 = scmp.ne.s32.totalorder %s24, %s40
      %p42 = scmp.eq.s32.totalorder %s16, 0
      %p43 = por %p41, %p42
      %s44 = ssub.s32 %s10, %s17
      %p45 = scmp.eq.s32.totalorder %s44, 0
      %s47 = sadd.s32 %s46, 1
      %s48 = scalar_select %p45, %s46, %s47
      %p51 = pneg %p45
      %p52 = scmp.eq.s32.totalorder %s10, 1
      %p53 = por %p51, %p52
      %p54 = scmp.ne.s32.totalorder %s46, %s49
      %p55 = scmp.eq.s32.totalorder %s10, 0
      %p56 = por %p54, %p55
      %p57 = scmp.ne.s32.totalorder %s46, %s49
      %p58 = scmp.eq.s32.totalorder %s15, 1
      %p59 = por %p57, %p58
      %p60 = scmp.ne.s32.totalorder %s49, %s50
      %p61 = scmp.eq.s32.totalorder %s15, 0
      %p62 = por %p60, %p61
      %p63 = scmp.ne.s32.totalorder %s49, %s50
      %p64 = scmp.eq.s32.totalorder %s16, 1
      %p65 = por %p63, %p64
      %p67 = scmp.ne.s32.totalorder %s50, %s66
      %p68 = scmp.eq.s32.totalorder %s16, 0
      %p69 = por %p67, %p68
      %p70 = scmp.le.s32.totalorder 1, %s10
      %p71 = scmp.lt.s32.totalorder %s10, 3
      %p72 = pnand %p70, %p71
      %p73 = pneg %p72
      // Predicated region
      $region9: #{deit_backbone_forward.115} parent=5 // pred_check
        _
      $region10: #{deit_backbone_forward.115} parent=5 // pred_check_branch
        %75 = sbr.rel (%p72) target = $region12
      $region11: #{deit_backbone_forward.115} parent=5 // pred_region
        %s76 = ssub.s32 %s10, 1
      $region12: #{deit_backbone_forward.115} parent=5 // pred_fallthru
        _
      %p77 = scmp.lt.s32.totalorder %s10, 2
      // Predicated region
      $region13: #{deit_backbone_forward.115} parent=5 // pred_check
        %p78 = pneg %p77
      $region14: #{deit_backbone_forward.115} parent=5 // pred_check_branch
        %80 = sbr.rel (%p78) target = $region16
      $region15: #{deit_backbone_forward.115} parent=5 // pred_region
        // Predicated region
        $region17: #{deit_backbone_forward.115} parent=15 // pred_check
          %p81 = pneg %p30
        $region18: #{deit_backbone_forward.115} parent=15 // pred_check_branch
          %83 = sbr.rel (%p81) target = $region20
        $region19: #{deit_backbone_forward.115} parent=15 // pred_region
          %p84 = scmp.lt.s32.totalorder %s10, 1
          %s85 = scalar_select %p84, %s10, 1
          %s86 = smul.addr %s85, 4
          %s87 = smul.addr %s86, 4
          %s88 = scalar_lea.vmem %s0, %s87
        $region20: #{deit_backbone_forward.115} parent=15 // pred_fallthru
          _
      $region16: #{deit_backbone_forward.115} parent=5 // pred_fallthru
        _
      %p89 = scmp.le.s32.totalorder 1, %s10
      %p90 = scmp.lt.s32.totalorder %s10, 3
      %p91 = pnand %p89, %p90
      %p92 = pneg %p91
      // Predicated region
      $region21: #{deit_backbone_forward.115} parent=5 // pred_check
        _
      $region22: #{deit_backbone_forward.115} parent=5 // pred_check_branch
        %94 = sbr.rel (%p91) target = $region24
      $region23: #{deit_backbone_forward.115} parent=5 // pred_region
        %s95 = ssub.s32 %s10, 1
        %p96 = scmp.lt.s32.totalorder %s15, 1
        %s97 = scalar_select %p96, %s15, 1
        %s98 = smul.addr %s97, 4
        %s99 = smul.addr %s98, 4
        %s100 = scalar_lea.vmem %s0, %s99
        %p101 = pneg %p36
        %p102 = pneg %p33
        %p103 = pneg %p62
        %p104 = pneg %p59
        %s105 = sand.u32 %s49, 1
        %s106 = scalar_lea.sflag [#allocation3], %s105
        %s107 = sand.u32 %s49, 1
        %s108 = scalar_lea.vmem [#allocation2], %s107
        %p109 = scmp.lt.s32.totalorder %s15, 1
        %s110 = scalar_select %p109, %s15, 1
        %s111 = smul.addr %s110, 4
        %s112 = smul.addr %s111, 4
        %s113 = scalar_lea.vmem %s0, %s112
        %v114 = vld [vmem:[%s113] sm:$0xf]
        %v115 = vld [vmem:[%s113 + $0x4] sm:$0xf]
        %v116 = vld [vmem:[%s113 + $0x8] sm:$0xf]
        %v117 = vld [vmem:[%s113 + $0xc] sm:$0xf]
        %vm118 = vcmask 1043456
        %v119 = vsel %vm118, %v114, -inf
        %v120 = vsel %vm118, %v115, -inf
        %v121 = vsel %vm118, %v116, -inf
        %v122 = vsel %vm118, %v117, -inf
        %v123 = vmax.f32 %v119, %v120
        %v124 = vmax.f32 %v121, %v122
        %v125 = vmax.f32 %v123, %v124
        %v126 = vsel %vm118, %v125, -inf
        %v127 = vrot.slane %v126, 4
        %v128 = vmax.f32 %v126, %v127
        %v129 = vrot.slane %v128, 2
        %v130 = vmax.f32 %v128, %v129
        %v131 = vrot.slane %v130, 1
        %v132 = vmax.f32 %v130, %v131
        %133 = vst [vmem:[%s108] sm:$0x1] %v132
        %s134 = sand.u32 %s49, 1
        %s135 = scalar_lea.sflag [#allocation3], %s134
        %s136 = sand.u32 %s49, 1
        %s137 = scalar_lea.vmem [#allocation2], %s136
        // Predicated region
        $region25: #{deit_backbone_forward.115} parent=23 // pred_check
          %p138 = pneg %p59
        $region26: #{deit_backbone_forward.115} parent=23 // pred_check_branch
          %140 = sbr.rel (%p138) target = $region28
        $region27: #{deit_backbone_forward.115} parent=23 // pred_region
          %142 = vsyncadd %s135, 0
          %s143 = scalar_lea.hbm %s1, %s15
          %s145 = sshll.u32 %s137, 4
          %s146 = int_to_ptr.vmem [resolvable:$true] %s145
          %s147 = sshll.u32 %s143, 4
          %s148 = int_to_ptr.hbm [resolvable:$true] %s147
          %150 = dma.vmem_to_hbm [thread:$0]  %s146, 16, %s148, %s135
        $region28: #{deit_backbone_forward.115} parent=23 // pred_fallthru
          _
      $region24: #{deit_backbone_forward.115} parent=5 // pred_fallthru
        _
      %p151 = scmp.le.s32.totalorder 2, %s10
      // Predicated region
      $region29: #{deit_backbone_forward.115} parent=5 // pred_check
        %p152 = pneg %p151
      $region30: #{deit_backbone_forward.115} parent=5 // pred_check_branch
        %154 = sbr.rel (%p152) target = $region32
      $region31: #{deit_backbone_forward.115} parent=5 // pred_region
        %s155 = ssub.s32 %s10, 2
        // Predicated region
        $region33: #{deit_backbone_forward.115} parent=31 // pred_check
          %p156 = pneg %p65
        $region34: #{deit_backbone_forward.115} parent=31 // pred_check_branch
          %158 = sbr.rel (%p156) target = $region36
        $region35: #{deit_backbone_forward.115} parent=31 // pred_region
          %s159 = sand.u32 %s50, 1
          %s160 = scalar_lea.sflag [#allocation3], %s159
          %s161 = sand.u32 %s50, 1
          %s162 = scalar_lea.vmem [#allocation2], %s161
          %164 = dma.done %s160, 16
        $region36: #{deit_backbone_forward.115} parent=31 // pred_fallthru
          _
      $region32: #{deit_backbone_forward.115} parent=5 // pred_fallthru
        _
    $region6: #{deit_backbone_forward.115} parent=1 // loop_footer
      %s14 = sadd.s32 1, %s10
    $region7: #{deit_backbone_forward.115} parent=1 // loop_footer_branch
      %9 = sbr.rel target = $region3
    $region8: #{deit_backbone_forward.115} parent=1 // loop_exit
      _
    %165 = vsyncpa [#allocation3], 1
    %s166 = scalar_lea.sflag [#allocation3], 1
    %167 = vsyncpa %s166, 1

// kernel: deit_backbone_forward.62
$region0: #{deit_backbone_forward.62}
  #allocation0 [shape = 'u32[]', space=smem, size = 0x4, offset = 0x4, fixed_abs, tag = 'smem constant byte address 0x4 - core index']
  #allocation1 [shape = 'u32[72,128]{1,0:T(1,128)}', space=vmem, size = 0x9000, scoped, tag = 'internal scratch']
  %s0 = inlined_call_operand.vmem [shape: f32[2,17,128], index: 0, kind: input, shape index: {}]
  %s1 = inlined_call_operand.vmem [shape: f32[1,128], index: 1, kind: input, shape index: {}]
  %s2 = inlined_call_operand.vmem [shape: f32[1,128], index: 2, kind: input, shape index: {}]
  %s3 = inlined_call_operand.vmem [shape: bf16[128,512], index: 3, kind: input, shape index: {}]
  %s4 = inlined_call_operand.vmem [shape: f32[1,512], index: 4, kind: input, shape index: {}]
  %s5 = inlined_call_operand.vmem [shape: bf16[512,128], index: 5, kind: input, shape index: {}]
  %s6 = inlined_call_operand.vmem [shape: f32[1,128], index: 6, kind: input, shape index: {}]
  %s7 = inlined_call_operand.vmem [shape: f32[2,17,128], index: 7, kind: output, shape index: {}]
  %s8 = sld [smem:[#allocation0]]
  $region61: #{deit_backbone_forward.62} parent=0
    _
  %s10 = ssub.s32 1, %s8
  %s11 = scalar_select 0, %s10, %s8
  loop: start=0, step=1, limit=4
  $region2: #{deit_backbone_forward.62} parent=0 // loop_pre_header
    _
  $region3: #{deit_backbone_forward.62} parent=0 // loop_header
    %s13 = sphi 0, %s17
    %p14 = scmp.ge.s32.totalorder %s13, 4
    %s23 = sphi 0, %s25
    %s26 = sphi 0, %s23
    %s27 = sphi 0, %s26
    %s43 = sphi 0, %s27
    %s47 = sphi 0, %s47
    %s49 = sphi 0, %s47
    %s50 = sphi 0, %s49
    %s64 = sphi 0, %s50
    %s68 = sphi 0, %s68
    %s70 = sphi 0, %s68
    %s71 = sphi 0, %s70
    %s85 = sphi 0, %s71
    %s89 = sphi 0, %s89
    %s91 = sphi 0, %s89
    %s92 = sphi 0, %s91
    %s106 = sphi 0, %s92
    %s110 = sphi 0, %s110
    %s112 = sphi 0, %s110
    %s113 = sphi 0, %s112
    %s127 = sphi 0, %s113
    %s131 = sphi 0, %s131
    %s133 = sphi 0, %s131
    %s134 = sphi 0, %s133
    %s148 = sphi 0, %s134
    %s152 = sphi 0, %s152
    %s154 = sphi 0, %s152
    %s155 = sphi 0, %s154
    %s169 = sphi 0, %s155
    %s175 = sphi 0, %s177
    %s178 = sphi 0, %s175
    %s179 = sphi 0, %s178
    %s195 = sphi 0, %s179
  $region4: #{deit_backbone_forward.62} parent=0 // loop_header_branch
    %16 = sbr.rel (%p14) target = $region8
  $region5: #{deit_backbone_forward.62} parent=0 // loop_body
    %s18 = ssub.s32 %s13, 1
    %s19 = ssub.s32 %s13, 2
    %s20 = sadd.s32 %s13, 1
    %s21 = ssub.s32 %s13, %s20
    %p22 = scmp.eq.s32.totalorder %s21, 0
    %s24 = sadd.s32 %s23, 1
    %s25 = scalar_select %p22, %s23, %s24
    %p28 = pneg %p22
    %p29 = scmp.eq.s32.totalorder %s13, 1
    %p30 = por %p28, %p29
    %p31 = scmp.ne.s32.totalorder %s23, %s26
    %p32 = scmp.eq.s32.totalorder %s13, 0
    %p33 = por %p31, %p32
    %p34 = scmp.ne.s32.totalorder %s23, %s26
    %p35 = scmp.eq.s32.totalorder %s18, 1
    %p36 = por %p34, %p35
    %p37 = scmp.ne.s32.totalorder %s26, %s27
    %p38 = scmp.eq.s32.totalorder %s18, 0
    %p39 = por %p37, %p38
    %p40 = scmp.ne.s32.totalorder %s26, %s27
    %p41 = scmp.eq.s32.totalorder %s19, 1
    %p42 = por %p40, %p41
    %p44 = scmp.ne.s32.totalorder %s27, %s43
    %p45 = scmp.eq.s32.totalorder %s19, 0
    %p46 = por %p44, %p45
    %s48 = sadd.s32 %s47, 1
    %p51 = scmp.eq.s32.totalorder %s13, 1
    %p52 = scmp.ne.s32.totalorder %s47, %s49
    %p53 = scmp.eq.s32.totalorder %s13, 0
    %p54 = por %p52, %p53
    %p55 = scmp.ne.s32.totalorder %s47, %s49
    %p56 = scmp.eq.s32.totalorder %s18, 1
    %p57 = por %p55, %p56
    %p58 = scmp.ne.s32.totalorder %s49, %s50
    %p59 = scmp.eq.s32.totalorder %s18, 0
    %p60 = por %p58, %p59
    %p61 = scmp.ne.s32.totalorder %s49, %s50
    %p62 = scmp.eq.s32.totalorder %s19, 1
    %p63 = por %p61, %p62
    %p65 = scmp.ne.s32.totalorder %s50, %s64
    %p66 = scmp.eq.s32.totalorder %s19, 0
    %p67 = por %p65, %p66
    %s69 = sadd.s32 %s68, 1
    %p72 = scmp.eq.s32.totalorder %s13, 1
    %p73 = scmp.ne.s32.totalorder %s68, %s70
    %p74 = scmp.eq.s32.totalorder %s13, 0
    %p75 = por %p73, %p74
    %p76 = scmp.ne.s32.totalorder %s68, %s70
    %p77 = scmp.eq.s32.totalorder %s18, 1
    %p78 = por %p76, %p77
    %p79 = scmp.ne.s32.totalorder %s70, %s71
    %p80 = scmp.eq.s32.totalorder %s18, 0
    %p81 = por %p79, %p80
    %p82 = scmp.ne.s32.totalorder %s70, %s71
    %p83 = scmp.eq.s32.totalorder %s19, 1
    %p84 = por %p82, %p83
    %p86 = scmp.ne.s32.totalorder %s71, %s85
    %p87 = scmp.eq.s32.totalorder %s19, 0
    %p88 = por %p86, %p87
    %s90 = sadd.s32 %s89, 1
    %p93 = scmp.eq.s32.totalorder %s13, 1
    %p94 = scmp.ne.s32.totalorder %s89, %s91
    %p95 = scmp.eq.s32.totalorder %s13, 0
    %p96 = por %p94, %p95
    %p97 = scmp.ne.s32.totalorder %s89, %s91
    %p98 = scmp.eq.s32.totalorder %s18, 1
    %p99 = por %p97, %p98
    %p100 = scmp.ne.s32.totalorder %s91, %s92
    %p101 = scmp.eq.s32.totalorder %s18, 0
    %p102 = por %p100, %p101
    %p103 = scmp.ne.s32.totalorder %s91, %s92
    %p104 = scmp.eq.s32.totalorder %s19, 1
    %p105 = por %p103, %p104
    %p107 = scmp.ne.s32.totalorder %s92, %s106
    %p108 = scmp.eq.s32.totalorder %s19, 0
    %p109 = por %p107, %p108
    %s111 = sadd.s32 %s110, 1
    %p114 = scmp.eq.s32.totalorder %s13, 1
    %p115 = scmp.ne.s32.totalorder %s110, %s112
    %p116 = scmp.eq.s32.totalorder %s13, 0
    %p117 = por %p115, %p116
    %p118 = scmp.ne.s32.totalorder %s110, %s112
    %p119 = scmp.eq.s32.totalorder %s18, 1
    %p120 = por %p118, %p119
    %p121 = scmp.ne.s32.totalorder %s112, %s113
    %p122 = scmp.eq.s32.totalorder %s18, 0
    %p123 = por %p121, %p122
    %p124 = scmp.ne.s32.totalorder %s112, %s113
    %p125 = scmp.eq.s32.totalorder %s19, 1
    %p126 = por %p124, %p125
    %p128 = scmp.ne.s32.totalorder %s113, %s127
    %p129 = scmp.eq.s32.totalorder %s19, 0
    %p130 = por %p128, %p129
    %s132 = sadd.s32 %s131, 1
    %p135 = scmp.eq.s32.totalorder %s13, 1
    %p136 = scmp.ne.s32.totalorder %s131, %s133
    %p137 = scmp.eq.s32.totalorder %s13, 0
    %p138 = por %p136, %p137
    %p139 = scmp.ne.s32.totalorder %s131, %s133
    %p140 = scmp.eq.s32.totalorder %s18, 1
    %p141 = por %p139, %p140
    %p142 = scmp.ne.s32.totalorder %s133, %s134
    %p143 = scmp.eq.s32.totalorder %s18, 0
    %p144 = por %p142, %p143
    %p145 = scmp.ne.s32.totalorder %s133, %s134
    %p146 = scmp.eq.s32.totalorder %s19, 1
    %p147 = por %p145, %p146
    %p149 = scmp.ne.s32.totalorder %s134, %s148
    %p150 = scmp.eq.s32.totalorder %s19, 0
    %p151 = por %p149, %p150
    %s153 = sadd.s32 %s152, 1
    %p156 = scmp.eq.s32.totalorder %s13, 1
    %p157 = scmp.ne.s32.totalorder %s152, %s154
    %p158 = scmp.eq.s32.totalorder %s13, 0
    %p159 = por %p157, %p158
    %p160 = scmp.ne.s32.totalorder %s152, %s154
    %p161 = scmp.eq.s32.totalorder %s18, 1
    %p162 = por %p160, %p161
    %p163 = scmp.ne.s32.totalorder %s154, %s155
    %p164 = scmp.eq.s32.totalorder %s18, 0
    %p165 = por %p163, %p164
    %p166 = scmp.ne.s32.totalorder %s154, %s155
    %p167 = scmp.eq.s32.totalorder %s19, 1
    %p168 = por %p166, %p167
    %p170 = scmp.ne.s32.totalorder %s155, %s169
    %p171 = scmp.eq.s32.totalorder %s19, 0
    %p172 = por %p170, %p171
    %s173 = ssub.s32 %s13, %s20
    %p174 = scmp.eq.s32.totalorder %s173, 0
    %s176 = sadd.s32 %s175, 1
    %s177 = scalar_select %p174, %s175, %s176
    %p180 = pneg %p174
    %p181 = scmp.eq.s32.totalorder %s13, 1
    %p182 = por %p180, %p181
    %p183 = scmp.ne.s32.totalorder %s175, %s178
    %p184 = scmp.eq.s32.totalorder %s13, 0
    %p185 = por %p183, %p184
    %p186 = scmp.ne.s32.totalorder %s175, %s178
    %p187 = scmp.eq.s32.totalorder %s18, 1
    %p188 = por %p186, %p187
    %p189 = scmp.ne.s32.totalorder %s178, %s179
    %p190 = scmp.eq.s32.totalorder %s18, 0
    %p191 = por %p189, %p190
    %p192 = scmp.ne.s32.totalorder %s178, %s179
    %p193 = scmp.eq.s32.totalorder %s19, 1
    %p194 = por %p192, %p193
    %p196 = scmp.ne.s32.totalorder %s179, %s195
    %p197 = scmp.eq.s32.totalorder %s19, 0
    %p198 = por %p196, %p197
    %p199 = scmp.le.s32.totalorder 1, %s13
    %p200 = scmp.lt.s32.totalorder %s13, 3
    %p201 = pnand %p199, %p200
    %p202 = pneg %p201
    // Predicated region
    $region9: #{deit_backbone_forward.62} parent=5 // pred_check
      _
    $region10: #{deit_backbone_forward.62} parent=5 // pred_check_branch
      %204 = sbr.rel (%p201) target = $region12
    $region11: #{deit_backbone_forward.62} parent=5 // pred_region
      %s205 = ssub.s32 %s13, 1
      // Predicated region
      $region13: #{deit_backbone_forward.62} parent=11 // pred_check
        %p206 = pneg %p60
      $region14: #{deit_backbone_forward.62} parent=11 // pred_check_branch
        %208 = sbr.rel (%p206) target = $region16
      $region15: #{deit_backbone_forward.62} parent=11 // pred_region
        _
      $region16: #{deit_backbone_forward.62} parent=11 // pred_fallthru
        _
      // Predicated region
      $region17: #{deit_backbone_forward.62} parent=11 // pred_check
        %p209 = pneg %p81
      $region18: #{deit_backbone_forward.62} parent=11 // pred_check_branch
        %211 = sbr.rel (%p209) target = $region20
      $region19: #{deit_backbone_forward.62} parent=11 // pred_region
        _
      $region20: #{deit_backbone_forward.62} parent=11 // pred_fallthru
        _
      // Predicated region
      $region21: #{deit_backbone_forward.62} parent=11 // pred_check
        %p212 = pneg %p102
      $region22: #{deit_backbone_forward.62} parent=11 // pred_check_branch
        %214 = sbr.rel (%p212) target = $region24
      $region23: #{deit_backbone_forward.62} parent=11 // pred_region
        _
      $region24: #{deit_backbone_forward.62} parent=11 // pred_fallthru
        _
      // Predicated region
      $region25: #{deit_backbone_forward.62} parent=11 // pred_check
        %p215 = pneg %p123
      $region26: #{deit_backbone_forward.62} parent=11 // pred_check_branch
        %217 = sbr.rel (%p215) target = $region28
      $region27: #{deit_backbone_forward.62} parent=11 // pred_region
        _
      $region28: #{deit_backbone_forward.62} parent=11 // pred_fallthru
        _
      // Predicated region
      $region29: #{deit_backbone_forward.62} parent=11 // pred_check
        %p218 = pneg %p144
      $region30: #{deit_backbone_forward.62} parent=11 // pred_check_branch
        %220 = sbr.rel (%p218) target = $region32
      $region31: #{deit_backbone_forward.62} parent=11 // pred_region
        _
      $region32: #{deit_backbone_forward.62} parent=11 // pred_fallthru
        _
      // Predicated region
      $region33: #{deit_backbone_forward.62} parent=11 // pred_check
        %p221 = pneg %p165
      $region34: #{deit_backbone_forward.62} parent=11 // pred_check_branch
        %223 = sbr.rel (%p221) target = $region36
      $region35: #{deit_backbone_forward.62} parent=11 // pred_region
        _
      $region36: #{deit_backbone_forward.62} parent=11 // pred_fallthru
        _
    $region12: #{deit_backbone_forward.62} parent=5 // pred_fallthru
      _
    %p224 = scmp.lt.s32.totalorder %s13, 2
    // Predicated region
    $region37: #{deit_backbone_forward.62} parent=5 // pred_check
      %p225 = pneg %p224
    $region38: #{deit_backbone_forward.62} parent=5 // pred_check_branch
      %227 = sbr.rel (%p225) target = $region40
    $region39: #{deit_backbone_forward.62} parent=5 // pred_region
      // Predicated region
      $region41: #{deit_backbone_forward.62} parent=39 // pred_check
        %p228 = pneg %p33
      $region42: #{deit_backbone_forward.62} parent=39 // pred_check_branch
        %230 = sbr.rel (%p228) target = $region44
      $region43: #{deit_backbone_forward.62} parent=39 // pred_region
        %p231 = scmp.lt.s32.totalorder %s13, 1
        %s232 = scalar_select %p231, %s13, 1
        %s233 = smul.addr %s232, 3
        %s234 = smul.addr %s233, 8
        %s235 = scalar_lea.vmem %s0, %s234
      $region44: #{deit_backbone_forward.62} parent=39 // pred_fallthru
        _
    $region40: #{deit_backbone_forward.62} parent=5 // pred_fallthru
      _
    %p236 = scmp.le.s32.totalorder 1, %s13
    %p237 = scmp.lt.s32.totalorder %s13, 3
    %p238 = pnand %p236, %p237
    %p239 = pneg %p238
    // Predicated region
    $region45: #{deit_backbone_forward.62} parent=5 // pred_check
      _
    $region46: #{deit_backbone_forward.62} parent=5 // pred_check_branch
      %241 = sbr.rel (%p238) target = $region48
    $region47: #{deit_backbone_forward.62} parent=5 // pred_region
      %s242 = ssub.s32 %s13, 1
      %p243 = scmp.lt.s32.totalorder %s18, 1
      %s244 = scalar_select %p243, %s18, 1
      %s245 = smul.addr %s244, 3
      %s246 = smul.addr %s245, 8
      %s247 = scalar_lea.vmem %s0, %s246
      %p248 = pneg %p39
      %p249 = pneg %p36
      %p250 = pneg %p60
      %p251 = pneg %p57
      %p252 = pneg %p81
      %p253 = pneg %p78
      %p254 = pneg %p102
      %p255 = pneg %p99
      %p256 = pneg %p123
      %p257 = pneg %p120
      %p258 = pneg %p144
      %p259 = pneg %p141
      %p260 = pneg %p165
      %p261 = pneg %p162
      %p262 = pneg %p191
      %p263 = pneg %p188
      %p264 = scmp.lt.s32.totalorder %s18, 1
      %s265 = scalar_select %p264, %s18, 1
      %s266 = smul.addr %s265, 3
      %s267 = smul.addr %s266, 8
      %s268 = scalar_lea.vmem %s7, %s267
      %p269 = scmp.lt.s32.totalorder %s18, 1
      %s270 = scalar_select %p269, %s18, 1
      %s271 = smul.addr %s270, 3
      %s272 = smul.addr %s271, 8
      %s273 = scalar_lea.vmem %s0, %s272
      %p274 = scmp.lt.s32.totalorder %s18, 1
      %s275 = scalar_select %p274, %s18, 1
      %s276 = smul.addr %s275, 3
      %s277 = smul.addr %s276, 8
      %s278 = scalar_lea.vmem %s7, %s277
      %v279 = vld [vmem:[%s273] sm:$0xff]
      %v280 = vld [vmem:[%s273 + $0x8] sm:$0xff]
      %v281 = vld [vmem:[%s273 + $0x10] sm:$0x1]
      %v282 = vld [vmem:[%s1] sm:$0x1]
      %v283 = vld [vmem:[%s2] sm:$0x1]
      %284 = vadd.xlane.f32.xlu0 %v279
      %v285 = vpop.xlane.xlu0 %284
      %286 = vadd.xlane.f32.xlu0 %v280
      %v287 = vpop.xlane.xlu0 %286
      %vm288 = vcmask 1040384
      %v289 = vsel %vm288, %v281, 0.0
      %290 = vadd.xlane.f32.xlu0 %v289
      %v291 = vpop.xlane.xlu0 %290
      %v292 = vrcp.pop 128.0
      %v293 = vmul.f32 128.0, %v292
      %v294 = vsub.f32 1.0, %v293
      %v295 = vmul.f32 %v292, %v294
      %v296 = vadd.f32 %v292, %v295
      %vm297 = vweird.f32 %v292
      %v298 = vsel %vm297, %v292, %v296
      %v299 = vmul.f32 %v285, %v298
      %v300 = vmul.f32 %v287, %v298
      %v301 = vmul.f32 %v291, %v298
      %v302 = vsub.f32 %v279, %v299
      %v303 = vsub.f32 %v280, %v300
      %v304 = vsub.f32 %v281, %v301
      %v305 = vmul.f32 %v302, %v302
      %v306 = vmul.f32 %v303, %v303
      %v307 = vmul.f32 %v304, %v304
      %308 = vadd.xlane.f32.xlu0 %v305
      %v309 = vpop.xlane.xlu0 %308
      %310 = vadd.xlane.f32.xlu0 %v306
      %v311 = vpop.xlane.xlu0 %310
      %v312 = vsel %vm288, %v307, 0.0
      %313 = vadd.xlane.f32.xlu0 %v312
      %v314 = vpop.xlane.xlu0 %313
      %v315 = vmul.f32 %v309, %v298
      %v316 = vmul.f32 %v311, %v298
      %v317 = vmul.f32 %v314, %v298
      %v318 = vadd.f32 %v315, 1e-06
      %v319 = vadd.f32 %v316, 1e-06
      %v320 = vadd.f32 %v317, 1e-06
      %v321 = vrsqrt.pop %v318
      %v322 = vmul.f32 %v321, %v318
      %v323 = vmul.f32 %v322, %v321
      %v324 = vmul.f32 0.5, %v323
      %v325 = vsub.f32 1.5, %v324
      %v326 = vmul.f32 %v321, %v325
      %vm327 = vweird.f32 %v318
      %vm328 = vweird.f32 %v321
      %vm329 = vmor %vm327, %vm328
      %v330 = vsel %vm329, %v321, %v326
      %v331 = vrsqrt.pop %v319
      %v332 = vmul.f32 %v331, %v319
      %v333 = vmul.f32 %v332, %v331
      %v334 = vmul.f32 0.5, %v333
      %v335 = vsub.f32 1.5, %v334
      %v336 = vmul.f32 %v331, %v335
      %vm337 = vweird.f32 %v319
      %vm338 = vweird.f32 %v331
      %vm339 = vmor %vm337, %vm338
      %v340 = vsel %vm339, %v331, %v336
      %v341 = vrsqrt.pop %v320
      %v342 = vmul.f32 %v341, %v320
      %v343 = vmul.f32 %v342, %v341
      %v344 = vmul.f32 0.5, %v343
      %v345 = vsub.f32 1.5, %v344
      %v346 = vmul.f32 %v341, %v345
      %vm347 = vweird.f32 %v320
      %vm348 = vweird.f32 %v341
      %vm349 = vmor %vm347, %vm348
      %v350 = vsel %vm349, %v341, %v346
      %v351 = vmul.f32 %v302, %v330
      %v352 = vmul.f32 %v303, %v340
      %v353 = vmul.f32 %v304, %v350
      %v355 = vperm.slane %v282, 0
      %v357 = vmul.f32 %v351, %v355
      %v358 = vmul.f32 %v352, %v355
      %v359 = vmul.f32 %v353, %v355
      %v361 = vperm.slane %v283, 0
      %v363 = vadd.f32 %v357, %v361
      %v364 = vadd.f32 %v358, %v361
      %v365 = vadd.f32 %v359, %v361
      %v366 = vpack.c.bf16 %v364, %v363
      %v367 = vpack.c.bf16 %v365, %v365
      %v368 = vld [vmem:[%s3] sm:$0xff]
      %v369 = vld [vmem:[%s3 + $0x8] sm:$0xff]
      %v370 = vld [vmem:[%s3 + $0x10] sm:$0xff]
      %v371 = vld [vmem:[%s3 + $0x18] sm:$0xff]
      %v372 = vld [vmem:[%s3 + $0x20] sm:$0xff]
      %v373 = vld [vmem:[%s3 + $0x28] sm:$0xff]
      %v374 = vld [vmem:[%s3 + $0x30] sm:$0xff]
      %v375 = vld [vmem:[%s3 + $0x38] sm:$0xff]
      %v376 = vld [vmem:[%s3 + $0x40] sm:$0xff]
      %v377 = vld [vmem:[%s3 + $0x48] sm:$0xff]
      %v378 = vld [vmem:[%s3 + $0x50] sm:$0xff]
      %v379 = vld [vmem:[%s3 + $0x58] sm:$0xff]
      %v380 = vld [vmem:[%s3 + $0x60] sm:$0xff]
      %v381 = vld [vmem:[%s3 + $0x68] sm:$0xff]
      %v382 = vld [vmem:[%s3 + $0x70] sm:$0xff]
      %v383 = vld [vmem:[%s3 + $0x78] sm:$0xff]
      %v384 = vld [vmem:[%s3 + $0x80] sm:$0xff]
      %v385 = vld [vmem:[%s3 + $0x88] sm:$0xff]
      %v386 = vld [vmem:[%s3 + $0x90] sm:$0xff]
      %v387 = vld [vmem:[%s3 + $0x98] sm:$0xff]
      %v388 = vld [vmem:[%s3 + $0xa0] sm:$0xff]
      %v389 = vld [vmem:[%s3 + $0xa8] sm:$0xff]
      %v390 = vld [vmem:[%s3 + $0xb0] sm:$0xff]
      %v391 = vld [vmem:[%s3 + $0xb8] sm:$0xff]
      %v392 = vld [vmem:[%s3 + $0xc0] sm:$0xff]
      %v393 = vld [vmem:[%s3 + $0xc8] sm:$0xff]
      %v394 = vld [vmem:[%s3 + $0xd0] sm:$0xff]
      %v395 = vld [vmem:[%s3 + $0xd8] sm:$0xff]
      %v396 = vld [vmem:[%s3 + $0xe0] sm:$0xff]
      %v397 = vld [vmem:[%s3 + $0xe8] sm:$0xff]
      %v398 = vld [vmem:[%s3 + $0xf0] sm:$0xff]
      %v399 = vld [vmem:[%s3 + $0xf8] sm:$0xff]
      %v400 = vld [vmem:[%s4] sm:$0xf]
      %v402 = vperm.slane %v400, 0
      %v403 = vperm.slane %v400, 1
      %v404 = vperm.slane %v400, 2
      %v405 = vperm.slane %v400, 3
      %v442 = vunpack.c.l.b16 %v368
      %v443 = vunpack.c.h.b16 %v368
      %v444 = vunpack.c.l.b16 %v369
      %v445 = vunpack.c.h.b16 %v369
      %v446 = vunpack.c.l.b16 %v370
      %v447 = vunpack.c.h.b16 %v370
      %v448 = vunpack.c.l.b16 %v371
      %v449 = vunpack.c.h.b16 %v371
      %v450 = vunpack.c.l.b16 %v372
      %v451 = vunpack.c.h.b16 %v372
      %v452 = vunpack.c.l.b16 %v373
      %v453 = vunpack.c.h.b16 %v373
      %v454 = vunpack.c.l.b16 %v374
      %v455 = vunpack.c.h.b16 %v374
      %v456 = vunpack.c.l.b16 %v375
      %v457 = vunpack.c.h.b16 %v375
      %v458 = vunpack.c.l.b16 %v376
      %v459 = vunpack.c.h.b16 %v376
      %v460 = vunpack.c.l.b16 %v377
      %v461 = vunpack.c.h.b16 %v377
      %v462 = vunpack.c.l.b16 %v378
      %v463 = vunpack.c.h.b16 %v378
      %v464 = vunpack.c.l.b16 %v379
      %v465 = vunpack.c.h.b16 %v379
      %v466 = vunpack.c.l.b16 %v380
      %v467 = vunpack.c.h.b16 %v380
      %v468 = vunpack.c.l.b16 %v381
      %v469 = vunpack.c.h.b16 %v381
      %v470 = vunpack.c.l.b16 %v382
      %v471 = vunpack.c.h.b16 %v382
      %v472 = vunpack.c.l.b16 %v383
      %v473 = vunpack.c.h.b16 %v383
      %v474 = vunpack.c.l.b16 %v384
      %v475 = vunpack.c.h.b16 %v384
      %v476 = vunpack.c.l.b16 %v385
      %v477 = vunpack.c.h.b16 %v385
      %v478 = vunpack.c.l.b16 %v386
      %v479 = vunpack.c.h.b16 %v386
      %v480 = vunpack.c.l.b16 %v387
      %v481 = vunpack.c.h.b16 %v387
      %v482 = vunpack.c.l.b16 %v388
      %v483 = vunpack.c.h.b16 %v388
      %v484 = vunpack.c.l.b16 %v389
      %v485 = vunpack.c.h.b16 %v389
      %v486 = vunpack.c.l.b16 %v390
      %v487 = vunpack.c.h.b16 %v390
      %v488 = vunpack.c.l.b16 %v391
      %v489 = vunpack.c.h.b16 %v391
      %v490 = vunpack.c.l.b16 %v392
      %v491 = vunpack.c.h.b16 %v392
      %v492 = vunpack.c.l.b16 %v393
      %v493 = vunpack.c.h.b16 %v393
      %v494 = vunpack.c.l.b16 %v394
      %v495 = vunpack.c.h.b16 %v394
      %v496 = vunpack.c.l.b16 %v395
      %v497 = vunpack.c.h.b16 %v395
      %v498 = vunpack.c.l.b16 %v396
      %v499 = vunpack.c.h.b16 %v396
      %v500 = vunpack.c.l.b16 %v397
      %v501 = vunpack.c.h.b16 %v397
      %v502 = vunpack.c.l.b16 %v398
      %v503 = vunpack.c.h.b16 %v398
      %v504 = vunpack.c.l.b16 %v399
      %v505 = vunpack.c.h.b16 %v399
      %v506 = vpack.c.b16 %v446, %v442
      %v507 = vpack.c.b16 %v447, %v443
      %v508 = vpack.c.b16 %v448, %v444
      %v509 = vpack.c.b16 %v449, %v445
      %v510 = vpack.c.b16 %v454, %v450
      %v511 = vpack.c.b16 %v455, %v451
      %v512 = vpack.c.b16 %v456, %v452
      %v513 = vpack.c.b16 %v457, %v453
      %v514 = vpack.c.b16 %v462, %v458
      %v515 = vpack.c.b16 %v463, %v459
      %v516 = vpack.c.b16 %v464, %v460
      %v517 = vpack.c.b16 %v465, %v461
      %v518 = vpack.c.b16 %v470, %v466
      %v519 = vpack.c.b16 %v471, %v467
      %v520 = vpack.c.b16 %v472, %v468
      %v521 = vpack.c.b16 %v473, %v469
      %v522 = vpack.c.b16 %v478, %v474
      %v523 = vpack.c.b16 %v479, %v475
      %v524 = vpack.c.b16 %v480, %v476
      %v525 = vpack.c.b16 %v481, %v477
      %v526 = vpack.c.b16 %v486, %v482
      %v527 = vpack.c.b16 %v487, %v483
      %v528 = vpack.c.b16 %v488, %v484
      %v529 = vpack.c.b16 %v489, %v485
      %v530 = vpack.c.b16 %v494, %v490
      %v531 = vpack.c.b16 %v495, %v491
      %v532 = vpack.c.b16 %v496, %v492
      %v533 = vpack.c.b16 %v497, %v493
      %v534 = vpack.c.b16 %v502, %v498
      %v535 = vpack.c.b16 %v503, %v499
      %v536 = vpack.c.b16 %v504, %v500
      %v537 = vpack.c.b16 %v505, %v501
      %570 = vmatpush.bf16.msra.mxu0 %v534
      %571 = vmatpush.bf16.msra.mxu0 %v530
      %572 = vmatpush.bf16.msra.mxu0 %v526
      %573 = vmatpush.bf16.msra.mxu0 %v522
      %574 = vmatpush.bf16.msra.mxu0 %v518
      %575 = vmatpush.bf16.msra.mxu0 %v514
      %576 = vmatpush.bf16.msra.mxu0 %v510
      %577 = vmatpush.bf16.msra.mxu0 %v506
      %578 = vmatmul.bf16.gmra.mxu0 %v366
      %v579 = vpop.f32.mrf.mxu0
      %v580 = vadd.f32 %v402, %v579
      %v581 = vpop.f32.mrf.mxu0
      %v582 = vadd.f32 %v402, %v581
      %583 = vmatmul.bf16.gmra.mxu0 %v367
      %v584 = vpop.f32.mrf.mxu0
      %v585 = vadd.f32 %v402, %v584
      %v586 = vpop.f32.mrf.mxu0
      %587 = vdwg.mxu0
      %588 = vmatpush.bf16.msra.mxu0 %v535
      %589 = vmatpush.bf16.msra.mxu0 %v531
      %590 = vmatpush.bf16.msra.mxu0 %v527
      %591 = vmatpush.bf16.msra.mxu0 %v523
      %592 = vmatpush.bf16.msra.mxu0 %v519
      %593 = vmatpush.bf16.msra.mxu0 %v515
      %594 = vmatpush.bf16.msra.mxu0 %v511
      %595 = vmatpush.bf16.msra.mxu0 %v507
      %596 = vmatmul.bf16.gmra.mxu0 %v366
      %v597 = vpop.f32.mrf.mxu0
      %v598 = vadd.f32 %v403, %v597
      %v599 = vpop.f32.mrf.mxu0
      %v600 = vadd.f32 %v403, %v599
      %601 = vmatmul.bf16.gmra.mxu0 %v367
      %v602 = vpop.f32.mrf.mxu0
      %v603 = vadd.f32 %v403, %v602
      %v604 = vpop.f32.mrf.mxu0
      %605 = vdwg.mxu0
      %606 = vmatpush.bf16.msra.mxu0 %v536
      %607 = vmatpush.bf16.msra.mxu0 %v532
      %608 = vmatpush.bf16.msra.mxu0 %v528
      %609 = vmatpush.bf16.msra.mxu0 %v524
      %610 = vmatpush.bf16.msra.mxu0 %v520
      %611 = vmatpush.bf16.msra.mxu0 %v516
      %612 = vmatpush.bf16.msra.mxu0 %v512
      %613 = vmatpush.bf16.msra.mxu0 %v508
      %614 = vmatmul.bf16.gmra.mxu0 %v366
      %v615 = vpop.f32.mrf.mxu0
      %v616 = vadd.f32 %v404, %v615
      %v617 = vpop.f32.mrf.mxu0
      %v618 = vadd.f32 %v404, %v617
      %619 = vmatmul.bf16.gmra.mxu0 %v367
      %v620 = vpop.f32.mrf.mxu0
      %v621 = vadd.f32 %v404, %v620
      %v622 = vpop.f32.mrf.mxu0
      %623 = vdwg.mxu0
      %624 = vmatpush.bf16.msra.mxu0 %v537
      %625 = vmatpush.bf16.msra.mxu0 %v533
      %626 = vmatpush.bf16.msra.mxu0 %v529
      %627 = vmatpush.bf16.msra.mxu0 %v525
      %628 = vmatpush.bf16.msra.mxu0 %v521
      %629 = vmatpush.bf16.msra.mxu0 %v517
      %630 = vmatpush.bf16.msra.mxu0 %v513
      %631 = vmatpush.bf16.msra.mxu0 %v509
      %632 = vmatmul.bf16.gmra.mxu0 %v366
      %v633 = vpop.f32.mrf.mxu0
      %v634 = vadd.f32 %v405, %v633
      %v635 = vpop.f32.mrf.mxu0
      %v636 = vadd.f32 %v405, %v635
      %637 = vmatmul.bf16.gmra.mxu0 %v367
      %v638 = vpop.f32.mrf.mxu0
      %v639 = vadd.f32 %v405, %v638
      %v640 = vpop.f32.mrf.mxu0
      %641 = vdwg.mxu0
      %v642 = vmul.f32 %v580, %v580
      %v643 = vmul.f32 %v598, %v598
      %v644 = vmul.f32 %v616, %v616
      %v645 = vmul.f32 %v634, %v634
      %v646 = vmul.f32 %v582, %v582
      %v647 = vmul.f32 %v600, %v600
      %v648 = vmul.f32 %v618, %v618
      %v649 = vmul.f32 %v636, %v636
      %v650 = vmul.f32 %v585, %v585
      %v651 = vmul.f32 %v603, %v603
      %v652 = vmul.f32 %v621, %v621
      %v653 = vmul.f32 %v639, %v639
      %v654 = vmul.f32 %v580, %v642
      %v655 = vmul.f32 %v598, %v643
      %v656 = vmul.f32 %v616, %v644
      %v657 = vmul.f32 %v634, %v645
      %v658 = vmul.f32 %v582, %v646
      %v659 = vmul.f32 %v600, %v647
      %v660 = vmul.f32 %v618, %v648
      %v661 = vmul.f32 %v636, %v649
      %v662 = vmul.f32 %v585, %v650
      %v663 = vmul.f32 %v603, %v651
      %v664 = vmul.f32 %v621, %v652
      %v665 = vmul.f32 %v639, %v653
      %v666 = vmul.f32 %v654, 0.044715
      %v667 = vmul.f32 %v655, 0.044715
      %v668 = vmul.f32 %v656, 0.044715
      %v669 = vmul.f32 %v657, 0.044715
      %v670 = vmul.f32 %v658, 0.044715
      %v671 = vmul.f32 %v659, 0.044715
      %v672 = vmul.f32 %v660, 0.044715
      %v673 = vmul.f32 %v661, 0.044715
      %v674 = vmul.f32 %v662, 0.044715
      %v675 = vmul.f32 %v663, 0.044715
      %v676 = vmul.f32 %v664, 0.044715
      %v677 = vmul.f32 %v665, 0.044715
      %v678 = vadd.f32 %v580, %v666
      %v679 = vadd.f32 %v598, %v667
      %v680 = vadd.f32 %v616, %v668
      %v681 = vadd.f32 %v634, %v669
      %v682 = vadd.f32 %v582, %v670
      %v683 = vadd.f32 %v600, %v671
      %v684 = vadd.f32 %v618, %v672
      %v685 = vadd.f32 %v636, %v673
      %v686 = vadd.f32 %v585, %v674
      %v687 = vadd.f32 %v603, %v675
      %v688 = vadd.f32 %v621, %v676
      %v689 = vadd.f32 %v639, %v677
      %v690 = vmul.f32 %v678, 0.7978846
      %v691 = vmul.f32 %v679, 0.7978846
      %v692 = vmul.f32 %v680, 0.7978846
      %v693 = vmul.f32 %v681, 0.7978846
      %v694 = vmul.f32 %v682, 0.7978846
      %v695 = vmul.f32 %v683, 0.7978846
      %v696 = vmul.f32 %v684, 0.7978846
      %v697 = vmul.f32 %v685, 0.7978846
      %v698 = vmul.f32 %v686, 0.7978846
      %v699 = vmul.f32 %v687, 0.7978846
      %v700 = vmul.f32 %v688, 0.7978846
      %v701 = vmul.f32 %v689, 0.7978846
      %v702 = vtanh.pop %v690
      %v703 = vtanh.pop %v691
      %v704 = vtanh.pop %v692
      %v705 = vtanh.pop %v693
      %v706 = vtanh.pop %v694
      %v707 = vtanh.pop %v695
      %v708 = vtanh.pop %v696
      %v709 = vtanh.pop %v697
      %v710 = vtanh.pop %v698
      %v711 = vtanh.pop %v699
      %v712 = vtanh.pop %v700
      %v713 = vtanh.pop %v701
      %v714 = vadd.f32 %v702, 1.0
      %v715 = vadd.f32 %v703, 1.0
      %v716 = vadd.f32 %v704, 1.0
      %v717 = vadd.f32 %v705, 1.0
      %v718 = vadd.f32 %v706, 1.0
      %v719 = vadd.f32 %v707, 1.0
      %v720 = vadd.f32 %v708, 1.0
      %v721 = vadd.f32 %v709, 1.0
      %v722 = vadd.f32 %v710, 1.0
      %v723 = vadd.f32 %v711, 1.0
      %v724 = vadd.f32 %v712, 1.0
      %v725 = vadd.f32 %v713, 1.0
      %v726 = vmul.f32 %v714, 0.5
      %v727 = vmul.f32 %v715, 0.5
      %v728 = vmul.f32 %v716, 0.5
      %v729 = vmul.f32 %v717, 0.5
      %v730 = vmul.f32 %v718, 0.5
      %v731 = vmul.f32 %v719, 0.5
      %v732 = vmul.f32 %v720, 0.5
      %v733 = vmul.f32 %v721, 0.5
      %v734 = vmul.f32 %v722, 0.5
      %v735 = vmul.f32 %v723, 0.5
      %v736 = vmul.f32 %v724, 0.5
      %v737 = vmul.f32 %v725, 0.5
      %v738 = vmul.f32 %v580, %v726
      %v739 = vmul.f32 %v598, %v727
      %v740 = vmul.f32 %v616, %v728
      %v741 = vmul.f32 %v634, %v729
      %v742 = vmul.f32 %v582, %v730
      %v743 = vmul.f32 %v600, %v731
      %v744 = vmul.f32 %v618, %v732
      %v745 = vmul.f32 %v636, %v733
      %v746 = vmul.f32 %v585, %v734
      %v747 = vmul.f32 %v603, %v735
      %v748 = vmul.f32 %v621, %v736
      %v749 = vmul.f32 %v639, %v737
      %v750 = vld [vmem:[%s6] sm:$0x1]
      %v752 = vperm.slane %v750, 0
      %v754 = vadd.f32 %v279, %v752
      %v755 = vadd.f32 %v280, %v752
      %v756 = vadd.f32 %v281, %v752
      %v757 = vpack.c.bf16 %v742, %v738
      %v758 = vpack.c.bf16 %v743, %v739
      %v759 = vpack.c.bf16 %v744, %v740
      %v760 = vpack.c.bf16 %v745, %v741
      %v761 = vpack.c.bf16 %v746, %v746
      %v762 = vpack.c.bf16 %v747, %v747
      %v763 = vpack.c.bf16 %v748, %v748
      %v764 = vpack.c.bf16 %v749, %v749
      %v765 = vld [vmem:[%s5] sm:$0xf]
      %v766 = vld [vmem:[%s5 + $0x4] sm:$0xf]
      %v767 = vld [vmem:[%s5 + $0x8] sm:$0xf]
      %v768 = vld [vmem:[%s5 + $0xc] sm:$0xf]
      %v769 = vld [vmem:[%s5 + $0x10] sm:$0xf]
      %v770 = vld [vmem:[%s5 + $0x14] sm:$0xf]
      %v771 = vld [vmem:[%s5 + $0x18] sm:$0xf]
      %v772 = vld [vmem:[%s5 + $0x1c] sm:$0xf]
      %v773 = vld [vmem:[%s5 + $0x20] sm:$0xf]
      %v774 = vld [vmem:[%s5 + $0x24] sm:$0xf]
      %v775 = vld [vmem:[%s5 + $0x28] sm:$0xf]
      %v776 = vld [vmem:[%s5 + $0x2c] sm:$0xf]
      %v777 = vld [vmem:[%s5 + $0x30] sm:$0xf]
      %v778 = vld [vmem:[%s5 + $0x34] sm:$0xf]
      %v779 = vld [vmem:[%s5 + $0x38] sm:$0xf]
      %v780 = vld [vmem:[%s5 + $0x3c] sm:$0xf]
      %v781 = vld [vmem:[%s5 + $0x40] sm:$0xf]
      %v782 = vld [vmem:[%s5 + $0x44] sm:$0xf]
      %v783 = vld [vmem:[%s5 + $0x48] sm:$0xf]
      %v784 = vld [vmem:[%s5 + $0x4c] sm:$0xf]
      %v785 = vld [vmem:[%s5 + $0x50] sm:$0xf]
      %v786 = vld [vmem:[%s5 + $0x54] sm:$0xf]
      %v787 = vld [vmem:[%s5 + $0x58] sm:$0xf]
      %v788 = vld [vmem:[%s5 + $0x5c] sm:$0xf]
      %v789 = vld [vmem:[%s5 + $0x60] sm:$0xf]
      %v790 = vld [vmem:[%s5 + $0x64] sm:$0xf]
      %v791 = vld [vmem:[%s5 + $0x68] sm:$0xf]
      %v792 = vld [vmem:[%s5 + $0x6c] sm:$0xf]
      %v793 = vld [vmem:[%s5 + $0x70] sm:$0xf]
      %v794 = vld [vmem:[%s5 + $0x74] sm:$0xf]
      %v795 = vld [vmem:[%s5 + $0x78] sm:$0xf]
      %v796 = vld [vmem:[%s5 + $0x7c] sm:$0xf]
      %v797 = vld [vmem:[%s5 + $0x80] sm:$0xf]
      %v798 = vld [vmem:[%s5 + $0x84] sm:$0xf]
      %v799 = vld [vmem:[%s5 + $0x88] sm:$0xf]
      %v800 = vld [vmem:[%s5 + $0x8c] sm:$0xf]
      %v801 = vld [vmem:[%s5 + $0x90] sm:$0xf]
      %v802 = vld [vmem:[%s5 + $0x94] sm:$0xf]
      %v803 = vld [vmem:[%s5 + $0x98] sm:$0xf]
      %v804 = vld [vmem:[%s5 + $0x9c] sm:$0xf]
      %v805 = vld [vmem:[%s5 + $0xa0] sm:$0xf]
      %v806 = vld [vmem:[%s5 + $0xa4] sm:$0xf]
      %v807 = vld [vmem:[%s5 + $0xa8] sm:$0xf]
      %v808 = vld [vmem:[%s5 + $0xac] sm:$0xf]
      %v809 = vld [vmem:[%s5 + $0xb0] sm:$0xf]
      %v810 = vld [vmem:[%s5 + $0xb4] sm:$0xf]
      %v811 = vld [vmem:[%s5 + $0xb8] sm:$0xf]
      %v812 = vld [vmem:[%s5 + $0xbc] sm:$0xf]
      %v813 = vld [vmem:[%s5 + $0xc0] sm:$0xf]
      %v814 = vld [vmem:[%s5 + $0xc4] sm:$0xf]
      %v815 = vld [vmem:[%s5 + $0xc8] sm:$0xf]
      %v816 = vld [vmem:[%s5 + $0xcc] sm:$0xf]
      %v817 = vld [vmem:[%s5 + $0xd0] sm:$0xf]
      %v818 = vld [vmem:[%s5 + $0xd4] sm:$0xf]
      %v819 = vld [vmem:[%s5 + $0xd8] sm:$0xf]
      %v820 = vld [vmem:[%s5 + $0xdc] sm:$0xf]
      %v821 = vld [vmem:[%s5 + $0xe0] sm:$0xf]
      %v822 = vld [vmem:[%s5 + $0xe4] sm:$0xf]
      %v823 = vld [vmem:[%s5 + $0xe8] sm:$0xf]
      %v824 = vld [vmem:[%s5 + $0xec] sm:$0xf]
      %v825 = vld [vmem:[%s5 + $0xf0] sm:$0xf]
      %v826 = vld [vmem:[%s5 + $0xf4] sm:$0xf]
      %v827 = vld [vmem:[%s5 + $0xf8] sm:$0xf]
      %v828 = vld [vmem:[%s5 + $0xfc] sm:$0xf]
      %v893 = vunpack.c.l.b16 %v765
      %v894 = vunpack.c.l.b16 %v766
      %v895 = vunpack.c.l.b16 %v767
      %v896 = vunpack.c.l.b16 %v768
      %v897 = vunpack.c.l.b16 %v769
      %v898 = vunpack.c.l.b16 %v770
      %v899 = vunpack.c.l.b16 %v771
      %v900 = vunpack.c.l.b16 %v772
      %v901 = vunpack.c.l.b16 %v773
      %v902 = vunpack.c.l.b16 %v774
      %v903 = vunpack.c.l.b16 %v775
      %v904 = vunpack.c.l.b16 %v776
      %v905 = vunpack.c.l.b16 %v777
      %v906 = vunpack.c.l.b16 %v778
      %v907 = vunpack.c.l.b16 %v779
      %v908 = vunpack.c.l.b16 %v780
      %v909 = vunpack.c.l.b16 %v781
      %v910 = vunpack.c.l.b16 %v782
      %v911 = vunpack.c.l.b16 %v783
      %v912 = vunpack.c.l.b16 %v784
      %v913 = vunpack.c.l.b16 %v785
      %v914 = vunpack.c.l.b16 %v786
      %v915 = vunpack.c.l.b16 %v787
      %v916 = vunpack.c.l.b16 %v788
      %v917 = vunpack.c.l.b16 %v789
      %v918 = vunpack.c.l.b16 %v790
      %v919 = vunpack.c.l.b16 %v791
      %v920 = vunpack.c.l.b16 %v792
      %v921 = vunpack.c.l.b16 %v793
      %v922 = vunpack.c.l.b16 %v794
      %v923 = vunpack.c.l.b16 %v795
      %v924 = vunpack.c.l.b16 %v796
      %v925 = vunpack.c.l.b16 %v797
      %v926 = vunpack.c.l.b16 %v798
      %v927 = vunpack.c.l.b16 %v799
      %v928 = vunpack.c.l.b16 %v800
      %v929 = vunpack.c.l.b16 %v801
      %v930 = vunpack.c.l.b16 %v802
      %v931 = vunpack.c.l.b16 %v803
      %v932 = vunpack.c.l.b16 %v804
      %v933 = vunpack.c.l.b16 %v805
      %v934 = vunpack.c.l.b16 %v806
      %v935 = vunpack.c.l.b16 %v807
      %v936 = vunpack.c.l.b16 %v808
      %v937 = vunpack.c.l.b16 %v809
      %v938 = vunpack.c.l.b16 %v810
      %v939 = vunpack.c.l.b16 %v811
      %v940 = vunpack.c.l.b16 %v812
      %v941 = vunpack.c.l.b16 %v813
      %v942 = vunpack.c.l.b16 %v814
      %v943 = vunpack.c.l.b16 %v815
      %v944 = vunpack.c.l.b16 %v816
      %v945 = vunpack.c.l.b16 %v817
      %v946 = vunpack.c.l.b16 %v818
      %v947 = vunpack.c.l.b16 %v819
      %v948 = vunpack.c.l.b16 %v820
      %v949 = vunpack.c.l.b16 %v821
      %v950 = vunpack.c.l.b16 %v822
      %v951 = vunpack.c.l.b16 %v823
      %v952 = vunpack.c.l.b16 %v824
      %v953 = vunpack.c.l.b16 %v825
      %v954 = vunpack.c.l.b16 %v826
      %v955 = vunpack.c.l.b16 %v827
      %v956 = vunpack.c.l.b16 %v828
      %v957 = vpack.c.b16 %v894, %v893
      %v958 = vpack.c.b16 %v896, %v895
      %v959 = vpack.c.b16 %v898, %v897
      %v960 = vpack.c.b16 %v900, %v899
      %v961 = vpack.c.b16 %v902, %v901
      %v962 = vpack.c.b16 %v904, %v903
      %v963 = vpack.c.b16 %v906, %v905
      %v964 = vpack.c.b16 %v908, %v907
      %v965 = vpack.c.b16 %v910, %v909
      %v966 = vpack.c.b16 %v912, %v911
      %v967 = vpack.c.b16 %v914, %v913
      %v968 = vpack.c.b16 %v916, %v915
      %v969 = vpack.c.b16 %v918, %v917
      %v970 = vpack.c.b16 %v920, %v919
      %v971 = vpack.c.b16 %v922, %v921
      %v972 = vpack.c.b16 %v924, %v923
      %v973 = vpack.c.b16 %v926, %v925
      %v974 = vpack.c.b16 %v928, %v927
      %v975 = vpack.c.b16 %v930, %v929
      %v976 = vpack.c.b16 %v932, %v931
      %v977 = vpack.c.b16 %v934, %v933
      %v978 = vpack.c.b16 %v936, %v935
      %v979 = vpack.c.b16 %v938, %v937
      %v980 = vpack.c.b16 %v940, %v939
      %v981 = vpack.c.b16 %v942, %v941
      %v982 = vpack.c.b16 %v944, %v943
      %v983 = vpack.c.b16 %v946, %v945
      %v984 = vpack.c.b16 %v948, %v947
      %v985 = vpack.c.b16 %v950, %v949
      %v986 = vpack.c.b16 %v952, %v951
      %v987 = vpack.c.b16 %v954, %v953
      %v988 = vpack.c.b16 %v956, %v955
      %1021 = vmatpush.bf16.msra.mxu0 %v964
      %1022 = vmatpush.bf16.msra.mxu0 %v963
      %1023 = vmatpush.bf16.msra.mxu0 %v962
      %1024 = vmatpush.bf16.msra.mxu0 %v961
      %1025 = vmatpush.bf16.msra.mxu0 %v960
      %1026 = vmatpush.bf16.msra.mxu0 %v959
      %1027 = vmatpush.bf16.msra.mxu0 %v958
      %1028 = vmatpush.bf16.msra.mxu0 %v957
      %1029 = vmatmul.bf16.gmra.mxu0 %v757
      %v1030 = vpop.f32.mrf.mxu0
      %v1031 = vadd.f32 0.0, %v1030
      %v1032 = vpop.f32.mrf.mxu0
      %v1033 = vadd.f32 0.0, %v1032
      %1034 = vmatmul.bf16.gmra.mxu0 %v761
      %v1035 = vpop.f32.mrf.mxu0
      %v1036 = vadd.f32 0.0, %v1035
      %v1037 = vpop.f32.mrf.mxu0
      %1038 = vdwg.mxu0
      %1039 = vmatpush.bf16.msra.mxu0 %v972
      %1040 = vmatpush.bf16.msra.mxu0 %v971
      %1041 = vmatpush.bf16.msra.mxu0 %v970
      %1042 = vmatpush.bf16.msra.mxu0 %v969
      %1043 = vmatpush.bf16.msra.mxu0 %v968
      %1044 = vmatpush.bf16.msra.mxu0 %v967
      %1045 = vmatpush.bf16.msra.mxu0 %v966
      %1046 = vmatpush.bf16.msra.mxu0 %v965
      %1047 = vmatmul.bf16.gmra.mxu0 %v758
      %v1048 = vpop.f32.mrf.mxu0
      %v1049 = vadd.f32 %v1031, %v1048
      %v1050 = vpop.f32.mrf.mxu0
      %v1051 = vadd.f32 %v1033, %v1050
      %1052 = vmatmul.bf16.gmra.mxu0 %v762
      %v1053 = vpop.f32.mrf.mxu0
      %v1054 = vadd.f32 %v1036, %v1053
      %v1055 = vpop.f32.mrf.mxu0
      %1056 = vdwg.mxu0
      %1057 = vmatpush.bf16.msra.mxu0 %v980
      %1058 = vmatpush.bf16.msra.mxu0 %v979
      %1059 = vmatpush.bf16.msra.mxu0 %v978
      %1060 = vmatpush.bf16.msra.mxu0 %v977
      %1061 = vmatpush.bf16.msra.mxu0 %v976
      %1062 = vmatpush.bf16.msra.mxu0 %v975
      %1063 = vmatpush.bf16.msra.mxu0 %v974
      %1064 = vmatpush.bf16.msra.mxu0 %v973
      %1065 = vmatmul.bf16.gmra.mxu0 %v759
      %v1066 = vpop.f32.mrf.mxu0
      %v1067 = vadd.f32 %v1049, %v1066
      %v1068 = vpop.f32.mrf.mxu0
      %v1069 = vadd.f32 %v1051, %v1068
      %1070 = vmatmul.bf16.gmra.mxu0 %v763
      %v1071 = vpop.f32.mrf.mxu0
      %v1072 = vadd.f32 %v1054, %v1071
      %v1073 = vpop.f32.mrf.mxu0
      %1074 = vdwg.mxu0
      %1075 = vmatpush.bf16.msra.mxu0 %v988
      %1076 = vmatpush.bf16.msra.mxu0 %v987
      %1077 = vmatpush.bf16.msra.mxu0 %v986
      %1078 = vmatpush.bf16.msra.mxu0 %v985
      %1079 = vmatpush.bf16.msra.mxu0 %v984
      %1080 = vmatpush.bf16.msra.mxu0 %v983
      %1081 = vmatpush.bf16.msra.mxu0 %v982
      %1082 = vmatpush.bf16.msra.mxu0 %v981
      %1083 = vmatmul.bf16.gmra.mxu0 %v760
      %v1084 = vpop.f32.mrf.mxu0
      %v1085 = vadd.f32 %v1067, %v1084
      %v1086 = vpop.f32.mrf.mxu0
      %v1087 = vadd.f32 %v1069, %v1086
      %1088 = vmatmul.bf16.gmra.mxu0 %v764
      %v1089 = vpop.f32.mrf.mxu0
      %v1090 = vadd.f32 %v1072, %v1089
      %v1091 = vpop.f32.mrf.mxu0
      %1092 = vdwg.mxu0
      %v1093 = vadd.f32 %v754, %v1085
      %v1094 = vadd.f32 %v755, %v1087
      %v1095 = vadd.f32 %v756, %v1090
      %1096 = vst [vmem:[%s278] sm:$0xff] %v1093
      %1097 = vst [vmem:[%s278 + $0x8] sm:$0xff] %v1094
      %1098 = vst [vmem:[%s278 + $0x10] sm:$0x1] %v1095
      %p1099 = scmp.lt.s32.totalorder %s18, 1
      %s1100 = scalar_select %p1099, %s18, 1
      %s1101 = smul.addr %s1100, 3
      %s1102 = smul.addr %s1101, 8
      %s1103 = scalar_lea.vmem %s7, %s1102
      // Predicated region
      $region49: #{deit_backbone_forward.62} parent=47 // pred_check
        %p1104 = pneg %p188
      $region50: #{deit_backbone_forward.62} parent=47 // pred_check_branch
        %1106 = sbr.rel (%p1104) target = $region52
      $region51: #{deit_backbone_forward.62} parent=47 // pred_region
        _
      $region52: #{deit_backbone_forward.62} parent=47 // pred_fallthru
        _
    $region48: #{deit_backbone_forward.62} parent=5 // pred_fallthru
      _
    %p1107 = scmp.le.s32.totalorder 2, %s13
    // Predicated region
    $region53: #{deit_backbone_forward.62} parent=5 // pred_check
      %p1108 = pneg %p1107
    $region54: #{deit_backbone_forward.62} parent=5 // pred_check_branch
      %1110 = sbr.rel (%p1108) target = $region56
    $region55: #{deit_backbone_forward.62} parent=5 // pred_region
      %s1111 = ssub.s32 %s13, 2
      // Predicated region
      $region57: #{deit_backbone_forward.62} parent=55 // pred_check
        %p1112 = pneg %p194
      $region58: #{deit_backbone_forward.62} parent=55 // pred_check_branch
        %1114 = sbr.rel (%p1112) target = $region60
      $region59: #{deit_backbone_forward.62} parent=55 // pred_region
        %p1115 = scmp.lt.s32.totalorder %s19, 1
        %s1116 = scalar_select %p1115, %s19, 1
        %s1117 = smul.addr %s1116, 3
        %s1118 = smul.addr %s1117, 8
        %s1119 = scalar_lea.vmem %s7, %s1118
      $region60: #{deit_backbone_forward.62} parent=55 // pred_fallthru
        _
    $region56: #{deit_backbone_forward.62} parent=5 // pred_fallthru
      _
  $region6: #{deit_backbone_forward.62} parent=0 // loop_footer
    %s17 = sadd.s32 1, %s13
  $region7: #{deit_backbone_forward.62} parent=0 // loop_footer_branch
    %12 = sbr.rel target = $region3
  $region8: #{deit_backbone_forward.62} parent=0 // loop_exit
    _

</llo_original>
